<compile_context>
chip_gen: v7x
topology: tpu7x:2x2x1
jax: 0.10.0
libtpu: 0.0.40
codegen_flags: <defaults>
</compile_context>

<pallas_src>
import functools
import numpy as np
import jax
import jax.numpy as jnp
from jax.experimental import pallas as pl
from jax.experimental.pallas import tpu as pltpu

SIGMA = 25.0
HIDDEN_DIMS = [256, 128, 64, 32]
FEATURE_DIM = 44
T_EMBED_DIM = HIDDEN_DIMS[0] - FEATURE_DIM * 4  # 80
HALF = T_EMBED_DIM // 2                          # 40


def _swish(x):
    return x * jax.nn.sigmoid(x)


# ----------------------------- Pallas kernel ------------------------------- #

def mlp_kernel(pa_ref, aux_ref,
               wup_ref, bup_ref,
               w1_ref, b1_ref, w2_ref, b2_ref, w3_ref, b3_ref,
               w45_ref, b45_ref,
               out_ref, *, matmul_dtype):
    """Per-path score MLP.  One grid step processes a [tile_p, :] row block.

    pa_ref : [tile_p, 256]  (matmul_dtype — bf16 halves the dominant DMA)
    aux_ref: [tile_p, 4]    f32  (cols 0..2 = perturb, col 3 = 1/std)
    wup:[3,256] bup:[1,256] (f32)
    w1:[256,128] w2:[128,64] w3:[64,32] (matmul_dtype), biases f32
    w45:[32,3] b45:[1,3] (f32)      out_ref:[tile_p,3] f32
    """
    aux = aux_ref[...]                               # [tile_p, 4] f32
    rstd = aux[:, 3:4]                               # per-graph reciprocal std
    wup = wup_ref[...]                               # [3, 256] f32
    # upscale(3 -> 256) as VPU broadcast-FMAs: K=3 is degenerate on the MXU.
    up = (aux[:, 0:1] * wup[0:1, :]
          + aux[:, 1:2] * wup[1:2, :]
          + aux[:, 2:3] * wup[2:3, :]
          + bup_ref[...])
    # residual add in f32 (v5e's VPU/EUP are f32-only)
    h = pa_ref[...].astype(jnp.float32) + up         # [tile_p, 256]

    def dot(x, w_ref):
        # operands in matmul_dtype, accumulation always f32 on the MXU
        return jnp.dot(x.astype(matmul_dtype), w_ref[...],
                       preferred_element_type=jnp.float32)

    h = _swish(dot(h, w1_ref) + b1_ref[...])         # 256 -> 128
    h = _swish(dot(h, w2_ref) + b2_ref[...])         # 128 -> 64
    h = _swish(dot(h, w3_ref) + b3_ref[...])         # 64  -> 32
    # Fused Linear(32->3) ∘ Dropout(eval = identity) ∘ Linear(3->3), kept f32.
    h = jnp.dot(h, w45_ref[...], preferred_element_type=jnp.float32) + b45_ref[...]
    out_ref[...] = h * rstd                          # multiply by per-graph 1/std


# ------------------------------ wrappers ----------------------------------- #

def time_embed(t, params, sigma=SIGMA):
    """Per-graph Gaussian Fourier time embedding + reciprocal marginal std.

    Kept in plain JAX: G is only a few rows, so a pallas_call here costs more
    in fixed launch/DMA overhead than the whole computation.
    """
    x_proj = t[:, None] * params["W_gfp"][None, :] * (2.0 * np.pi)
    gfp = jnp.concatenate([jnp.sin(x_proj), jnp.cos(x_proj)], axis=-1)
    embed = _swish(gfp @ params["W_embed"] + params["b_embed"])
    log_sigma = np.log(sigma)
    std = jnp.sqrt((jnp.exp(2.0 * t * log_sigma) - 1.0) / (2.0 * log_sigma))
    rstd = (1.0 / std)[:, None]                      # per-graph reciprocal, [G, 1]
    return embed, rstd


def _choose_tiles(P, tile_p_max):
    """Pick (tile_p, n_tiles): tile_p % 8 == 0, near-equal tiles, and an even
    tile count whenever P > 8 so v7x's two TensorCores split the parallel axis
    evenly (on v5e/v6e extra tiles just cost ~0.35 µs each — negligible)."""
    P8 = ((P + 7) // 8) * 8
    tile_p = max(8, min(int(tile_p_max), P8))
    n = -(-P8 // tile_p)
    if n % 2 == 1 and P8 > 8:
        n += 1
    tile_p = ((-(-P8 // n)) + 7) // 8 * 8            # rebalance, multiple of 8
    tile_p = max(8, tile_p)
    n = -(-P8 // tile_p)
    return tile_p, n


def score_mlp(path_attr, perturb, rstd, params, *, tile_p=1024,
              matmul_dtype=jnp.float32):
    P = path_attr.shape[0]
    H = HIDDEN_DIMS

    tile_p, n_tiles = _choose_tiles(P, tile_p)
    P_pad = tile_p * n_tiles

    # Cast the dominant HBM stream once in the wrapper: the kernel is
    # HBM-bound, so bf16 here halves the per-tile DMA bytes (512 KiB -> 256 KiB
    # at tile_p=1024).  Element-wise math upcasts to f32 inside the kernel.
    path_attr = path_attr.astype(matmul_dtype)
    # Merge perturb [P,3] and 1/std [P,1] into one [P,4] f32 stream: two row
    # streams per grid step instead of three narrow masked DMAs.
    aux = jnp.concatenate([perturb.astype(jnp.float32),
                           rstd.astype(jnp.float32)], axis=-1)

    if P_pad != P:
        pad = ((0, P_pad - P), (0, 0))
        path_attr = jnp.pad(path_attr, pad)
        aux = jnp.pad(aux, pad)      # padded rstd == 0 -> padded outputs are 0

    # Fuse the last two Linears (no nonlinearity / eval-dropout between them).
    w45 = params["W4"] @ params["W5"]                      # [32, 3]
    b45 = params["b4"] @ params["W5"] + params["b5"]       # [1, 3]
    # Cast the big-matmul weights once in the wrapper (halves their DMA bytes
    # when bf16); activations are cast per-dot inside the kernel.
    w1 = params["W1"].astype(matmul_dtype)
    w2 = params["W2"].astype(matmul_dtype)
    w3 = params["W3"].astype(matmul_dtype)

    weights = (params["W_up"], params["b_up"],
               w1, params["b1"], w2, params["b2"], w3, params["b3"],
               w45, b45)

    # Constant-index weight blocks stay VMEM-resident across the whole grid
    # (they total a few hundred KiB, so default double-buffering is harmless).
    wspec = lambda a: pl.BlockSpec(a.shape, lambda i: (0, 0))
    rowspec = lambda cols: pl.BlockSpec((tile_p, cols), lambda i: (i, 0))

    # Advisory cost estimate so XLA schedules the surrounding gather/repeat/
    # concat fusion sensibly around the custom call.
    in_bytes = jnp.dtype(matmul_dtype).itemsize
    flops = 2 * P_pad * (3 * H[0] + H[0] * H[1] + H[1] * H[2] + H[2] * H[3] + H[3] * 3)
    transc = P_pad * (H[1] + H[2] + H[3])
    bytes_acc = (P_pad * (H[0] * in_bytes + 4 * 4 + 3 * 4)
                 + sum(int(np.prod(w.shape)) * w.dtype.itemsize for w in weights))

    kern = functools.partial(mlp_kernel, matmul_dtype=matmul_dtype)
    out = pl.pallas_call(
        kern,
        out_shape=jax.ShapeDtypeStruct((P_pad, 3), jnp.float32),
        grid=(n_tiles,),
        in_specs=[rowspec(H[0]), rowspec(4)] + [wspec(w) for w in weights],
        out_specs=rowspec(3),
        compiler_params=pltpu.CompilerParams(
            dimension_semantics=("parallel",),        # megacore / v7x dual-TC
            vmem_limit_bytes=32 * 1024 * 1024),       # ample headroom; per-tile
                                                      # live blocks are < 2 MiB
        cost_estimate=pl.CostEstimate(flops=flops, transcendentals=transc,
                                      bytes_accessed=bytes_acc),
    )(path_attr, aux, *weights)
    return out[:P]


def scorenet_forward(params, node_attr, simple_4_paths, num_paths, t,
                     perturb_directions, sigma=SIGMA, tile_p=1024,
                     matmul_dtype=jnp.float32):
    assert t.shape[0] == num_paths.shape[0]
    assert simple_4_paths.shape[1] == 4
    P = simple_4_paths.shape[0]
    paths = simple_4_paths.T                           # [4, P]
    n_ = node_attr[paths[0]]
    p1 = node_attr[paths[1]]
    p2 = node_attr[paths[2]]
    p3 = node_attr[paths[3]]
    embed, rstd = time_embed(t, params, sigma)         # [G,80], [G,1]
    embed_tiled = jnp.repeat(embed, num_paths, axis=0, total_repeat_length=P)
    rstd_tiled = jnp.repeat(rstd, num_paths, axis=0, total_repeat_length=P)
    # TODO(synk): fuse this gather/repeat/concat into the kernel (stream only
    # int32 path indices + graph ids) to cut the remaining ~0.5-1 KB/row of
    # HBM round-trip; deferred — see module-level note.
    path_attr = jnp.concatenate([n_, p1, p2, p3, embed_tiled], axis=-1)  # [P,256]
    return score_mlp(path_attr, perturb_directions, rstd_tiled, params,
                     tile_p=tile_p, matmul_dtype=matmul_dtype)


# --------------------------- deterministic init ----------------------------- #

def init_params(key):
    ks = jax.random.split(key, 8)

    def lin(k, din, dout):
        kw, kb = jax.random.split(k)
        bound = 1.0 / np.sqrt(din)
        W = jax.random.uniform(kw, (din, dout), jnp.float32, -bound, bound)
        b = jax.random.uniform(kb, (1, dout), jnp.float32, -bound, bound)
        return W, b

    params = {"W_gfp": jax.random.normal(ks[0], (HALF,), jnp.float32) * 30.0}
    params["W_embed"], params["b_embed"] = lin(ks[1], T_EMBED_DIM, T_EMBED_DIM)
    params["W_up"], params["b_up"] = lin(ks[2], 3, HIDDEN_DIMS[0])
    for i in range(3):
        params[f"W{i + 1}"], params[f"b{i + 1}"] = lin(ks[3 + i], HIDDEN_DIMS[i], HIDDEN_DIMS[i + 1])
    params["W4"], params["b4"] = lin(ks[6], HIDDEN_DIMS[-1], 3)
    params["W5"], params["b5"] = lin(ks[7], 3, 3)
    return params


# ------------------------------ pure-JAX ref -------------------------------- #

def reference_forward(params, node_attr, simple_4_paths, num_paths, t, perturb,
                      sigma=SIGMA, matmul_dtype=jnp.float32):
    swish = lambda x: x * jax.nn.sigmoid(x)

    def dot(x, w):
        return jnp.dot(x.astype(matmul_dtype), w.astype(matmul_dtype),
                       preferred_element_type=jnp.float32)

    x_proj = t[:, None] * params["W_gfp"][None, :] * 2.0 * np.pi
    gfp = jnp.concatenate([jnp.sin(x_proj), jnp.cos(x_proj)], axis=-1)
    embed = swish(gfp @ params["W_embed"] + params["b_embed"])
    std = jnp.sqrt((sigma ** (2.0 * t) - 1.0) / 2.0 / np.log(sigma))[:, None]
    P = simple_4_paths.shape[0]
    embed_t = jnp.repeat(embed, num_paths, axis=0, total_repeat_length=P)
    std_t = jnp.repeat(std, num_paths, axis=0, total_repeat_length=P)
    paths = simple_4_paths.T
    pa = jnp.concatenate([node_attr[paths[0]], node_attr[paths[1]],
                          node_attr[paths[2]], node_attr[paths[3]], embed_t], axis=-1)
    # use the same streamed-input precision as the kernel (no-op for f32)
    pa = pa.astype(matmul_dtype).astype(jnp.float32)
    h = pa + perturb @ params["W_up"] + params["b_up"]
    h = swish(dot(h, params["W1"]) + params["b1"])
    h = swish(dot(h, params["W2"]) + params["b2"])
    h = swish(dot(h, params["W3"]) + params["b3"])
    h = h @ params["W4"] + params["b4"]
    h = h @ params["W5"] + params["b5"]
    return h / std_t


# --------------------------------- main ------------------------------------- #

if __name__ == "__main__":
    key = jax.random.PRNGKey(0)
    kp, kn, kpath, kt, kpert = jax.random.split(key, 5)

    params = init_params(kp)

    G = 4                                   # graphs in the batch (len(ptr) - 1)
    num_paths = jnp.array([150, 250, 180, 220], jnp.int32)   # ragged per-graph counts
    P = 800                                 # total paths (exercises padding + even split)
    N_nodes = 64

    node_attr = jax.random.normal(kn, (N_nodes, FEATURE_DIM), jnp.float32)      # [64, 44]
    simple_4_paths = jax.random.randint(kpath, (P, 4), 0, N_nodes)              # [800, 4]
    t = jax.random.uniform(kt, (G,), jnp.float32, 0.01, 1.0)                    # [4]
    perturb_directions = jax.random.normal(kpert, (P, 3), jnp.float32)          # [800, 3]

    # 1) f32 streamed inputs / matmul operands — exact parity with the PyTorch module.
    out = scorenet_forward(params, node_attr, simple_4_paths, num_paths, t,
                           perturb_directions)
    out = jax.block_until_ready(out)
    ref = reference_forward(params, node_attr, simple_4_paths, num_paths, t,
                            perturb_directions)
    ref = jax.block_until_ready(ref)
    assert out.shape == (P, 3)
    np.testing.assert_allclose(np.asarray(out), np.asarray(ref), rtol=2e-4, atol=2e-4)

    # 2) bf16 streamed inputs + matmul operands (recommended mode on v5e/v6e/v7x:
    #    the win is halved HBM bytes; accumulation and element-wise math stay f32).
    out_bf16 = scorenet_forward(params, node_attr, simple_4_paths, num_paths, t,
                                perturb_directions, matmul_dtype=jnp.bfloat16)
    out_bf16 = jax.block_until_ready(out_bf16)
    ref_bf16 = reference_forward(params, node_attr, simple_4_paths, num_paths, t,
                                 perturb_directions, matmul_dtype=jnp.bfloat16)
    ref_bf16 = jax.block_until_ready(ref_bf16)
    np.testing.assert_allclose(np.asarray(out_bf16), np.asarray(ref_bf16),
                               rtol=1e-2, atol=1e-2)

    print("KERNEL_OK")
</pallas_src>

<mosaic_0001>
module attributes {stable_mosaic.version = 11 : i64} {
  func.func @mlp_kernel(%arg0: i32, %arg1: memref<400x256xf32, #tpu.memory_space<vmem>>, %arg2: memref<400x4xf32, #tpu.memory_space<vmem>>, %arg3: memref<3x256xf32, #tpu.memory_space<vmem>>, %arg4: memref<1x256xf32, #tpu.memory_space<vmem>>, %arg5: memref<256x128xf32, #tpu.memory_space<vmem>>, %arg6: memref<1x128xf32, #tpu.memory_space<vmem>>, %arg7: memref<128x64xf32, #tpu.memory_space<vmem>>, %arg8: memref<1x64xf32, #tpu.memory_space<vmem>>, %arg9: memref<64x32xf32, #tpu.memory_space<vmem>>, %arg10: memref<1x32xf32, #tpu.memory_space<vmem>>, %arg11: memref<32x3xf32, #tpu.memory_space<vmem>>, %arg12: memref<1x3xf32, #tpu.memory_space<vmem>>, %arg13: memref<400x3xf32, #tpu.memory_space<vmem>>) attributes {dimension_semantics = [#tpu.dimension_semantics<parallel>], iteration_bounds = array<i64: 2>, scalar_prefetch = 0 : i64, scratch_operands = 0 : i64, tpu.core_type = #tpu.core_type<tc>, window_params = [{transform_indices = @transform_0, window_bounds = array<i64: 400, 256>}, {transform_indices = @transform_1, window_bounds = array<i64: 400, 4>}, {pipeline_mode = #tpu.pipeline_mode<synchronous>, transform_indices = @transform_2, window_bounds = array<i64: 3, 256>}, {pipeline_mode = #tpu.pipeline_mode<synchronous>, transform_indices = @transform_3, window_bounds = array<i64: 1, 256>}, {pipeline_mode = #tpu.pipeline_mode<synchronous>, transform_indices = @transform_4, window_bounds = array<i64: 256, 128>}, {pipeline_mode = #tpu.pipeline_mode<synchronous>, transform_indices = @transform_5, window_bounds = array<i64: 1, 128>}, {pipeline_mode = #tpu.pipeline_mode<synchronous>, transform_indices = @transform_6, window_bounds = array<i64: 128, 64>}, {pipeline_mode = #tpu.pipeline_mode<synchronous>, transform_indices = @transform_7, window_bounds = array<i64: 1, 64>}, {pipeline_mode = #tpu.pipeline_mode<synchronous>, transform_indices = @transform_8, window_bounds = array<i64: 64, 32>}, {pipeline_mode = #tpu.pipeline_mode<synchronous>, transform_indices = @transform_9, window_bounds = array<i64: 1, 32>}, {pipeline_mode = #tpu.pipeline_mode<synchronous>, transform_indices = @transform_10, window_bounds = array<i64: 32, 3>}, {pipeline_mode = #tpu.pipeline_mode<synchronous>, transform_indices = @transform_11, window_bounds = array<i64: 1, 3>}, {transform_indices = @transform_12, window_bounds = array<i64: 400, 3>}]} {
    %c0 = arith.constant 0 : index
    %c0_0 = arith.constant 0 : index
    %0 = vector.load %arg2[%c0, %c0_0] : memref<400x4xf32, #tpu.memory_space<vmem>>, vector<400x4xf32>
    %1 = vector.extract_strided_slice %0 {offsets = [0, 3], sizes = [400, 1], strides = [1, 1]} : vector<400x4xf32> to vector<400x1xf32>
    %c0_1 = arith.constant 0 : index
    %c0_2 = arith.constant 0 : index
    %2 = vector.load %arg3[%c0_1, %c0_2] : memref<3x256xf32, #tpu.memory_space<vmem>>, vector<3x256xf32>
    %3 = vector.extract_strided_slice %0 {offsets = [0, 0], sizes = [400, 1], strides = [1, 1]} : vector<400x4xf32> to vector<400x1xf32>
    %4 = vector.extract_strided_slice %2 {offsets = [0, 0], sizes = [1, 256], strides = [1, 1]} : vector<3x256xf32> to vector<1x256xf32>
    %5 = vector.broadcast %3 : vector<400x1xf32> to vector<400x256xf32>
    %6 = vector.broadcast %4 : vector<1x256xf32> to vector<400x256xf32>
    %7 = arith.mulf %5, %6 : vector<400x256xf32>
    %8 = vector.extract_strided_slice %0 {offsets = [0, 1], sizes = [400, 1], strides = [1, 1]} : vector<400x4xf32> to vector<400x1xf32>
    %9 = vector.extract_strided_slice %2 {offsets = [1, 0], sizes = [1, 256], strides = [1, 1]} : vector<3x256xf32> to vector<1x256xf32>
    %10 = vector.broadcast %8 : vector<400x1xf32> to vector<400x256xf32>
    %11 = vector.broadcast %9 : vector<1x256xf32> to vector<400x256xf32>
    %12 = arith.mulf %10, %11 : vector<400x256xf32>
    %13 = arith.addf %7, %12 : vector<400x256xf32>
    %14 = vector.extract_strided_slice %0 {offsets = [0, 2], sizes = [400, 1], strides = [1, 1]} : vector<400x4xf32> to vector<400x1xf32>
    %15 = vector.extract_strided_slice %2 {offsets = [2, 0], sizes = [1, 256], strides = [1, 1]} : vector<3x256xf32> to vector<1x256xf32>
    %16 = vector.broadcast %14 : vector<400x1xf32> to vector<400x256xf32>
    %17 = vector.broadcast %15 : vector<1x256xf32> to vector<400x256xf32>
    %18 = arith.mulf %16, %17 : vector<400x256xf32>
    %19 = arith.addf %13, %18 : vector<400x256xf32>
    %c0_3 = arith.constant 0 : index
    %c0_4 = arith.constant 0 : index
    %20 = vector.load %arg4[%c0_3, %c0_4] : memref<1x256xf32, #tpu.memory_space<vmem>>, vector<1x256xf32>
    %21 = vector.broadcast %20 : vector<1x256xf32> to vector<400x256xf32>
    %22 = arith.addf %19, %21 : vector<400x256xf32>
    %c0_5 = arith.constant 0 : index
    %c0_6 = arith.constant 0 : index
    %23 = vector.load %arg1[%c0_5, %c0_6] : memref<400x256xf32, #tpu.memory_space<vmem>>, vector<400x256xf32>
    %24 = arith.addf %23, %22 : vector<400x256xf32>
    %c0_7 = arith.constant 0 : index
    %c0_8 = arith.constant 0 : index
    %25 = vector.load %arg5[%c0_7, %c0_8] : memref<256x128xf32, #tpu.memory_space<vmem>>, vector<256x128xf32>
    %cst = arith.constant dense<0.000000e+00> : vector<400x128xf32>
    %26 = tpu.matmul %24, %25, %cst {dimension_numbers = #tpu.dot_dimension_numbers<[1], [0], [0], [1], [0, 0, 1, 1], [], []>} : vector<400x256xf32>, vector<256x128xf32>, vector<400x128xf32> -> vector<400x128xf32>
    %c0_9 = arith.constant 0 : index
    %c0_10 = arith.constant 0 : index
    %27 = vector.load %arg6[%c0_9, %c0_10] : memref<1x128xf32, #tpu.memory_space<vmem>>, vector<1x128xf32>
    %28 = vector.broadcast %27 : vector<1x128xf32> to vector<400x128xf32>
    %29 = arith.addf %26, %28 : vector<400x128xf32>
    %30 = arith.negf %29 : vector<400x128xf32>
    %31 = math.exp %30 : vector<400x128xf32>
    %cst_11 = arith.constant 1.000000e+00 : f32
    %32 = vector.broadcast %cst_11 : f32 to vector<400x128xf32>
    %33 = arith.addf %32, %31 : vector<400x128xf32>
    %34 = arith.divf %32, %33 : vector<400x128xf32>
    %35 = arith.mulf %29, %34 : vector<400x128xf32>
    %c0_12 = arith.constant 0 : index
    %c0_13 = arith.constant 0 : index
    %36 = vector.load %arg7[%c0_12, %c0_13] : memref<128x64xf32, #tpu.memory_space<vmem>>, vector<128x64xf32>
    %cst_14 = arith.constant dense<0.000000e+00> : vector<400x64xf32>
    %37 = tpu.matmul %35, %36, %cst_14 {dimension_numbers = #tpu.dot_dimension_numbers<[1], [0], [0], [1], [0, 0, 1, 1], [], []>} : vector<400x128xf32>, vector<128x64xf32>, vector<400x64xf32> -> vector<400x64xf32>
    %c0_15 = arith.constant 0 : index
    %c0_16 = arith.constant 0 : index
    %38 = vector.load %arg8[%c0_15, %c0_16] : memref<1x64xf32, #tpu.memory_space<vmem>>, vector<1x64xf32>
    %39 = vector.broadcast %38 : vector<1x64xf32> to vector<400x64xf32>
    %40 = arith.addf %37, %39 : vector<400x64xf32>
    %41 = arith.negf %40 : vector<400x64xf32>
    %42 = math.exp %41 : vector<400x64xf32>
    %cst_17 = arith.constant 1.000000e+00 : f32
    %43 = vector.broadcast %cst_17 : f32 to vector<400x64xf32>
    %44 = arith.addf %43, %42 : vector<400x64xf32>
    %45 = arith.divf %43, %44 : vector<400x64xf32>
    %46 = arith.mulf %40, %45 : vector<400x64xf32>
    %c0_18 = arith.constant 0 : index
    %c0_19 = arith.constant 0 : index
    %47 = vector.load %arg9[%c0_18, %c0_19] : memref<64x32xf32, #tpu.memory_space<vmem>>, vector<64x32xf32>
    %cst_20 = arith.constant dense<0.000000e+00> : vector<400x32xf32>
    %48 = tpu.matmul %46, %47, %cst_20 {dimension_numbers = #tpu.dot_dimension_numbers<[1], [0], [0], [1], [0, 0, 1, 1], [], []>} : vector<400x64xf32>, vector<64x32xf32>, vector<400x32xf32> -> vector<400x32xf32>
    %c0_21 = arith.constant 0 : index
    %c0_22 = arith.constant 0 : index
    %49 = vector.load %arg10[%c0_21, %c0_22] : memref<1x32xf32, #tpu.memory_space<vmem>>, vector<1x32xf32>
    %50 = vector.broadcast %49 : vector<1x32xf32> to vector<400x32xf32>
    %51 = arith.addf %48, %50 : vector<400x32xf32>
    %52 = arith.negf %51 : vector<400x32xf32>
    %53 = math.exp %52 : vector<400x32xf32>
    %cst_23 = arith.constant 1.000000e+00 : f32
    %54 = vector.broadcast %cst_23 : f32 to vector<400x32xf32>
    %55 = arith.addf %54, %53 : vector<400x32xf32>
    %56 = arith.divf %54, %55 : vector<400x32xf32>
    %57 = arith.mulf %51, %56 : vector<400x32xf32>
    %c0_24 = arith.constant 0 : index
    %c0_25 = arith.constant 0 : index
    %58 = vector.load %arg11[%c0_24, %c0_25] : memref<32x3xf32, #tpu.memory_space<vmem>>, vector<32x3xf32>
    %cst_26 = arith.constant dense<0.000000e+00> : vector<400x3xf32>
    %59 = tpu.matmul %57, %58, %cst_26 {dimension_numbers = #tpu.dot_dimension_numbers<[1], [0], [0], [1], [0, 0, 1, 1], [], []>} : vector<400x32xf32>, vector<32x3xf32>, vector<400x3xf32> -> vector<400x3xf32>
    %c0_27 = arith.constant 0 : index
    %c0_28 = arith.constant 0 : index
    %60 = vector.load %arg12[%c0_27, %c0_28] : memref<1x3xf32, #tpu.memory_space<vmem>>, vector<1x3xf32>
    %61 = vector.broadcast %60 : vector<1x3xf32> to vector<400x3xf32>
    %62 = arith.addf %59, %61 : vector<400x3xf32>
    %63 = vector.broadcast %1 : vector<400x1xf32> to vector<400x3xf32>
    %64 = arith.mulf %62, %63 : vector<400x3xf32>
    %c0_29 = arith.constant 0 : index
    %c0_30 = arith.constant 0 : index
    %65 = vector.load %arg13[%c0_29, %c0_30] : memref<400x3xf32, #tpu.memory_space<vmem>>, vector<400x3xf32>
    tpu.vector_store %arg13[%c0_29, %c0_30], %64 {strides = array<i32>} : memref<400x3xf32, #tpu.memory_space<vmem>>, vector<400x3xf32>,
    return
  }
  func.func @transform_0(%arg0: i32) -> (i32, i32) {
    %c0_i32 = arith.constant 0 : i32
    %c0_i32_0 = arith.constant 0 : i32
    return %arg0, %c0_i32 : i32, i32
  }
  func.func @transform_1(%arg0: i32) -> (i32, i32) {
    %c0_i32 = arith.constant 0 : i32
    %c0_i32_0 = arith.constant 0 : i32
    return %arg0, %c0_i32 : i32, i32
  }
  func.func @transform_2(%arg0: i32) -> (i32, i32) {
    %c0_i32 = arith.constant 0 : i32
    %c0_i32_0 = arith.constant 0 : i32
    %c0_i32_1 = arith.constant 0 : i32
    return %c0_i32, %c0_i32_0 : i32, i32
  }
  func.func @transform_3(%arg0: i32) -> (i32, i32) {
    %c0_i32 = arith.constant 0 : i32
    %c0_i32_0 = arith.constant 0 : i32
    %c0_i32_1 = arith.constant 0 : i32
    return %c0_i32, %c0_i32_0 : i32, i32
  }
  func.func @transform_4(%arg0: i32) -> (i32, i32) {
    %c0_i32 = arith.constant 0 : i32
    %c0_i32_0 = arith.constant 0 : i32
    %c0_i32_1 = arith.constant 0 : i32
    return %c0_i32, %c0_i32_0 : i32, i32
  }
  func.func @transform_5(%arg0: i32) -> (i32, i32) {
    %c0_i32 = arith.constant 0 : i32
    %c0_i32_0 = arith.constant 0 : i32
    %c0_i32_1 = arith.constant 0 : i32
    return %c0_i32, %c0_i32_0 : i32, i32
  }
  func.func @transform_6(%arg0: i32) -> (i32, i32) {
    %c0_i32 = arith.constant 0 : i32
    %c0_i32_0 = arith.constant 0 : i32
    %c0_i32_1 = arith.constant 0 : i32
    return %c0_i32, %c0_i32_0 : i32, i32
  }
  func.func @transform_7(%arg0: i32) -> (i32, i32) {
    %c0_i32 = arith.constant 0 : i32
    %c0_i32_0 = arith.constant 0 : i32
    %c0_i32_1 = arith.constant 0 : i32
    return %c0_i32, %c0_i32_0 : i32, i32
  }
  func.func @transform_8(%arg0: i32) -> (i32, i32) {
    %c0_i32 = arith.constant 0 : i32
    %c0_i32_0 = arith.constant 0 : i32
    %c0_i32_1 = arith.constant 0 : i32
    return %c0_i32, %c0_i32_0 : i32, i32
  }
  func.func @transform_9(%arg0: i32) -> (i32, i32) {
    %c0_i32 = arith.constant 0 : i32
    %c0_i32_0 = arith.constant 0 : i32
    %c0_i32_1 = arith.constant 0 : i32
    return %c0_i32, %c0_i32_0 : i32, i32
  }
  func.func @transform_10(%arg0: i32) -> (i32, i32) {
    %c0_i32 = arith.constant 0 : i32
    %c0_i32_0 = arith.constant 0 : i32
    %c0_i32_1 = arith.constant 0 : i32
    return %c0_i32, %c0_i32_0 : i32, i32
  }
  func.func @transform_11(%arg0: i32) -> (i32, i32) {
    %c0_i32 = arith.constant 0 : i32
    %c0_i32_0 = arith.constant 0 : i32
    %c0_i32_1 = arith.constant 0 : i32
    return %c0_i32, %c0_i32_0 : i32, i32
  }
  func.func @transform_12(%arg0: i32) -> (i32, i32) {
    %c0_i32 = arith.constant 0 : i32
    %c0_i32_0 = arith.constant 0 : i32
    return %arg0, %c0_i32 : i32, i32
  }
}

</mosaic_0001>

<llo_original>
// kernel: tpu_custom_call.1
$region0: #{tpu_custom_call.1}
  #allocation0 [shape = 'u32[]', space=smem, size = 0x4, offset = 0x4, fixed_abs, tag = 'smem constant byte address 0x4 - core index']
  #allocation1 [shape = 'u32[144,128]{1,0:T(1,128)}', space=vmem, size = 0x12000, scoped, tag = 'internal scratch']
  %s0 = inlined_call_operand.hbm [shape: f32[800,256], index: 0, kind: input, shape index: {}]
  %s1 = inlined_call_operand.vmem [shape: f32[800,4], index: 1, kind: input, shape index: {}]
  %s2 = inlined_call_operand.vmem [shape: f32[3,256], index: 2, kind: input, shape index: {}]
  %s3 = inlined_call_operand.vmem [shape: f32[1,256], index: 3, kind: input, shape index: {}]
  %s4 = inlined_call_operand.vmem [shape: f32[256,128], index: 4, kind: input, shape index: {}]
  %s5 = inlined_call_operand.vmem [shape: f32[1,128], index: 5, kind: input, shape index: {}]
  %s6 = inlined_call_operand.vmem [shape: f32[128,64], index: 6, kind: input, shape index: {}]
  %s7 = inlined_call_operand.vmem [shape: f32[1,64], index: 7, kind: input, shape index: {}]
  %s8 = inlined_call_operand.vmem [shape: f32[64,32], index: 8, kind: input, shape index: {}]
  %s9 = inlined_call_operand.vmem [shape: f32[1,32], index: 9, kind: input, shape index: {}]
  %s10 = inlined_call_operand.vmem [shape: f32[32,3], index: 10, kind: input, shape index: {}]
  %s11 = inlined_call_operand.vmem [shape: f32[1,3], index: 11, kind: input, shape index: {}]
  %s12 = inlined_call_operand.vmem [shape: f32[800,3], index: 12, kind: output, shape index: {}]
  %s13 = sld [smem:[#allocation0]]
  $region85: #{tpu_custom_call.1} parent=0
    _
  %s15 = ssub.s32 1, %s13
  %s16 = scalar_select 0, %s15, %s13
  $region1: #{tpu_custom_call.1} parent=0
    #allocation2 [shape = 'u8[819200]{0}', space=vmem, size = 0xc8000, scoped, tag = 'input window, operand 0']
    #allocation3 [shape = 's32[2]{0}', space=sflag, size = 0x8, scoped, tag = 'scoped memory for tpu_custom_call.1']
    %17 = vsyncpa [#allocation3], 0
    %s18 = scalar_lea.sflag [#allocation3], 1
    %19 = vsyncpa %s18, 0
    loop: start=0, step=1, limit=4
    $region2: #{tpu_custom_call.1} parent=1 // loop_pre_header
      _
    $region3: #{tpu_custom_call.1} parent=1 // loop_header
      %s21 = sphi 0, %s25
      %p22 = scmp.ge.s32.totalorder %s21, 4
      %s31 = sphi 0, %s33
      %s34 = sphi 0, %s31
      %s35 = sphi 0, %s34
      %s51 = sphi 0, %s35
      %s57 = sphi 0, %s59
      %s60 = sphi 0, %s57
      %s61 = sphi 0, %s60
      %s77 = sphi 0, %s61
      %s81 = sphi 0, %s81
      %s83 = sphi 0, %s81
      %s84 = sphi 0, %s83
      %s98 = sphi 0, %s84
      %s102 = sphi 0, %s102
      %s104 = sphi 0, %s102
      %s105 = sphi 0, %s104
      %s119 = sphi 0, %s105
      %s123 = sphi 0, %s123
      %s125 = sphi 0, %s123
      %s126 = sphi 0, %s125
      %s140 = sphi 0, %s126
      %s144 = sphi 0, %s144
      %s146 = sphi 0, %s144
      %s147 = sphi 0, %s146
      %s161 = sphi 0, %s147
      %s165 = sphi 0, %s165
      %s167 = sphi 0, %s165
      %s168 = sphi 0, %s167
      %s182 = sphi 0, %s168
      %s186 = sphi 0, %s186
      %s188 = sphi 0, %s186
      %s189 = sphi 0, %s188
      %s203 = sphi 0, %s189
      %s207 = sphi 0, %s207
      %s209 = sphi 0, %s207
      %s210 = sphi 0, %s209
      %s224 = sphi 0, %s210
      %s228 = sphi 0, %s228
      %s230 = sphi 0, %s228
      %s231 = sphi 0, %s230
      %s245 = sphi 0, %s231
      %s249 = sphi 0, %s249
      %s251 = sphi 0, %s249
      %s252 = sphi 0, %s251
      %s266 = sphi 0, %s252
      %s270 = sphi 0, %s270
      %s272 = sphi 0, %s270
      %s273 = sphi 0, %s272
      %s287 = sphi 0, %s273
      %s293 = sphi 0, %s295
      %s296 = sphi 0, %s293
      %s297 = sphi 0, %s296
      %s313 = sphi 0, %s297
    $region4: #{tpu_custom_call.1} parent=1 // loop_header_branch
      %24 = sbr.rel (%p22) target = $region8
    $region5: #{tpu_custom_call.1} parent=1 // loop_body
      %s26 = ssub.s32 %s21, 1
      %s27 = ssub.s32 %s21, 2
      %s28 = sadd.s32 %s21, 1
      %s29 = ssub.s32 %s21, %s28
      %p30 = scmp.eq.s32.totalorder %s29, 0
      %s32 = sadd.s32 %s31, 1
      %s33 = scalar_select %p30, %s31, %s32
      %p36 = pneg %p30
      %p37 = scmp.eq.s32.totalorder %s21, 1
      %p38 = por %p36, %p37
      %p39 = scmp.ne.s32.totalorder %s31, %s34
      %p40 = scmp.eq.s32.totalorder %s21, 0
      %p41 = por %p39, %p40
      %p42 = scmp.ne.s32.totalorder %s31, %s34
      %p43 = scmp.eq.s32.totalorder %s26, 1
      %p44 = por %p42, %p43
      %p45 = scmp.ne.s32.totalorder %s34, %s35
      %p46 = scmp.eq.s32.totalorder %s26, 0
      %p47 = por %p45, %p46
      %p48 = scmp.ne.s32.totalorder %s34, %s35
      %p49 = scmp.eq.s32.totalorder %s27, 1
      %p50 = por %p48, %p49
      %p52 = scmp.ne.s32.totalorder %s35, %s51
      %p53 = scmp.eq.s32.totalorder %s27, 0
      %p54 = por %p52, %p53
      %s55 = ssub.s32 %s21, %s28
      %p56 = scmp.eq.s32.totalorder %s55, 0
      %s58 = sadd.s32 %s57, 1
      %s59 = scalar_select %p56, %s57, %s58
      %p62 = pneg %p56
      %p63 = scmp.eq.s32.totalorder %s21, 1
      %p64 = por %p62, %p63
      %p65 = scmp.ne.s32.totalorder %s57, %s60
      %p66 = scmp.eq.s32.totalorder %s21, 0
      %p67 = por %p65, %p66
      %p68 = scmp.ne.s32.totalorder %s57, %s60
      %p69 = scmp.eq.s32.totalorder %s26, 1
      %p70 = por %p68, %p69
      %p71 = scmp.ne.s32.totalorder %s60, %s61
      %p72 = scmp.eq.s32.totalorder %s26, 0
      %p73 = por %p71, %p72
      %p74 = scmp.ne.s32.totalorder %s60, %s61
      %p75 = scmp.eq.s32.totalorder %s27, 1
      %p76 = por %p74, %p75
      %p78 = scmp.ne.s32.totalorder %s61, %s77
      %p79 = scmp.eq.s32.totalorder %s27, 0
      %p80 = por %p78, %p79
      %s82 = sadd.s32 %s81, 1
      %p85 = scmp.eq.s32.totalorder %s21, 1
      %p86 = scmp.ne.s32.totalorder %s81, %s83
      %p87 = scmp.eq.s32.totalorder %s21, 0
      %p88 = por %p86, %p87
      %p89 = scmp.ne.s32.totalorder %s81, %s83
      %p90 = scmp.eq.s32.totalorder %s26, 1
      %p91 = por %p89, %p90
      %p92 = scmp.ne.s32.totalorder %s83, %s84
      %p93 = scmp.eq.s32.totalorder %s26, 0
      %p94 = por %p92, %p93
      %p95 = scmp.ne.s32.totalorder %s83, %s84
      %p96 = scmp.eq.s32.totalorder %s27, 1
      %p97 = por %p95, %p96
      %p99 = scmp.ne.s32.totalorder %s84, %s98
      %p100 = scmp.eq.s32.totalorder %s27, 0
      %p101 = por %p99, %p100
      %s103 = sadd.s32 %s102, 1
      %p106 = scmp.eq.s32.totalorder %s21, 1
      %p107 = scmp.ne.s32.totalorder %s102, %s104
      %p108 = scmp.eq.s32.totalorder %s21, 0
      %p109 = por %p107, %p108
      %p110 = scmp.ne.s32.totalorder %s102, %s104
      %p111 = scmp.eq.s32.totalorder %s26, 1
      %p112 = por %p110, %p111
      %p113 = scmp.ne.s32.totalorder %s104, %s105
      %p114 = scmp.eq.s32.totalorder %s26, 0
      %p115 = por %p113, %p114
      %p116 = scmp.ne.s32.totalorder %s104, %s105
      %p117 = scmp.eq.s32.totalorder %s27, 1
      %p118 = por %p116, %p117
      %p120 = scmp.ne.s32.totalorder %s105, %s119
      %p121 = scmp.eq.s32.totalorder %s27, 0
      %p122 = por %p120, %p121
      %s124 = sadd.s32 %s123, 1
      %p127 = scmp.eq.s32.totalorder %s21, 1
      %p128 = scmp.ne.s32.totalorder %s123, %s125
      %p129 = scmp.eq.s32.totalorder %s21, 0
      %p130 = por %p128, %p129
      %p131 = scmp.ne.s32.totalorder %s123, %s125
      %p132 = scmp.eq.s32.totalorder %s26, 1
      %p133 = por %p131, %p132
      %p134 = scmp.ne.s32.totalorder %s125, %s126
      %p135 = scmp.eq.s32.totalorder %s26, 0
      %p136 = por %p134, %p135
      %p137 = scmp.ne.s32.totalorder %s125, %s126
      %p138 = scmp.eq.s32.totalorder %s27, 1
      %p139 = por %p137, %p138
      %p141 = scmp.ne.s32.totalorder %s126, %s140
      %p142 = scmp.eq.s32.totalorder %s27, 0
      %p143 = por %p141, %p142
      %s145 = sadd.s32 %s144, 1
      %p148 = scmp.eq.s32.totalorder %s21, 1
      %p149 = scmp.ne.s32.totalorder %s144, %s146
      %p150 = scmp.eq.s32.totalorder %s21, 0
      %p151 = por %p149, %p150
      %p152 = scmp.ne.s32.totalorder %s144, %s146
      %p153 = scmp.eq.s32.totalorder %s26, 1
      %p154 = por %p152, %p153
      %p155 = scmp.ne.s32.totalorder %s146, %s147
      %p156 = scmp.eq.s32.totalorder %s26, 0
      %p157 = por %p155, %p156
      %p158 = scmp.ne.s32.totalorder %s146, %s147
      %p159 = scmp.eq.s32.totalorder %s27, 1
      %p160 = por %p158, %p159
      %p162 = scmp.ne.s32.totalorder %s147, %s161
      %p163 = scmp.eq.s32.totalorder %s27, 0
      %p164 = por %p162, %p163
      %s166 = sadd.s32 %s165, 1
      %p169 = scmp.eq.s32.totalorder %s21, 1
      %p170 = scmp.ne.s32.totalorder %s165, %s167
      %p171 = scmp.eq.s32.totalorder %s21, 0
      %p172 = por %p170, %p171
      %p173 = scmp.ne.s32.totalorder %s165, %s167
      %p174 = scmp.eq.s32.totalorder %s26, 1
      %p175 = por %p173, %p174
      %p176 = scmp.ne.s32.totalorder %s167, %s168
      %p177 = scmp.eq.s32.totalorder %s26, 0
      %p178 = por %p176, %p177
      %p179 = scmp.ne.s32.totalorder %s167, %s168
      %p180 = scmp.eq.s32.totalorder %s27, 1
      %p181 = por %p179, %p180
      %p183 = scmp.ne.s32.totalorder %s168, %s182
      %p184 = scmp.eq.s32.totalorder %s27, 0
      %p185 = por %p183, %p184
      %s187 = sadd.s32 %s186, 1
      %p190 = scmp.eq.s32.totalorder %s21, 1
      %p191 = scmp.ne.s32.totalorder %s186, %s188
      %p192 = scmp.eq.s32.totalorder %s21, 0
      %p193 = por %p191, %p192
      %p194 = scmp.ne.s32.totalorder %s186, %s188
      %p195 = scmp.eq.s32.totalorder %s26, 1
      %p196 = por %p194, %p195
      %p197 = scmp.ne.s32.totalorder %s188, %s189
      %p198 = scmp.eq.s32.totalorder %s26, 0
      %p199 = por %p197, %p198
      %p200 = scmp.ne.s32.totalorder %s188, %s189
      %p201 = scmp.eq.s32.totalorder %s27, 1
      %p202 = por %p200, %p201
      %p204 = scmp.ne.s32.totalorder %s189, %s203
      %p205 = scmp.eq.s32.totalorder %s27, 0
      %p206 = por %p204, %p205
      %s208 = sadd.s32 %s207, 1
      %p211 = scmp.eq.s32.totalorder %s21, 1
      %p212 = scmp.ne.s32.totalorder %s207, %s209
      %p213 = scmp.eq.s32.totalorder %s21, 0
      %p214 = por %p212, %p213
      %p215 = scmp.ne.s32.totalorder %s207, %s209
      %p216 = scmp.eq.s32.totalorder %s26, 1
      %p217 = por %p215, %p216
      %p218 = scmp.ne.s32.totalorder %s209, %s210
      %p219 = scmp.eq.s32.totalorder %s26, 0
      %p220 = por %p218, %p219
      %p221 = scmp.ne.s32.totalorder %s209, %s210
      %p222 = scmp.eq.s32.totalorder %s27, 1
      %p223 = por %p221, %p222
      %p225 = scmp.ne.s32.totalorder %s210, %s224
      %p226 = scmp.eq.s32.totalorder %s27, 0
      %p227 = por %p225, %p226
      %s229 = sadd.s32 %s228, 1
      %p232 = scmp.eq.s32.totalorder %s21, 1
      %p233 = scmp.ne.s32.totalorder %s228, %s230
      %p234 = scmp.eq.s32.totalorder %s21, 0
      %p235 = por %p233, %p234
      %p236 = scmp.ne.s32.totalorder %s228, %s230
      %p237 = scmp.eq.s32.totalorder %s26, 1
      %p238 = por %p236, %p237
      %p239 = scmp.ne.s32.totalorder %s230, %s231
      %p240 = scmp.eq.s32.totalorder %s26, 0
      %p241 = por %p239, %p240
      %p242 = scmp.ne.s32.totalorder %s230, %s231
      %p243 = scmp.eq.s32.totalorder %s27, 1
      %p244 = por %p242, %p243
      %p246 = scmp.ne.s32.totalorder %s231, %s245
      %p247 = scmp.eq.s32.totalorder %s27, 0
      %p248 = por %p246, %p247
      %s250 = sadd.s32 %s249, 1
      %p253 = scmp.eq.s32.totalorder %s21, 1
      %p254 = scmp.ne.s32.totalorder %s249, %s251
      %p255 = scmp.eq.s32.totalorder %s21, 0
      %p256 = por %p254, %p255
      %p257 = scmp.ne.s32.totalorder %s249, %s251
      %p258 = scmp.eq.s32.totalorder %s26, 1
      %p259 = por %p257, %p258
      %p260 = scmp.ne.s32.totalorder %s251, %s252
      %p261 = scmp.eq.s32.totalorder %s26, 0
      %p262 = por %p260, %p261
      %p263 = scmp.ne.s32.totalorder %s251, %s252
      %p264 = scmp.eq.s32.totalorder %s27, 1
      %p265 = por %p263, %p264
      %p267 = scmp.ne.s32.totalorder %s252, %s266
      %p268 = scmp.eq.s32.totalorder %s27, 0
      %p269 = por %p267, %p268
      %s271 = sadd.s32 %s270, 1
      %p274 = scmp.eq.s32.totalorder %s21, 1
      %p275 = scmp.ne.s32.totalorder %s270, %s272
      %p276 = scmp.eq.s32.totalorder %s21, 0
      %p277 = por %p275, %p276
      %p278 = scmp.ne.s32.totalorder %s270, %s272
      %p279 = scmp.eq.s32.totalorder %s26, 1
      %p280 = por %p278, %p279
      %p281 = scmp.ne.s32.totalorder %s272, %s273
      %p282 = scmp.eq.s32.totalorder %s26, 0
      %p283 = por %p281, %p282
      %p284 = scmp.ne.s32.totalorder %s272, %s273
      %p285 = scmp.eq.s32.totalorder %s27, 1
      %p286 = por %p284, %p285
      %p288 = scmp.ne.s32.totalorder %s273, %s287
      %p289 = scmp.eq.s32.totalorder %s27, 0
      %p290 = por %p288, %p289
      %s291 = ssub.s32 %s21, %s28
      %p292 = scmp.eq.s32.totalorder %s291, 0
      %s294 = sadd.s32 %s293, 1
      %s295 = scalar_select %p292, %s293, %s294
      %p298 = pneg %p292
      %p299 = scmp.eq.s32.totalorder %s21, 1
      %p300 = por %p298, %p299
      %p301 = scmp.ne.s32.totalorder %s293, %s296
      %p302 = scmp.eq.s32.totalorder %s21, 0
      %p303 = por %p301, %p302
      %p304 = scmp.ne.s32.totalorder %s293, %s296
      %p305 = scmp.eq.s32.totalorder %s26, 1
      %p306 = por %p304, %p305
      %p307 = scmp.ne.s32.totalorder %s296, %s297
      %p308 = scmp.eq.s32.totalorder %s26, 0
      %p309 = por %p307, %p308
      %p310 = scmp.ne.s32.totalorder %s296, %s297
      %p311 = scmp.eq.s32.totalorder %s27, 1
      %p312 = por %p310, %p311
      %p314 = scmp.ne.s32.totalorder %s297, %s313
      %p315 = scmp.eq.s32.totalorder %s27, 0
      %p316 = por %p314, %p315
      %p317 = scmp.le.s32.totalorder 1, %s21
      %p318 = scmp.lt.s32.totalorder %s21, 3
      %p319 = pnand %p317, %p318
      %p320 = pneg %p319
      // Predicated region
      $region9: #{tpu_custom_call.1} parent=5 // pred_check
        _
      $region10: #{tpu_custom_call.1} parent=5 // pred_check_branch
        %322 = sbr.rel (%p319) target = $region12
      $region11: #{tpu_custom_call.1} parent=5 // pred_region
        %s323 = ssub.s32 %s21, 1
        // Predicated region
        $region13: #{tpu_custom_call.1} parent=11 // pred_check
          %p324 = pneg %p94
        $region14: #{tpu_custom_call.1} parent=11 // pred_check_branch
          %326 = sbr.rel (%p324) target = $region16
        $region15: #{tpu_custom_call.1} parent=11 // pred_region
          _
        $region16: #{tpu_custom_call.1} parent=11 // pred_fallthru
          _
        // Predicated region
        $region17: #{tpu_custom_call.1} parent=11 // pred_check
          %p327 = pneg %p115
        $region18: #{tpu_custom_call.1} parent=11 // pred_check_branch
          %329 = sbr.rel (%p327) target = $region20
        $region19: #{tpu_custom_call.1} parent=11 // pred_region
          _
        $region20: #{tpu_custom_call.1} parent=11 // pred_fallthru
          _
        // Predicated region
        $region21: #{tpu_custom_call.1} parent=11 // pred_check
          %p330 = pneg %p136
        $region22: #{tpu_custom_call.1} parent=11 // pred_check_branch
          %332 = sbr.rel (%p330) target = $region24
        $region23: #{tpu_custom_call.1} parent=11 // pred_region
          _
        $region24: #{tpu_custom_call.1} parent=11 // pred_fallthru
          _
        // Predicated region
        $region25: #{tpu_custom_call.1} parent=11 // pred_check
          %p333 = pneg %p157
        $region26: #{tpu_custom_call.1} parent=11 // pred_check_branch
          %335 = sbr.rel (%p333) target = $region28
        $region27: #{tpu_custom_call.1} parent=11 // pred_region
          _
        $region28: #{tpu_custom_call.1} parent=11 // pred_fallthru
          _
        // Predicated region
        $region29: #{tpu_custom_call.1} parent=11 // pred_check
          %p336 = pneg %p178
        $region30: #{tpu_custom_call.1} parent=11 // pred_check_branch
          %338 = sbr.rel (%p336) target = $region32
        $region31: #{tpu_custom_call.1} parent=11 // pred_region
          _
        $region32: #{tpu_custom_call.1} parent=11 // pred_fallthru
          _
        // Predicated region
        $region33: #{tpu_custom_call.1} parent=11 // pred_check
          %p339 = pneg %p199
        $region34: #{tpu_custom_call.1} parent=11 // pred_check_branch
          %341 = sbr.rel (%p339) target = $region36
        $region35: #{tpu_custom_call.1} parent=11 // pred_region
          _
        $region36: #{tpu_custom_call.1} parent=11 // pred_fallthru
          _
        // Predicated region
        $region37: #{tpu_custom_call.1} parent=11 // pred_check
          %p342 = pneg %p220
        $region38: #{tpu_custom_call.1} parent=11 // pred_check_branch
          %344 = sbr.rel (%p342) target = $region40
        $region39: #{tpu_custom_call.1} parent=11 // pred_region
          _
        $region40: #{tpu_custom_call.1} parent=11 // pred_fallthru
          _
        // Predicated region
        $region41: #{tpu_custom_call.1} parent=11 // pred_check
          %p345 = pneg %p241
        $region42: #{tpu_custom_call.1} parent=11 // pred_check_branch
          %347 = sbr.rel (%p345) target = $region44
        $region43: #{tpu_custom_call.1} parent=11 // pred_region
          _
        $region44: #{tpu_custom_call.1} parent=11 // pred_fallthru
          _
        // Predicated region
        $region45: #{tpu_custom_call.1} parent=11 // pred_check
          %p348 = pneg %p262
        $region46: #{tpu_custom_call.1} parent=11 // pred_check_branch
          %350 = sbr.rel (%p348) target = $region48
        $region47: #{tpu_custom_call.1} parent=11 // pred_region
          _
        $region48: #{tpu_custom_call.1} parent=11 // pred_fallthru
          _
        // Predicated region
        $region49: #{tpu_custom_call.1} parent=11 // pred_check
          %p351 = pneg %p283
        $region50: #{tpu_custom_call.1} parent=11 // pred_check_branch
          %353 = sbr.rel (%p351) target = $region52
        $region51: #{tpu_custom_call.1} parent=11 // pred_region
          _
        $region52: #{tpu_custom_call.1} parent=11 // pred_fallthru
          _
      $region12: #{tpu_custom_call.1} parent=5 // pred_fallthru
        _
      %p354 = scmp.lt.s32.totalorder %s21, 2
      // Predicated region
      $region53: #{tpu_custom_call.1} parent=5 // pred_check
        %p355 = pneg %p354
      $region54: #{tpu_custom_call.1} parent=5 // pred_check_branch
        %357 = sbr.rel (%p355) target = $region56
      $region55: #{tpu_custom_call.1} parent=5 // pred_region
        // Predicated region
        $region57: #{tpu_custom_call.1} parent=55 // pred_check
          %p358 = pneg %p41
        $region58: #{tpu_custom_call.1} parent=55 // pred_check_branch
          %360 = sbr.rel (%p358) target = $region60
        $region59: #{tpu_custom_call.1} parent=55 // pred_region
          %s361 = sand.u32 %s31, 1
          %s362 = scalar_lea.sflag [#allocation3], %s361
          %s363 = sand.u32 %s31, 1
          %s364 = smul.addr %s363, 800
          %s365 = scalar_lea.vmem [#allocation2], %s364
          %s366 = smul.u32 50, %s21
          %s368 = ssub.s32 12800, 12800
          %369 = vsyncadd %s362, %s368
          %s370 = smul.addr %s366, 2
          %s371 = smul.addr %s370, 128
          %s372 = scalar_lea.hbm %s0, %s371
          %s373 = sshll.u32 %s365, 4
          %s374 = int_to_ptr.vmem [resolvable:$true] %s373
          %379 = dma.hbm_to_vmem [thread:$0]  %s372, 12800, %s374, %s362, 256, 256, 16
        $region60: #{tpu_custom_call.1} parent=55 // pred_fallthru
          _
        // Predicated region
        $region61: #{tpu_custom_call.1} parent=55 // pred_check
          %p380 = pneg %p67
        $region62: #{tpu_custom_call.1} parent=55 // pred_check_branch
          %382 = sbr.rel (%p380) target = $region64
        $region63: #{tpu_custom_call.1} parent=55 // pred_region
          %s383 = smul.u32 50, %s21
          %p384 = scmp.lt.s32.totalorder %s383, 99
          %s385 = scalar_select %p384, %s383, 99
          %s386 = smul.addr %s385, 8
          %s387 = scalar_lea.vmem %s1, %s386
          %s388 = smul.u32 50, %s21
        $region64: #{tpu_custom_call.1} parent=55 // pred_fallthru
          _
      $region56: #{tpu_custom_call.1} parent=5 // pred_fallthru
        _
      %p389 = scmp.le.s32.totalorder 1, %s21
      %p390 = scmp.lt.s32.totalorder %s21, 3
      %p391 = pnand %p389, %p390
      %p392 = pneg %p391
      // Predicated region
      $region65: #{tpu_custom_call.1} parent=5 // pred_check
        _
      $region66: #{tpu_custom_call.1} parent=5 // pred_check_branch
        %394 = sbr.rel (%p391) target = $region68
      $region67: #{tpu_custom_call.1} parent=5 // pred_region
        %s395 = ssub.s32 %s21, 1
        %s396 = sand.u32 %s34, 1
        %s397 = scalar_lea.sflag [#allocation3], %s396
        %s398 = sand.u32 %s34, 1
        %s399 = smul.addr %s398, 800
        %s400 = scalar_lea.vmem [#allocation2], %s399
        // Predicated region
        $region69: #{tpu_custom_call.1} parent=67 // pred_check
          %p401 = pneg %p47
        $region70: #{tpu_custom_call.1} parent=67 // pred_check_branch
          %403 = sbr.rel (%p401) target = $region72
        $region71: #{tpu_custom_call.1} parent=67 // pred_region
          %404 = dma.done %s397, 12800
        $region72: #{tpu_custom_call.1} parent=67 // pred_fallthru
          _
        %s405 = sand.u32 %s34, 1
        %s406 = scalar_lea.sflag [#allocation3], %s405
        %s407 = sand.u32 %s34, 1
        %s408 = smul.addr %s407, 800
        %s409 = scalar_lea.vmem [#allocation2], %s408
        %p410 = pneg %p47
        %p411 = pneg %p44
        %s412 = smul.u32 50, %s26
        %p413 = scmp.lt.s32.totalorder %s412, 99
        %s414 = scalar_select %p413, %s412, 99
        %s415 = smul.addr %s414, 8
        %s416 = scalar_lea.vmem %s1, %s415
        %p417 = pneg %p73
        %p418 = pneg %p70
        %p419 = pneg %p94
        %p420 = pneg %p91
        %p421 = pneg %p115
        %p422 = pneg %p112
        %p423 = pneg %p136
        %p424 = pneg %p133
        %p425 = pneg %p157
        %p426 = pneg %p154
        %p427 = pneg %p178
        %p428 = pneg %p175
        %p429 = pneg %p199
        %p430 = pneg %p196
        %p431 = pneg %p220
        %p432 = pneg %p217
        %p433 = pneg %p241
        %p434 = pneg %p238
        %p435 = pneg %p262
        %p436 = pneg %p259
        %p437 = pneg %p283
        %p438 = pneg %p280
        %p439 = pneg %p309
        %p440 = pneg %p306
        %s441 = smul.u32 50, %s26
        %p442 = scmp.lt.s32.totalorder %s441, 99
        %s443 = scalar_select %p442, %s441, 99
        %s444 = smul.addr %s443, 8
        %s445 = scalar_lea.vmem %s12, %s444
        %s446 = smul.u32 50, %s26
        %s447 = smul.u32 50, %s26
        %p448 = scmp.lt.s32.totalorder %s447, 99
        %s449 = scalar_select %p448, %s447, 99
        %s450 = smul.addr %s449, 8
        %s451 = scalar_lea.vmem %s1, %s450
        %s452 = smul.u32 50, %s26
        %s453 = smul.u32 50, %s26
        %p454 = scmp.lt.s32.totalorder %s453, 99
        %s455 = scalar_select %p454, %s453, 99
        %s456 = smul.addr %s455, 8
        %s457 = scalar_lea.vmem %s12, %s456
        %s458 = smul.u32 50, %s26
        %v459 = vld [vmem:[%s451] sm:$0xff]
        %v460 = vld [vmem:[%s451 + $0x8] sm:$0xff]
        %v461 = vld [vmem:[%s451 + $0x10] sm:$0xff]
        %v462 = vld [vmem:[%s451 + $0x18] sm:$0xff]
        %v463 = vld [vmem:[%s451 + $0x20] sm:$0xff]
        %v464 = vld [vmem:[%s451 + $0x28] sm:$0xff]
        %v465 = vld [vmem:[%s451 + $0x30] sm:$0xff]
        %v466 = vld [vmem:[%s451 + $0x38] sm:$0xff]
        %v467 = vld [vmem:[%s451 + $0x40] sm:$0xff]
        %v468 = vld [vmem:[%s451 + $0x48] sm:$0xff]
        %v469 = vld [vmem:[%s451 + $0x50] sm:$0xff]
        %v470 = vld [vmem:[%s451 + $0x58] sm:$0xff]
        %v471 = vld [vmem:[%s451 + $0x60] sm:$0xff]
        %v472 = vld [vmem:[%s451 + $0x68] sm:$0xff]
        %v473 = vld [vmem:[%s451 + $0x70] sm:$0xff]
        %v474 = vld [vmem:[%s451 + $0x78] sm:$0xff]
        %v475 = vld [vmem:[%s451 + $0x80] sm:$0xff]
        %v476 = vld [vmem:[%s451 + $0x88] sm:$0xff]
        %v477 = vld [vmem:[%s451 + $0x90] sm:$0xff]
        %v478 = vld [vmem:[%s451 + $0x98] sm:$0xff]
        %v479 = vld [vmem:[%s451 + $0xa0] sm:$0xff]
        %v480 = vld [vmem:[%s451 + $0xa8] sm:$0xff]
        %v481 = vld [vmem:[%s451 + $0xb0] sm:$0xff]
        %v482 = vld [vmem:[%s451 + $0xb8] sm:$0xff]
        %v483 = vld [vmem:[%s451 + $0xc0] sm:$0xff]
        %v484 = vld [vmem:[%s451 + $0xc8] sm:$0xff]
        %v485 = vld [vmem:[%s451 + $0xd0] sm:$0xff]
        %v486 = vld [vmem:[%s451 + $0xd8] sm:$0xff]
        %v487 = vld [vmem:[%s451 + $0xe0] sm:$0xff]
        %v488 = vld [vmem:[%s451 + $0xe8] sm:$0xff]
        %v489 = vld [vmem:[%s451 + $0xf0] sm:$0xff]
        %v490 = vld [vmem:[%s451 + $0xf8] sm:$0xff]
        %v491 = vld [vmem:[%s451 + $0x100] sm:$0xff]
        %v492 = vld [vmem:[%s451 + $0x108] sm:$0xff]
        %v493 = vld [vmem:[%s451 + $0x110] sm:$0xff]
        %v494 = vld [vmem:[%s451 + $0x118] sm:$0xff]
        %v495 = vld [vmem:[%s451 + $0x120] sm:$0xff]
        %v496 = vld [vmem:[%s451 + $0x128] sm:$0xff]
        %v497 = vld [vmem:[%s451 + $0x130] sm:$0xff]
        %v498 = vld [vmem:[%s451 + $0x138] sm:$0xff]
        %v499 = vld [vmem:[%s451 + $0x140] sm:$0xff]
        %v500 = vld [vmem:[%s451 + $0x148] sm:$0xff]
        %v501 = vld [vmem:[%s451 + $0x150] sm:$0xff]
        %v502 = vld [vmem:[%s451 + $0x158] sm:$0xff]
        %v503 = vld [vmem:[%s451 + $0x160] sm:$0xff]
        %v504 = vld [vmem:[%s451 + $0x168] sm:$0xff]
        %v505 = vld [vmem:[%s451 + $0x170] sm:$0xff]
        %v506 = vld [vmem:[%s451 + $0x178] sm:$0xff]
        %v507 = vld [vmem:[%s451 + $0x180] sm:$0xff]
        %v508 = vld [vmem:[%s451 + $0x188] sm:$0xff]
        %v509 = vld [vmem:[%s2] sm:$0x77]
        %511 = vset.pattern.permute.xlu0 0
        %512 = vperm.xlu0 %511, %v459
        %v513 = vpop.permute.xlu0 %512
        %516 = vset.pattern.permute.xlu0 0
        %517 = vperm.xlu0 %516, %v460
        %v518 = vpop.permute.xlu0 %517
        %521 = vset.pattern.permute.xlu0 0
        %522 = vperm.xlu0 %521, %v461
        %v523 = vpop.permute.xlu0 %522
        %526 = vset.pattern.permute.xlu0 0
        %527 = vperm.xlu0 %526, %v462
        %v528 = vpop.permute.xlu0 %527
        %531 = vset.pattern.permute.xlu0 0
        %532 = vperm.xlu0 %531, %v463
        %v533 = vpop.permute.xlu0 %532
        %536 = vset.pattern.permute.xlu0 0
        %537 = vperm.xlu0 %536, %v464
        %v538 = vpop.permute.xlu0 %537
        %541 = vset.pattern.permute.xlu0 0
        %542 = vperm.xlu0 %541, %v465
        %v543 = vpop.permute.xlu0 %542
        %546 = vset.pattern.permute.xlu0 0
        %547 = vperm.xlu0 %546, %v466
        %v548 = vpop.permute.xlu0 %547
        %551 = vset.pattern.permute.xlu0 0
        %552 = vperm.xlu0 %551, %v467
        %v553 = vpop.permute.xlu0 %552
        %556 = vset.pattern.permute.xlu0 0
        %557 = vperm.xlu0 %556, %v468
        %v558 = vpop.permute.xlu0 %557
        %561 = vset.pattern.permute.xlu0 0
        %562 = vperm.xlu0 %561, %v469
        %v563 = vpop.permute.xlu0 %562
        %566 = vset.pattern.permute.xlu0 0
        %567 = vperm.xlu0 %566, %v470
        %v568 = vpop.permute.xlu0 %567
        %571 = vset.pattern.permute.xlu0 0
        %572 = vperm.xlu0 %571, %v471
        %v573 = vpop.permute.xlu0 %572
        %576 = vset.pattern.permute.xlu0 0
        %577 = vperm.xlu0 %576, %v472
        %v578 = vpop.permute.xlu0 %577
        %581 = vset.pattern.permute.xlu0 0
        %582 = vperm.xlu0 %581, %v473
        %v583 = vpop.permute.xlu0 %582
        %586 = vset.pattern.permute.xlu0 0
        %587 = vperm.xlu0 %586, %v474
        %v588 = vpop.permute.xlu0 %587
        %591 = vset.pattern.permute.xlu0 0
        %592 = vperm.xlu0 %591, %v475
        %v593 = vpop.permute.xlu0 %592
        %596 = vset.pattern.permute.xlu0 0
        %597 = vperm.xlu0 %596, %v476
        %v598 = vpop.permute.xlu0 %597
        %601 = vset.pattern.permute.xlu0 0
        %602 = vperm.xlu0 %601, %v477
        %v603 = vpop.permute.xlu0 %602
        %606 = vset.pattern.permute.xlu0 0
        %607 = vperm.xlu0 %606, %v478
        %v608 = vpop.permute.xlu0 %607
        %611 = vset.pattern.permute.xlu0 0
        %612 = vperm.xlu0 %611, %v479
        %v613 = vpop.permute.xlu0 %612
        %616 = vset.pattern.permute.xlu0 0
        %617 = vperm.xlu0 %616, %v480
        %v618 = vpop.permute.xlu0 %617
        %621 = vset.pattern.permute.xlu0 0
        %622 = vperm.xlu0 %621, %v481
        %v623 = vpop.permute.xlu0 %622
        %626 = vset.pattern.permute.xlu0 0
        %627 = vperm.xlu0 %626, %v482
        %v628 = vpop.permute.xlu0 %627
        %631 = vset.pattern.permute.xlu0 0
        %632 = vperm.xlu0 %631, %v483
        %v633 = vpop.permute.xlu0 %632
        %636 = vset.pattern.permute.xlu0 0
        %637 = vperm.xlu0 %636, %v484
        %v638 = vpop.permute.xlu0 %637
        %641 = vset.pattern.permute.xlu0 0
        %642 = vperm.xlu0 %641, %v485
        %v643 = vpop.permute.xlu0 %642
        %646 = vset.pattern.permute.xlu0 0
        %647 = vperm.xlu0 %646, %v486
        %v648 = vpop.permute.xlu0 %647
        %651 = vset.pattern.permute.xlu0 0
        %652 = vperm.xlu0 %651, %v487
        %v653 = vpop.permute.xlu0 %652
        %656 = vset.pattern.permute.xlu0 0
        %657 = vperm.xlu0 %656, %v488
        %v658 = vpop.permute.xlu0 %657
        %661 = vset.pattern.permute.xlu0 0
        %662 = vperm.xlu0 %661, %v489
        %v663 = vpop.permute.xlu0 %662
        %666 = vset.pattern.permute.xlu0 0
        %667 = vperm.xlu0 %666, %v490
        %v668 = vpop.permute.xlu0 %667
        %671 = vset.pattern.permute.xlu0 0
        %672 = vperm.xlu0 %671, %v491
        %v673 = vpop.permute.xlu0 %672
        %676 = vset.pattern.permute.xlu0 0
        %677 = vperm.xlu0 %676, %v492
        %v678 = vpop.permute.xlu0 %677
        %681 = vset.pattern.permute.xlu0 0
        %682 = vperm.xlu0 %681, %v493
        %v683 = vpop.permute.xlu0 %682
        %686 = vset.pattern.permute.xlu0 0
        %687 = vperm.xlu0 %686, %v494
        %v688 = vpop.permute.xlu0 %687
        %691 = vset.pattern.permute.xlu0 0
        %692 = vperm.xlu0 %691, %v495
        %v693 = vpop.permute.xlu0 %692
        %696 = vset.pattern.permute.xlu0 0
        %697 = vperm.xlu0 %696, %v496
        %v698 = vpop.permute.xlu0 %697
        %701 = vset.pattern.permute.xlu0 0
        %702 = vperm.xlu0 %701, %v497
        %v703 = vpop.permute.xlu0 %702
        %706 = vset.pattern.permute.xlu0 0
        %707 = vperm.xlu0 %706, %v498
        %v708 = vpop.permute.xlu0 %707
        %711 = vset.pattern.permute.xlu0 0
        %712 = vperm.xlu0 %711, %v499
        %v713 = vpop.permute.xlu0 %712
        %716 = vset.pattern.permute.xlu0 0
        %717 = vperm.xlu0 %716, %v500
        %v718 = vpop.permute.xlu0 %717
        %721 = vset.pattern.permute.xlu0 0
        %722 = vperm.xlu0 %721, %v501
        %v723 = vpop.permute.xlu0 %722
        %726 = vset.pattern.permute.xlu0 0
        %727 = vperm.xlu0 %726, %v502
        %v728 = vpop.permute.xlu0 %727
        %731 = vset.pattern.permute.xlu0 0
        %732 = vperm.xlu0 %731, %v503
        %v733 = vpop.permute.xlu0 %732
        %736 = vset.pattern.permute.xlu0 0
        %737 = vperm.xlu0 %736, %v504
        %v738 = vpop.permute.xlu0 %737
        %741 = vset.pattern.permute.xlu0 0
        %742 = vperm.xlu0 %741, %v505
        %v743 = vpop.permute.xlu0 %742
        %746 = vset.pattern.permute.xlu0 0
        %747 = vperm.xlu0 %746, %v506
        %v748 = vpop.permute.xlu0 %747
        %751 = vset.pattern.permute.xlu0 0
        %752 = vperm.xlu0 %751, %v507
        %v753 = vpop.permute.xlu0 %752
        %756 = vset.pattern.permute.xlu0 0
        %757 = vperm.xlu0 %756, %v508
        %v758 = vpop.permute.xlu0 %757
        %v761 = vlaneseq
        %v762 = vshrl.u32 %v761, 7
        %v763 = vsub.s32 0, %v762
        %v764 = vrot.slane %v509, %v763
        %v765 = vlaneseq
        %v766 = vshrl.u32 %v765, 7
        %v767 = vsub.s32 4, %v766
        %v768 = vrot.slane %v509, %v767
        %v771 = vlaneseq
        %v772 = vshrl.u32 %v771, 7
        %v773 = vsub.s32 0, %v772
        %v774 = vrot.slane %v764, %v773
        %v775 = vlaneseq
        %v776 = vshrl.u32 %v775, 7
        %v777 = vsub.s32 0, %v776
        %v778 = vrot.slane %v768, %v777
        %v779 = vmul.f32 %v513, %v774
        %v780 = vmul.f32 %v513, %v778
        %v781 = vmul.f32 %v518, %v774
        %v782 = vmul.f32 %v518, %v778
        %v783 = vmul.f32 %v523, %v774
        %v784 = vmul.f32 %v523, %v778
        %v785 = vmul.f32 %v528, %v774
        %v786 = vmul.f32 %v528, %v778
        %v787 = vmul.f32 %v533, %v774
        %v788 = vmul.f32 %v533, %v778
        %v789 = vmul.f32 %v538, %v774
        %v790 = vmul.f32 %v538, %v778
        %v791 = vmul.f32 %v543, %v774
        %v792 = vmul.f32 %v543, %v778
        %v793 = vmul.f32 %v548, %v774
        %v794 = vmul.f32 %v548, %v778
        %v795 = vmul.f32 %v553, %v774
        %v796 = vmul.f32 %v553, %v778
        %v797 = vmul.f32 %v558, %v774
        %v798 = vmul.f32 %v558, %v778
        %v799 = vmul.f32 %v563, %v774
        %v800 = vmul.f32 %v563, %v778
        %v801 = vmul.f32 %v568, %v774
        %v802 = vmul.f32 %v568, %v778
        %v803 = vmul.f32 %v573, %v774
        %v804 = vmul.f32 %v573, %v778
        %v805 = vmul.f32 %v578, %v774
        %v806 = vmul.f32 %v578, %v778
        %v807 = vmul.f32 %v583, %v774
        %v808 = vmul.f32 %v583, %v778
        %v809 = vmul.f32 %v588, %v774
        %v810 = vmul.f32 %v588, %v778
        %v811 = vmul.f32 %v593, %v774
        %v812 = vmul.f32 %v593, %v778
        %v813 = vmul.f32 %v598, %v774
        %v814 = vmul.f32 %v598, %v778
        %v815 = vmul.f32 %v603, %v774
        %v816 = vmul.f32 %v603, %v778
        %v817 = vmul.f32 %v608, %v774
        %v818 = vmul.f32 %v608, %v778
        %v819 = vmul.f32 %v613, %v774
        %v820 = vmul.f32 %v613, %v778
        %v821 = vmul.f32 %v618, %v774
        %v822 = vmul.f32 %v618, %v778
        %v823 = vmul.f32 %v623, %v774
        %v824 = vmul.f32 %v623, %v778
        %v825 = vmul.f32 %v628, %v774
        %v826 = vmul.f32 %v628, %v778
        %v827 = vmul.f32 %v633, %v774
        %v828 = vmul.f32 %v633, %v778
        %v829 = vmul.f32 %v638, %v774
        %v830 = vmul.f32 %v638, %v778
        %v831 = vmul.f32 %v643, %v774
        %v832 = vmul.f32 %v643, %v778
        %v833 = vmul.f32 %v648, %v774
        %v834 = vmul.f32 %v648, %v778
        %v835 = vmul.f32 %v653, %v774
        %v836 = vmul.f32 %v653, %v778
        %v837 = vmul.f32 %v658, %v774
        %v838 = vmul.f32 %v658, %v778
        %v839 = vmul.f32 %v663, %v774
        %v840 = vmul.f32 %v663, %v778
        %v841 = vmul.f32 %v668, %v774
        %v842 = vmul.f32 %v668, %v778
        %v843 = vmul.f32 %v673, %v774
        %v844 = vmul.f32 %v673, %v778
        %v845 = vmul.f32 %v678, %v774
        %v846 = vmul.f32 %v678, %v778
        %v847 = vmul.f32 %v683, %v774
        %v848 = vmul.f32 %v683, %v778
        %v849 = vmul.f32 %v688, %v774
        %v850 = vmul.f32 %v688, %v778
        %v851 = vmul.f32 %v693, %v774
        %v852 = vmul.f32 %v693, %v778
        %v853 = vmul.f32 %v698, %v774
        %v854 = vmul.f32 %v698, %v778
        %v855 = vmul.f32 %v703, %v774
        %v856 = vmul.f32 %v703, %v778
        %v857 = vmul.f32 %v708, %v774
        %v858 = vmul.f32 %v708, %v778
        %v859 = vmul.f32 %v713, %v774
        %v860 = vmul.f32 %v713, %v778
        %v861 = vmul.f32 %v718, %v774
        %v862 = vmul.f32 %v718, %v778
        %v863 = vmul.f32 %v723, %v774
        %v864 = vmul.f32 %v723, %v778
        %v865 = vmul.f32 %v728, %v774
        %v866 = vmul.f32 %v728, %v778
        %v867 = vmul.f32 %v733, %v774
        %v868 = vmul.f32 %v733, %v778
        %v869 = vmul.f32 %v738, %v774
        %v870 = vmul.f32 %v738, %v778
        %v871 = vmul.f32 %v743, %v774
        %v872 = vmul.f32 %v743, %v778
        %v873 = vmul.f32 %v748, %v774
        %v874 = vmul.f32 %v748, %v778
        %v875 = vmul.f32 %v753, %v774
        %v876 = vmul.f32 %v753, %v778
        %v877 = vmul.f32 %v758, %v774
        %v878 = vmul.f32 %v758, %v778
        %879 = vset.pattern.permute.xlu0 1
        %880 = vperm.xlu0 %879, %v459
        %v881 = vpop.permute.xlu0 %880
        %883 = vset.pattern.permute.xlu0 1
        %884 = vperm.xlu0 %883, %v460
        %v885 = vpop.permute.xlu0 %884
        %887 = vset.pattern.permute.xlu0 1
        %888 = vperm.xlu0 %887, %v461
        %v889 = vpop.permute.xlu0 %888
        %891 = vset.pattern.permute.xlu0 1
        %892 = vperm.xlu0 %891, %v462
        %v893 = vpop.permute.xlu0 %892
        %895 = vset.pattern.permute.xlu0 1
        %896 = vperm.xlu0 %895, %v463
        %v897 = vpop.permute.xlu0 %896
        %899 = vset.pattern.permute.xlu0 1
        %900 = vperm.xlu0 %899, %v464
        %v901 = vpop.permute.xlu0 %900
        %903 = vset.pattern.permute.xlu0 1
        %904 = vperm.xlu0 %903, %v465
        %v905 = vpop.permute.xlu0 %904
        %907 = vset.pattern.permute.xlu0 1
        %908 = vperm.xlu0 %907, %v466
        %v909 = vpop.permute.xlu0 %908
        %911 = vset.pattern.permute.xlu0 1
        %912 = vperm.xlu0 %911, %v467
        %v913 = vpop.permute.xlu0 %912
        %915 = vset.pattern.permute.xlu0 1
        %916 = vperm.xlu0 %915, %v468
        %v917 = vpop.permute.xlu0 %916
        %919 = vset.pattern.permute.xlu0 1
        %920 = vperm.xlu0 %919, %v469
        %v921 = vpop.permute.xlu0 %920
        %923 = vset.pattern.permute.xlu0 1
        %924 = vperm.xlu0 %923, %v470
        %v925 = vpop.permute.xlu0 %924
        %927 = vset.pattern.permute.xlu0 1
        %928 = vperm.xlu0 %927, %v471
        %v929 = vpop.permute.xlu0 %928
        %931 = vset.pattern.permute.xlu0 1
        %932 = vperm.xlu0 %931, %v472
        %v933 = vpop.permute.xlu0 %932
        %935 = vset.pattern.permute.xlu0 1
        %936 = vperm.xlu0 %935, %v473
        %v937 = vpop.permute.xlu0 %936
        %939 = vset.pattern.permute.xlu0 1
        %940 = vperm.xlu0 %939, %v474
        %v941 = vpop.permute.xlu0 %940
        %943 = vset.pattern.permute.xlu0 1
        %944 = vperm.xlu0 %943, %v475
        %v945 = vpop.permute.xlu0 %944
        %947 = vset.pattern.permute.xlu0 1
        %948 = vperm.xlu0 %947, %v476
        %v949 = vpop.permute.xlu0 %948
        %951 = vset.pattern.permute.xlu0 1
        %952 = vperm.xlu0 %951, %v477
        %v953 = vpop.permute.xlu0 %952
        %955 = vset.pattern.permute.xlu0 1
        %956 = vperm.xlu0 %955, %v478
        %v957 = vpop.permute.xlu0 %956
        %959 = vset.pattern.permute.xlu0 1
        %960 = vperm.xlu0 %959, %v479
        %v961 = vpop.permute.xlu0 %960
        %963 = vset.pattern.permute.xlu0 1
        %964 = vperm.xlu0 %963, %v480
        %v965 = vpop.permute.xlu0 %964
        %967 = vset.pattern.permute.xlu0 1
        %968 = vperm.xlu0 %967, %v481
        %v969 = vpop.permute.xlu0 %968
        %971 = vset.pattern.permute.xlu0 1
        %972 = vperm.xlu0 %971, %v482
        %v973 = vpop.permute.xlu0 %972
        %975 = vset.pattern.permute.xlu0 1
        %976 = vperm.xlu0 %975, %v483
        %v977 = vpop.permute.xlu0 %976
        %979 = vset.pattern.permute.xlu0 1
        %980 = vperm.xlu0 %979, %v484
        %v981 = vpop.permute.xlu0 %980
        %983 = vset.pattern.permute.xlu0 1
        %984 = vperm.xlu0 %983, %v485
        %v985 = vpop.permute.xlu0 %984
        %987 = vset.pattern.permute.xlu0 1
        %988 = vperm.xlu0 %987, %v486
        %v989 = vpop.permute.xlu0 %988
        %991 = vset.pattern.permute.xlu0 1
        %992 = vperm.xlu0 %991, %v487
        %v993 = vpop.permute.xlu0 %992
        %995 = vset.pattern.permute.xlu0 1
        %996 = vperm.xlu0 %995, %v488
        %v997 = vpop.permute.xlu0 %996
        %999 = vset.pattern.permute.xlu0 1
        %1000 = vperm.xlu0 %999, %v489
        %v1001 = vpop.permute.xlu0 %1000
        %1003 = vset.pattern.permute.xlu0 1
        %1004 = vperm.xlu0 %1003, %v490
        %v1005 = vpop.permute.xlu0 %1004
        %1007 = vset.pattern.permute.xlu0 1
        %1008 = vperm.xlu0 %1007, %v491
        %v1009 = vpop.permute.xlu0 %1008
        %1011 = vset.pattern.permute.xlu0 1
        %1012 = vperm.xlu0 %1011, %v492
        %v1013 = vpop.permute.xlu0 %1012
        %1015 = vset.pattern.permute.xlu0 1
        %1016 = vperm.xlu0 %1015, %v493
        %v1017 = vpop.permute.xlu0 %1016
        %1019 = vset.pattern.permute.xlu0 1
        %1020 = vperm.xlu0 %1019, %v494
        %v1021 = vpop.permute.xlu0 %1020
        %1023 = vset.pattern.permute.xlu0 1
        %1024 = vperm.xlu0 %1023, %v495
        %v1025 = vpop.permute.xlu0 %1024
        %1027 = vset.pattern.permute.xlu0 1
        %1028 = vperm.xlu0 %1027, %v496
        %v1029 = vpop.permute.xlu0 %1028
        %1031 = vset.pattern.permute.xlu0 1
        %1032 = vperm.xlu0 %1031, %v497
        %v1033 = vpop.permute.xlu0 %1032
        %1035 = vset.pattern.permute.xlu0 1
        %1036 = vperm.xlu0 %1035, %v498
        %v1037 = vpop.permute.xlu0 %1036
        %1039 = vset.pattern.permute.xlu0 1
        %1040 = vperm.xlu0 %1039, %v499
        %v1041 = vpop.permute.xlu0 %1040
        %1043 = vset.pattern.permute.xlu0 1
        %1044 = vperm.xlu0 %1043, %v500
        %v1045 = vpop.permute.xlu0 %1044
        %1047 = vset.pattern.permute.xlu0 1
        %1048 = vperm.xlu0 %1047, %v501
        %v1049 = vpop.permute.xlu0 %1048
        %1051 = vset.pattern.permute.xlu0 1
        %1052 = vperm.xlu0 %1051, %v502
        %v1053 = vpop.permute.xlu0 %1052
        %1055 = vset.pattern.permute.xlu0 1
        %1056 = vperm.xlu0 %1055, %v503
        %v1057 = vpop.permute.xlu0 %1056
        %1059 = vset.pattern.permute.xlu0 1
        %1060 = vperm.xlu0 %1059, %v504
        %v1061 = vpop.permute.xlu0 %1060
        %1063 = vset.pattern.permute.xlu0 1
        %1064 = vperm.xlu0 %1063, %v505
        %v1065 = vpop.permute.xlu0 %1064
        %1067 = vset.pattern.permute.xlu0 1
        %1068 = vperm.xlu0 %1067, %v506
        %v1069 = vpop.permute.xlu0 %1068
        %1071 = vset.pattern.permute.xlu0 1
        %1072 = vperm.xlu0 %1071, %v507
        %v1073 = vpop.permute.xlu0 %1072
        %1075 = vset.pattern.permute.xlu0 1
        %1076 = vperm.xlu0 %1075, %v508
        %v1077 = vpop.permute.xlu0 %1076
        %v1079 = vlaneseq
        %v1080 = vshrl.u32 %v1079, 7
        %v1081 = vsub.s32 1, %v1080
        %v1082 = vrot.slane %v509, %v1081
        %v1083 = vlaneseq
        %v1084 = vshrl.u32 %v1083, 7
        %v1085 = vsub.s32 5, %v1084
        %v1086 = vrot.slane %v509, %v1085
        %v1089 = vlaneseq
        %v1090 = vshrl.u32 %v1089, 7
        %v1091 = vsub.s32 1, %v1090
        %v1092 = vrot.slane %v1082, %v1091
        %v1093 = vlaneseq
        %v1094 = vshrl.u32 %v1093, 7
        %v1095 = vsub.s32 1, %v1094
        %v1096 = vrot.slane %v1086, %v1095
        %v1097 = vmul.f32 %v881, %v1092
        %v1098 = vmul.f32 %v881, %v1096
        %v1099 = vmul.f32 %v885, %v1092
        %v1100 = vmul.f32 %v885, %v1096
        %v1101 = vmul.f32 %v889, %v1092
        %v1102 = vmul.f32 %v889, %v1096
        %v1103 = vmul.f32 %v893, %v1092
        %v1104 = vmul.f32 %v893, %v1096
        %v1105 = vmul.f32 %v897, %v1092
        %v1106 = vmul.f32 %v897, %v1096
        %v1107 = vmul.f32 %v901, %v1092
        %v1108 = vmul.f32 %v901, %v1096
        %v1109 = vmul.f32 %v905, %v1092
        %v1110 = vmul.f32 %v905, %v1096
        %v1111 = vmul.f32 %v909, %v1092
        %v1112 = vmul.f32 %v909, %v1096
        %v1113 = vmul.f32 %v913, %v1092
        %v1114 = vmul.f32 %v913, %v1096
        %v1115 = vmul.f32 %v917, %v1092
        %v1116 = vmul.f32 %v917, %v1096
        %v1117 = vmul.f32 %v921, %v1092
        %v1118 = vmul.f32 %v921, %v1096
        %v1119 = vmul.f32 %v925, %v1092
        %v1120 = vmul.f32 %v925, %v1096
        %v1121 = vmul.f32 %v929, %v1092
        %v1122 = vmul.f32 %v929, %v1096
        %v1123 = vmul.f32 %v933, %v1092
        %v1124 = vmul.f32 %v933, %v1096
        %v1125 = vmul.f32 %v937, %v1092
        %v1126 = vmul.f32 %v937, %v1096
        %v1127 = vmul.f32 %v941, %v1092
        %v1128 = vmul.f32 %v941, %v1096
        %v1129 = vmul.f32 %v945, %v1092
        %v1130 = vmul.f32 %v945, %v1096
        %v1131 = vmul.f32 %v949, %v1092
        %v1132 = vmul.f32 %v949, %v1096
        %v1133 = vmul.f32 %v953, %v1092
        %v1134 = vmul.f32 %v953, %v1096
        %v1135 = vmul.f32 %v957, %v1092
        %v1136 = vmul.f32 %v957, %v1096
        %v1137 = vmul.f32 %v961, %v1092
        %v1138 = vmul.f32 %v961, %v1096
        %v1139 = vmul.f32 %v965, %v1092
        %v1140 = vmul.f32 %v965, %v1096
        %v1141 = vmul.f32 %v969, %v1092
        %v1142 = vmul.f32 %v969, %v1096
        %v1143 = vmul.f32 %v973, %v1092
        %v1144 = vmul.f32 %v973, %v1096
        %v1145 = vmul.f32 %v977, %v1092
        %v1146 = vmul.f32 %v977, %v1096
        %v1147 = vmul.f32 %v981, %v1092
        %v1148 = vmul.f32 %v981, %v1096
        %v1149 = vmul.f32 %v985, %v1092
        %v1150 = vmul.f32 %v985, %v1096
        %v1151 = vmul.f32 %v989, %v1092
        %v1152 = vmul.f32 %v989, %v1096
        %v1153 = vmul.f32 %v993, %v1092
        %v1154 = vmul.f32 %v993, %v1096
        %v1155 = vmul.f32 %v997, %v1092
        %v1156 = vmul.f32 %v997, %v1096
        %v1157 = vmul.f32 %v1001, %v1092
        %v1158 = vmul.f32 %v1001, %v1096
        %v1159 = vmul.f32 %v1005, %v1092
        %v1160 = vmul.f32 %v1005, %v1096
        %v1161 = vmul.f32 %v1009, %v1092
        %v1162 = vmul.f32 %v1009, %v1096
        %v1163 = vmul.f32 %v1013, %v1092
        %v1164 = vmul.f32 %v1013, %v1096
        %v1165 = vmul.f32 %v1017, %v1092
        %v1166 = vmul.f32 %v1017, %v1096
        %v1167 = vmul.f32 %v1021, %v1092
        %v1168 = vmul.f32 %v1021, %v1096
        %v1169 = vmul.f32 %v1025, %v1092
        %v1170 = vmul.f32 %v1025, %v1096
        %v1171 = vmul.f32 %v1029, %v1092
        %v1172 = vmul.f32 %v1029, %v1096
        %v1173 = vmul.f32 %v1033, %v1092
        %v1174 = vmul.f32 %v1033, %v1096
        %v1175 = vmul.f32 %v1037, %v1092
        %v1176 = vmul.f32 %v1037, %v1096
        %v1177 = vmul.f32 %v1041, %v1092
        %v1178 = vmul.f32 %v1041, %v1096
        %v1179 = vmul.f32 %v1045, %v1092
        %v1180 = vmul.f32 %v1045, %v1096
        %v1181 = vmul.f32 %v1049, %v1092
        %v1182 = vmul.f32 %v1049, %v1096
        %v1183 = vmul.f32 %v1053, %v1092
        %v1184 = vmul.f32 %v1053, %v1096
        %v1185 = vmul.f32 %v1057, %v1092
        %v1186 = vmul.f32 %v1057, %v1096
        %v1187 = vmul.f32 %v1061, %v1092
        %v1188 = vmul.f32 %v1061, %v1096
        %v1189 = vmul.f32 %v1065, %v1092
        %v1190 = vmul.f32 %v1065, %v1096
        %v1191 = vmul.f32 %v1069, %v1092
        %v1192 = vmul.f32 %v1069, %v1096
        %v1193 = vmul.f32 %v1073, %v1092
        %v1194 = vmul.f32 %v1073, %v1096
        %v1195 = vmul.f32 %v1077, %v1092
        %v1196 = vmul.f32 %v1077, %v1096
        %v1197 = vadd.f32 %v779, %v1097
        %v1198 = vadd.f32 %v780, %v1098
        %v1199 = vadd.f32 %v781, %v1099
        %v1200 = vadd.f32 %v782, %v1100
        %v1201 = vadd.f32 %v783, %v1101
        %v1202 = vadd.f32 %v784, %v1102
        %v1203 = vadd.f32 %v785, %v1103
        %v1204 = vadd.f32 %v786, %v1104
        %v1205 = vadd.f32 %v787, %v1105
        %v1206 = vadd.f32 %v788, %v1106
        %v1207 = vadd.f32 %v789, %v1107
        %v1208 = vadd.f32 %v790, %v1108
        %v1209 = vadd.f32 %v791, %v1109
        %v1210 = vadd.f32 %v792, %v1110
        %v1211 = vadd.f32 %v793, %v1111
        %v1212 = vadd.f32 %v794, %v1112
        %v1213 = vadd.f32 %v795, %v1113
        %v1214 = vadd.f32 %v796, %v1114
        %v1215 = vadd.f32 %v797, %v1115
        %v1216 = vadd.f32 %v798, %v1116
        %v1217 = vadd.f32 %v799, %v1117
        %v1218 = vadd.f32 %v800, %v1118
        %v1219 = vadd.f32 %v801, %v1119
        %v1220 = vadd.f32 %v802, %v1120
        %v1221 = vadd.f32 %v803, %v1121
        %v1222 = vadd.f32 %v804, %v1122
        %v1223 = vadd.f32 %v805, %v1123
        %v1224 = vadd.f32 %v806, %v1124
        %v1225 = vadd.f32 %v807, %v1125
        %v1226 = vadd.f32 %v808, %v1126
        %v1227 = vadd.f32 %v809, %v1127
        %v1228 = vadd.f32 %v810, %v1128
        %v1229 = vadd.f32 %v811, %v1129
        %v1230 = vadd.f32 %v812, %v1130
        %v1231 = vadd.f32 %v813, %v1131
        %v1232 = vadd.f32 %v814, %v1132
        %v1233 = vadd.f32 %v815, %v1133
        %v1234 = vadd.f32 %v816, %v1134
        %v1235 = vadd.f32 %v817, %v1135
        %v1236 = vadd.f32 %v818, %v1136
        %v1237 = vadd.f32 %v819, %v1137
        %v1238 = vadd.f32 %v820, %v1138
        %v1239 = vadd.f32 %v821, %v1139
        %v1240 = vadd.f32 %v822, %v1140
        %v1241 = vadd.f32 %v823, %v1141
        %v1242 = vadd.f32 %v824, %v1142
        %v1243 = vadd.f32 %v825, %v1143
        %v1244 = vadd.f32 %v826, %v1144
        %v1245 = vadd.f32 %v827, %v1145
        %v1246 = vadd.f32 %v828, %v1146
        %v1247 = vadd.f32 %v829, %v1147
        %v1248 = vadd.f32 %v830, %v1148
        %v1249 = vadd.f32 %v831, %v1149
        %v1250 = vadd.f32 %v832, %v1150
        %v1251 = vadd.f32 %v833, %v1151
        %v1252 = vadd.f32 %v834, %v1152
        %v1253 = vadd.f32 %v835, %v1153
        %v1254 = vadd.f32 %v836, %v1154
        %v1255 = vadd.f32 %v837, %v1155
        %v1256 = vadd.f32 %v838, %v1156
        %v1257 = vadd.f32 %v839, %v1157
        %v1258 = vadd.f32 %v840, %v1158
        %v1259 = vadd.f32 %v841, %v1159
        %v1260 = vadd.f32 %v842, %v1160
        %v1261 = vadd.f32 %v843, %v1161
        %v1262 = vadd.f32 %v844, %v1162
        %v1263 = vadd.f32 %v845, %v1163
        %v1264 = vadd.f32 %v846, %v1164
        %v1265 = vadd.f32 %v847, %v1165
        %v1266 = vadd.f32 %v848, %v1166
        %v1267 = vadd.f32 %v849, %v1167
        %v1268 = vadd.f32 %v850, %v1168
        %v1269 = vadd.f32 %v851, %v1169
        %v1270 = vadd.f32 %v852, %v1170
        %v1271 = vadd.f32 %v853, %v1171
        %v1272 = vadd.f32 %v854, %v1172
        %v1273 = vadd.f32 %v855, %v1173
        %v1274 = vadd.f32 %v856, %v1174
        %v1275 = vadd.f32 %v857, %v1175
        %v1276 = vadd.f32 %v858, %v1176
        %v1277 = vadd.f32 %v859, %v1177
        %v1278 = vadd.f32 %v860, %v1178
        %v1279 = vadd.f32 %v861, %v1179
        %v1280 = vadd.f32 %v862, %v1180
        %v1281 = vadd.f32 %v863, %v1181
        %v1282 = vadd.f32 %v864, %v1182
        %v1283 = vadd.f32 %v865, %v1183
        %v1284 = vadd.f32 %v866, %v1184
        %v1285 = vadd.f32 %v867, %v1185
        %v1286 = vadd.f32 %v868, %v1186
        %v1287 = vadd.f32 %v869, %v1187
        %v1288 = vadd.f32 %v870, %v1188
        %v1289 = vadd.f32 %v871, %v1189
        %v1290 = vadd.f32 %v872, %v1190
        %v1291 = vadd.f32 %v873, %v1191
        %v1292 = vadd.f32 %v874, %v1192
        %v1293 = vadd.f32 %v875, %v1193
        %v1294 = vadd.f32 %v876, %v1194
        %v1295 = vadd.f32 %v877, %v1195
        %v1296 = vadd.f32 %v878, %v1196
        %1297 = vset.pattern.permute.xlu0 2
        %1298 = vperm.xlu0 %1297, %v459
        %v1299 = vpop.permute.xlu0 %1298
        %1301 = vset.pattern.permute.xlu0 2
        %1302 = vperm.xlu0 %1301, %v460
        %v1303 = vpop.permute.xlu0 %1302
        %1305 = vset.pattern.permute.xlu0 2
        %1306 = vperm.xlu0 %1305, %v461
        %v1307 = vpop.permute.xlu0 %1306
        %1309 = vset.pattern.permute.xlu0 2
        %1310 = vperm.xlu0 %1309, %v462
        %v1311 = vpop.permute.xlu0 %1310
        %1313 = vset.pattern.permute.xlu0 2
        %1314 = vperm.xlu0 %1313, %v463
        %v1315 = vpop.permute.xlu0 %1314
        %1317 = vset.pattern.permute.xlu0 2
        %1318 = vperm.xlu0 %1317, %v464
        %v1319 = vpop.permute.xlu0 %1318
        %1321 = vset.pattern.permute.xlu0 2
        %1322 = vperm.xlu0 %1321, %v465
        %v1323 = vpop.permute.xlu0 %1322
        %1325 = vset.pattern.permute.xlu0 2
        %1326 = vperm.xlu0 %1325, %v466
        %v1327 = vpop.permute.xlu0 %1326
        %1329 = vset.pattern.permute.xlu0 2
        %1330 = vperm.xlu0 %1329, %v467
        %v1331 = vpop.permute.xlu0 %1330
        %1333 = vset.pattern.permute.xlu0 2
        %1334 = vperm.xlu0 %1333, %v468
        %v1335 = vpop.permute.xlu0 %1334
        %1337 = vset.pattern.permute.xlu0 2
        %1338 = vperm.xlu0 %1337, %v469
        %v1339 = vpop.permute.xlu0 %1338
        %1341 = vset.pattern.permute.xlu0 2
        %1342 = vperm.xlu0 %1341, %v470
        %v1343 = vpop.permute.xlu0 %1342
        %1345 = vset.pattern.permute.xlu0 2
        %1346 = vperm.xlu0 %1345, %v471
        %v1347 = vpop.permute.xlu0 %1346
        %1349 = vset.pattern.permute.xlu0 2
        %1350 = vperm.xlu0 %1349, %v472
        %v1351 = vpop.permute.xlu0 %1350
        %1353 = vset.pattern.permute.xlu0 2
        %1354 = vperm.xlu0 %1353, %v473
        %v1355 = vpop.permute.xlu0 %1354
        %1357 = vset.pattern.permute.xlu0 2
        %1358 = vperm.xlu0 %1357, %v474
        %v1359 = vpop.permute.xlu0 %1358
        %1361 = vset.pattern.permute.xlu0 2
        %1362 = vperm.xlu0 %1361, %v475
        %v1363 = vpop.permute.xlu0 %1362
        %1365 = vset.pattern.permute.xlu0 2
        %1366 = vperm.xlu0 %1365, %v476
        %v1367 = vpop.permute.xlu0 %1366
        %1369 = vset.pattern.permute.xlu0 2
        %1370 = vperm.xlu0 %1369, %v477
        %v1371 = vpop.permute.xlu0 %1370
        %1373 = vset.pattern.permute.xlu0 2
        %1374 = vperm.xlu0 %1373, %v478
        %v1375 = vpop.permute.xlu0 %1374
        %1377 = vset.pattern.permute.xlu0 2
        %1378 = vperm.xlu0 %1377, %v479
        %v1379 = vpop.permute.xlu0 %1378
        %1381 = vset.pattern.permute.xlu0 2
        %1382 = vperm.xlu0 %1381, %v480
        %v1383 = vpop.permute.xlu0 %1382
        %1385 = vset.pattern.permute.xlu0 2
        %1386 = vperm.xlu0 %1385, %v481
        %v1387 = vpop.permute.xlu0 %1386
        %1389 = vset.pattern.permute.xlu0 2
        %1390 = vperm.xlu0 %1389, %v482
        %v1391 = vpop.permute.xlu0 %1390
        %1393 = vset.pattern.permute.xlu0 2
        %1394 = vperm.xlu0 %1393, %v483
        %v1395 = vpop.permute.xlu0 %1394
        %1397 = vset.pattern.permute.xlu0 2
        %1398 = vperm.xlu0 %1397, %v484
        %v1399 = vpop.permute.xlu0 %1398
        %1401 = vset.pattern.permute.xlu0 2
        %1402 = vperm.xlu0 %1401, %v485
        %v1403 = vpop.permute.xlu0 %1402
        %1405 = vset.pattern.permute.xlu0 2
        %1406 = vperm.xlu0 %1405, %v486
        %v1407 = vpop.permute.xlu0 %1406
        %1409 = vset.pattern.permute.xlu0 2
        %1410 = vperm.xlu0 %1409, %v487
        %v1411 = vpop.permute.xlu0 %1410
        %1413 = vset.pattern.permute.xlu0 2
        %1414 = vperm.xlu0 %1413, %v488
        %v1415 = vpop.permute.xlu0 %1414
        %1417 = vset.pattern.permute.xlu0 2
        %1418 = vperm.xlu0 %1417, %v489
        %v1419 = vpop.permute.xlu0 %1418
        %1421 = vset.pattern.permute.xlu0 2
        %1422 = vperm.xlu0 %1421, %v490
        %v1423 = vpop.permute.xlu0 %1422
        %1425 = vset.pattern.permute.xlu0 2
        %1426 = vperm.xlu0 %1425, %v491
        %v1427 = vpop.permute.xlu0 %1426
        %1429 = vset.pattern.permute.xlu0 2
        %1430 = vperm.xlu0 %1429, %v492
        %v1431 = vpop.permute.xlu0 %1430
        %1433 = vset.pattern.permute.xlu0 2
        %1434 = vperm.xlu0 %1433, %v493
        %v1435 = vpop.permute.xlu0 %1434
        %1437 = vset.pattern.permute.xlu0 2
        %1438 = vperm.xlu0 %1437, %v494
        %v1439 = vpop.permute.xlu0 %1438
        %1441 = vset.pattern.permute.xlu0 2
        %1442 = vperm.xlu0 %1441, %v495
        %v1443 = vpop.permute.xlu0 %1442
        %1445 = vset.pattern.permute.xlu0 2
        %1446 = vperm.xlu0 %1445, %v496
        %v1447 = vpop.permute.xlu0 %1446
        %1449 = vset.pattern.permute.xlu0 2
        %1450 = vperm.xlu0 %1449, %v497
        %v1451 = vpop.permute.xlu0 %1450
        %1453 = vset.pattern.permute.xlu0 2
        %1454 = vperm.xlu0 %1453, %v498
        %v1455 = vpop.permute.xlu0 %1454
        %1457 = vset.pattern.permute.xlu0 2
        %1458 = vperm.xlu0 %1457, %v499
        %v1459 = vpop.permute.xlu0 %1458
        %1461 = vset.pattern.permute.xlu0 2
        %1462 = vperm.xlu0 %1461, %v500
        %v1463 = vpop.permute.xlu0 %1462
        %1465 = vset.pattern.permute.xlu0 2
        %1466 = vperm.xlu0 %1465, %v501
        %v1467 = vpop.permute.xlu0 %1466
        %1469 = vset.pattern.permute.xlu0 2
        %1470 = vperm.xlu0 %1469, %v502
        %v1471 = vpop.permute.xlu0 %1470
        %1473 = vset.pattern.permute.xlu0 2
        %1474 = vperm.xlu0 %1473, %v503
        %v1475 = vpop.permute.xlu0 %1474
        %1477 = vset.pattern.permute.xlu0 2
        %1478 = vperm.xlu0 %1477, %v504
        %v1479 = vpop.permute.xlu0 %1478
        %1481 = vset.pattern.permute.xlu0 2
        %1482 = vperm.xlu0 %1481, %v505
        %v1483 = vpop.permute.xlu0 %1482
        %1485 = vset.pattern.permute.xlu0 2
        %1486 = vperm.xlu0 %1485, %v506
        %v1487 = vpop.permute.xlu0 %1486
        %1489 = vset.pattern.permute.xlu0 2
        %1490 = vperm.xlu0 %1489, %v507
        %v1491 = vpop.permute.xlu0 %1490
        %1493 = vset.pattern.permute.xlu0 2
        %1494 = vperm.xlu0 %1493, %v508
        %v1495 = vpop.permute.xlu0 %1494
        %v1497 = vlaneseq
        %v1498 = vshrl.u32 %v1497, 7
        %v1499 = vsub.s32 2, %v1498
        %v1500 = vrot.slane %v509, %v1499
        %v1501 = vlaneseq
        %v1502 = vshrl.u32 %v1501, 7
        %v1503 = vsub.s32 6, %v1502
        %v1504 = vrot.slane %v509, %v1503
        %v1507 = vlaneseq
        %v1508 = vshrl.u32 %v1507, 7
        %v1509 = vsub.s32 2, %v1508
        %v1510 = vrot.slane %v1500, %v1509
        %v1511 = vlaneseq
        %v1512 = vshrl.u32 %v1511, 7
        %v1513 = vsub.s32 2, %v1512
        %v1514 = vrot.slane %v1504, %v1513
        %v1515 = vmul.f32 %v1299, %v1510
        %v1516 = vmul.f32 %v1299, %v1514
        %v1517 = vmul.f32 %v1303, %v1510
        %v1518 = vmul.f32 %v1303, %v1514
        %v1519 = vmul.f32 %v1307, %v1510
        %v1520 = vmul.f32 %v1307, %v1514
        %v1521 = vmul.f32 %v1311, %v1510
        %v1522 = vmul.f32 %v1311, %v1514
        %v1523 = vmul.f32 %v1315, %v1510
        %v1524 = vmul.f32 %v1315, %v1514
        %v1525 = vmul.f32 %v1319, %v1510
        %v1526 = vmul.f32 %v1319, %v1514
        %v1527 = vmul.f32 %v1323, %v1510
        %v1528 = vmul.f32 %v1323, %v1514
        %v1529 = vmul.f32 %v1327, %v1510
        %v1530 = vmul.f32 %v1327, %v1514
        %v1531 = vmul.f32 %v1331, %v1510
        %v1532 = vmul.f32 %v1331, %v1514
        %v1533 = vmul.f32 %v1335, %v1510
        %v1534 = vmul.f32 %v1335, %v1514
        %v1535 = vmul.f32 %v1339, %v1510
        %v1536 = vmul.f32 %v1339, %v1514
        %v1537 = vmul.f32 %v1343, %v1510
        %v1538 = vmul.f32 %v1343, %v1514
        %v1539 = vmul.f32 %v1347, %v1510
        %v1540 = vmul.f32 %v1347, %v1514
        %v1541 = vmul.f32 %v1351, %v1510
        %v1542 = vmul.f32 %v1351, %v1514
        %v1543 = vmul.f32 %v1355, %v1510
        %v1544 = vmul.f32 %v1355, %v1514
        %v1545 = vmul.f32 %v1359, %v1510
        %v1546 = vmul.f32 %v1359, %v1514
        %v1547 = vmul.f32 %v1363, %v1510
        %v1548 = vmul.f32 %v1363, %v1514
        %v1549 = vmul.f32 %v1367, %v1510
        %v1550 = vmul.f32 %v1367, %v1514
        %v1551 = vmul.f32 %v1371, %v1510
        %v1552 = vmul.f32 %v1371, %v1514
        %v1553 = vmul.f32 %v1375, %v1510
        %v1554 = vmul.f32 %v1375, %v1514
        %v1555 = vmul.f32 %v1379, %v1510
        %v1556 = vmul.f32 %v1379, %v1514
        %v1557 = vmul.f32 %v1383, %v1510
        %v1558 = vmul.f32 %v1383, %v1514
        %v1559 = vmul.f32 %v1387, %v1510
        %v1560 = vmul.f32 %v1387, %v1514
        %v1561 = vmul.f32 %v1391, %v1510
        %v1562 = vmul.f32 %v1391, %v1514
        %v1563 = vmul.f32 %v1395, %v1510
        %v1564 = vmul.f32 %v1395, %v1514
        %v1565 = vmul.f32 %v1399, %v1510
        %v1566 = vmul.f32 %v1399, %v1514
        %v1567 = vmul.f32 %v1403, %v1510
        %v1568 = vmul.f32 %v1403, %v1514
        %v1569 = vmul.f32 %v1407, %v1510
        %v1570 = vmul.f32 %v1407, %v1514
        %v1571 = vmul.f32 %v1411, %v1510
        %v1572 = vmul.f32 %v1411, %v1514
        %v1573 = vmul.f32 %v1415, %v1510
        %v1574 = vmul.f32 %v1415, %v1514
        %v1575 = vmul.f32 %v1419, %v1510
        %v1576 = vmul.f32 %v1419, %v1514
        %v1577 = vmul.f32 %v1423, %v1510
        %v1578 = vmul.f32 %v1423, %v1514
        %v1579 = vmul.f32 %v1427, %v1510
        %v1580 = vmul.f32 %v1427, %v1514
        %v1581 = vmul.f32 %v1431, %v1510
        %v1582 = vmul.f32 %v1431, %v1514
        %v1583 = vmul.f32 %v1435, %v1510
        %v1584 = vmul.f32 %v1435, %v1514
        %v1585 = vmul.f32 %v1439, %v1510
        %v1586 = vmul.f32 %v1439, %v1514
        %v1587 = vmul.f32 %v1443, %v1510
        %v1588 = vmul.f32 %v1443, %v1514
        %v1589 = vmul.f32 %v1447, %v1510
        %v1590 = vmul.f32 %v1447, %v1514
        %v1591 = vmul.f32 %v1451, %v1510
        %v1592 = vmul.f32 %v1451, %v1514
        %v1593 = vmul.f32 %v1455, %v1510
        %v1594 = vmul.f32 %v1455, %v1514
        %v1595 = vmul.f32 %v1459, %v1510
        %v1596 = vmul.f32 %v1459, %v1514
        %v1597 = vmul.f32 %v1463, %v1510
        %v1598 = vmul.f32 %v1463, %v1514
        %v1599 = vmul.f32 %v1467, %v1510
        %v1600 = vmul.f32 %v1467, %v1514
        %v1601 = vmul.f32 %v1471, %v1510
        %v1602 = vmul.f32 %v1471, %v1514
        %v1603 = vmul.f32 %v1475, %v1510
        %v1604 = vmul.f32 %v1475, %v1514
        %v1605 = vmul.f32 %v1479, %v1510
        %v1606 = vmul.f32 %v1479, %v1514
        %v1607 = vmul.f32 %v1483, %v1510
        %v1608 = vmul.f32 %v1483, %v1514
        %v1609 = vmul.f32 %v1487, %v1510
        %v1610 = vmul.f32 %v1487, %v1514
        %v1611 = vmul.f32 %v1491, %v1510
        %v1612 = vmul.f32 %v1491, %v1514
        %v1613 = vmul.f32 %v1495, %v1510
        %v1614 = vmul.f32 %v1495, %v1514
        %v1615 = vadd.f32 %v1197, %v1515
        %v1616 = vadd.f32 %v1198, %v1516
        %v1617 = vadd.f32 %v1199, %v1517
        %v1618 = vadd.f32 %v1200, %v1518
        %v1619 = vadd.f32 %v1201, %v1519
        %v1620 = vadd.f32 %v1202, %v1520
        %v1621 = vadd.f32 %v1203, %v1521
        %v1622 = vadd.f32 %v1204, %v1522
        %v1623 = vadd.f32 %v1205, %v1523
        %v1624 = vadd.f32 %v1206, %v1524
        %v1625 = vadd.f32 %v1207, %v1525
        %v1626 = vadd.f32 %v1208, %v1526
        %v1627 = vadd.f32 %v1209, %v1527
        %v1628 = vadd.f32 %v1210, %v1528
        %v1629 = vadd.f32 %v1211, %v1529
        %v1630 = vadd.f32 %v1212, %v1530
        %v1631 = vadd.f32 %v1213, %v1531
        %v1632 = vadd.f32 %v1214, %v1532
        %v1633 = vadd.f32 %v1215, %v1533
        %v1634 = vadd.f32 %v1216, %v1534
        %v1635 = vadd.f32 %v1217, %v1535
        %v1636 = vadd.f32 %v1218, %v1536
        %v1637 = vadd.f32 %v1219, %v1537
        %v1638 = vadd.f32 %v1220, %v1538
        %v1639 = vadd.f32 %v1221, %v1539
        %v1640 = vadd.f32 %v1222, %v1540
        %v1641 = vadd.f32 %v1223, %v1541
        %v1642 = vadd.f32 %v1224, %v1542
        %v1643 = vadd.f32 %v1225, %v1543
        %v1644 = vadd.f32 %v1226, %v1544
        %v1645 = vadd.f32 %v1227, %v1545
        %v1646 = vadd.f32 %v1228, %v1546
        %v1647 = vadd.f32 %v1229, %v1547
        %v1648 = vadd.f32 %v1230, %v1548
        %v1649 = vadd.f32 %v1231, %v1549
        %v1650 = vadd.f32 %v1232, %v1550
        %v1651 = vadd.f32 %v1233, %v1551
        %v1652 = vadd.f32 %v1234, %v1552
        %v1653 = vadd.f32 %v1235, %v1553
        %v1654 = vadd.f32 %v1236, %v1554
        %v1655 = vadd.f32 %v1237, %v1555
        %v1656 = vadd.f32 %v1238, %v1556
        %v1657 = vadd.f32 %v1239, %v1557
        %v1658 = vadd.f32 %v1240, %v1558
        %v1659 = vadd.f32 %v1241, %v1559
        %v1660 = vadd.f32 %v1242, %v1560
        %v1661 = vadd.f32 %v1243, %v1561
        %v1662 = vadd.f32 %v1244, %v1562
        %v1663 = vadd.f32 %v1245, %v1563
        %v1664 = vadd.f32 %v1246, %v1564
        %v1665 = vadd.f32 %v1247, %v1565
        %v1666 = vadd.f32 %v1248, %v1566
        %v1667 = vadd.f32 %v1249, %v1567
        %v1668 = vadd.f32 %v1250, %v1568
        %v1669 = vadd.f32 %v1251, %v1569
        %v1670 = vadd.f32 %v1252, %v1570
        %v1671 = vadd.f32 %v1253, %v1571
        %v1672 = vadd.f32 %v1254, %v1572
        %v1673 = vadd.f32 %v1255, %v1573
        %v1674 = vadd.f32 %v1256, %v1574
        %v1675 = vadd.f32 %v1257, %v1575
        %v1676 = vadd.f32 %v1258, %v1576
        %v1677 = vadd.f32 %v1259, %v1577
        %v1678 = vadd.f32 %v1260, %v1578
        %v1679 = vadd.f32 %v1261, %v1579
        %v1680 = vadd.f32 %v1262, %v1580
        %v1681 = vadd.f32 %v1263, %v1581
        %v1682 = vadd.f32 %v1264, %v1582
        %v1683 = vadd.f32 %v1265, %v1583
        %v1684 = vadd.f32 %v1266, %v1584
        %v1685 = vadd.f32 %v1267, %v1585
        %v1686 = vadd.f32 %v1268, %v1586
        %v1687 = vadd.f32 %v1269, %v1587
        %v1688 = vadd.f32 %v1270, %v1588
        %v1689 = vadd.f32 %v1271, %v1589
        %v1690 = vadd.f32 %v1272, %v1590
        %v1691 = vadd.f32 %v1273, %v1591
        %v1692 = vadd.f32 %v1274, %v1592
        %v1693 = vadd.f32 %v1275, %v1593
        %v1694 = vadd.f32 %v1276, %v1594
        %v1695 = vadd.f32 %v1277, %v1595
        %v1696 = vadd.f32 %v1278, %v1596
        %v1697 = vadd.f32 %v1279, %v1597
        %v1698 = vadd.f32 %v1280, %v1598
        %v1699 = vadd.f32 %v1281, %v1599
        %v1700 = vadd.f32 %v1282, %v1600
        %v1701 = vadd.f32 %v1283, %v1601
        %v1702 = vadd.f32 %v1284, %v1602
        %v1703 = vadd.f32 %v1285, %v1603
        %v1704 = vadd.f32 %v1286, %v1604
        %v1705 = vadd.f32 %v1287, %v1605
        %v1706 = vadd.f32 %v1288, %v1606
        %v1707 = vadd.f32 %v1289, %v1607
        %v1708 = vadd.f32 %v1290, %v1608
        %v1709 = vadd.f32 %v1291, %v1609
        %v1710 = vadd.f32 %v1292, %v1610
        %v1711 = vadd.f32 %v1293, %v1611
        %v1712 = vadd.f32 %v1294, %v1612
        %v1713 = vadd.f32 %v1295, %v1613
        %v1714 = vadd.f32 %v1296, %v1614
        %v1715 = vld [vmem:[%s3] sm:$0x3]
        %v1717 = vlaneseq
        %v1718 = vshrl.u32 %v1717, 7
        %v1719 = vsub.s32 0, %v1718
        %v1720 = vrot.slane %v1715, %v1719
        %v1721 = vlaneseq
        %v1722 = vshrl.u32 %v1721, 7
        %v1723 = vsub.s32 1, %v1722
        %v1724 = vrot.slane %v1715, %v1723
        %v1727 = vadd.f32 %v1615, %v1720
        %v1728 = vadd.f32 %v1616, %v1724
        %v1729 = vadd.f32 %v1617, %v1720
        %v1730 = vadd.f32 %v1618, %v1724
        %v1731 = vadd.f32 %v1619, %v1720
        %v1732 = vadd.f32 %v1620, %v1724
        %v1733 = vadd.f32 %v1621, %v1720
        %v1734 = vadd.f32 %v1622, %v1724
        %v1735 = vadd.f32 %v1623, %v1720
        %v1736 = vadd.f32 %v1624, %v1724
        %v1737 = vadd.f32 %v1625, %v1720
        %v1738 = vadd.f32 %v1626, %v1724
        %v1739 = vadd.f32 %v1627, %v1720
        %v1740 = vadd.f32 %v1628, %v1724
        %v1741 = vadd.f32 %v1629, %v1720
        %v1742 = vadd.f32 %v1630, %v1724
        %v1743 = vadd.f32 %v1631, %v1720
        %v1744 = vadd.f32 %v1632, %v1724
        %v1745 = vadd.f32 %v1633, %v1720
        %v1746 = vadd.f32 %v1634, %v1724
        %v1747 = vadd.f32 %v1635, %v1720
        %v1748 = vadd.f32 %v1636, %v1724
        %v1749 = vadd.f32 %v1637, %v1720
        %v1750 = vadd.f32 %v1638, %v1724
        %v1751 = vadd.f32 %v1639, %v1720
        %v1752 = vadd.f32 %v1640, %v1724
        %v1753 = vadd.f32 %v1641, %v1720
        %v1754 = vadd.f32 %v1642, %v1724
        %v1755 = vadd.f32 %v1643, %v1720
        %v1756 = vadd.f32 %v1644, %v1724
        %v1757 = vadd.f32 %v1645, %v1720
        %v1758 = vadd.f32 %v1646, %v1724
        %v1759 = vadd.f32 %v1647, %v1720
        %v1760 = vadd.f32 %v1648, %v1724
        %v1761 = vadd.f32 %v1649, %v1720
        %v1762 = vadd.f32 %v1650, %v1724
        %v1763 = vadd.f32 %v1651, %v1720
        %v1764 = vadd.f32 %v1652, %v1724
        %v1765 = vadd.f32 %v1653, %v1720
        %v1766 = vadd.f32 %v1654, %v1724
        %v1767 = vadd.f32 %v1655, %v1720
        %v1768 = vadd.f32 %v1656, %v1724
        %v1769 = vadd.f32 %v1657, %v1720
        %v1770 = vadd.f32 %v1658, %v1724
        %v1771 = vadd.f32 %v1659, %v1720
        %v1772 = vadd.f32 %v1660, %v1724
        %v1773 = vadd.f32 %v1661, %v1720
        %v1774 = vadd.f32 %v1662, %v1724
        %v1775 = vadd.f32 %v1663, %v1720
        %v1776 = vadd.f32 %v1664, %v1724
        %v1777 = vadd.f32 %v1665, %v1720
        %v1778 = vadd.f32 %v1666, %v1724
        %v1779 = vadd.f32 %v1667, %v1720
        %v1780 = vadd.f32 %v1668, %v1724
        %v1781 = vadd.f32 %v1669, %v1720
        %v1782 = vadd.f32 %v1670, %v1724
        %v1783 = vadd.f32 %v1671, %v1720
        %v1784 = vadd.f32 %v1672, %v1724
        %v1785 = vadd.f32 %v1673, %v1720
        %v1786 = vadd.f32 %v1674, %v1724
        %v1787 = vadd.f32 %v1675, %v1720
        %v1788 = vadd.f32 %v1676, %v1724
        %v1789 = vadd.f32 %v1677, %v1720
        %v1790 = vadd.f32 %v1678, %v1724
        %v1791 = vadd.f32 %v1679, %v1720
        %v1792 = vadd.f32 %v1680, %v1724
        %v1793 = vadd.f32 %v1681, %v1720
        %v1794 = vadd.f32 %v1682, %v1724
        %v1795 = vadd.f32 %v1683, %v1720
        %v1796 = vadd.f32 %v1684, %v1724
        %v1797 = vadd.f32 %v1685, %v1720
        %v1798 = vadd.f32 %v1686, %v1724
        %v1799 = vadd.f32 %v1687, %v1720
        %v1800 = vadd.f32 %v1688, %v1724
        %v1801 = vadd.f32 %v1689, %v1720
        %v1802 = vadd.f32 %v1690, %v1724
        %v1803 = vadd.f32 %v1691, %v1720
        %v1804 = vadd.f32 %v1692, %v1724
        %v1805 = vadd.f32 %v1693, %v1720
        %v1806 = vadd.f32 %v1694, %v1724
        %v1807 = vadd.f32 %v1695, %v1720
        %v1808 = vadd.f32 %v1696, %v1724
        %v1809 = vadd.f32 %v1697, %v1720
        %v1810 = vadd.f32 %v1698, %v1724
        %v1811 = vadd.f32 %v1699, %v1720
        %v1812 = vadd.f32 %v1700, %v1724
        %v1813 = vadd.f32 %v1701, %v1720
        %v1814 = vadd.f32 %v1702, %v1724
        %v1815 = vadd.f32 %v1703, %v1720
        %v1816 = vadd.f32 %v1704, %v1724
        %v1817 = vadd.f32 %v1705, %v1720
        %v1818 = vadd.f32 %v1706, %v1724
        %v1819 = vadd.f32 %v1707, %v1720
        %v1820 = vadd.f32 %v1708, %v1724
        %v1821 = vadd.f32 %v1709, %v1720
        %v1822 = vadd.f32 %v1710, %v1724
        %v1823 = vadd.f32 %v1711, %v1720
        %v1824 = vadd.f32 %v1712, %v1724
        %v1825 = vadd.f32 %v1713, %v1720
        %v1826 = vadd.f32 %v1714, %v1724
        %v1827 = vld [vmem:[%s400] sm:$0xff]
        %v1828 = vld [vmem:[%s400 + $0x8] sm:$0xff]
        %v1829 = vld [vmem:[%s400 + $0x10] sm:$0xff]
        %v1830 = vld [vmem:[%s400 + $0x18] sm:$0xff]
        %v1831 = vld [vmem:[%s400 + $0x20] sm:$0xff]
        %v1832 = vld [vmem:[%s400 + $0x28] sm:$0xff]
        %v1833 = vld [vmem:[%s400 + $0x30] sm:$0xff]
        %v1834 = vld [vmem:[%s400 + $0x38] sm:$0xff]
        %v1835 = vld [vmem:[%s400 + $0x40] sm:$0xff]
        %v1836 = vld [vmem:[%s400 + $0x48] sm:$0xff]
        %v1837 = vld [vmem:[%s400 + $0x50] sm:$0xff]
        %v1838 = vld [vmem:[%s400 + $0x58] sm:$0xff]
        %v1839 = vld [vmem:[%s400 + $0x60] sm:$0xff]
        %v1840 = vld [vmem:[%s400 + $0x68] sm:$0xff]
        %v1841 = vld [vmem:[%s400 + $0x70] sm:$0xff]
        %v1842 = vld [vmem:[%s400 + $0x78] sm:$0xff]
        %v1843 = vld [vmem:[%s400 + $0x80] sm:$0xff]
        %v1844 = vld [vmem:[%s400 + $0x88] sm:$0xff]
        %v1845 = vld [vmem:[%s400 + $0x90] sm:$0xff]
        %v1846 = vld [vmem:[%s400 + $0x98] sm:$0xff]
        %v1847 = vld [vmem:[%s400 + $0xa0] sm:$0xff]
        %v1848 = vld [vmem:[%s400 + $0xa8] sm:$0xff]
        %v1849 = vld [vmem:[%s400 + $0xb0] sm:$0xff]
        %v1850 = vld [vmem:[%s400 + $0xb8] sm:$0xff]
        %v1851 = vld [vmem:[%s400 + $0xc0] sm:$0xff]
        %v1852 = vld [vmem:[%s400 + $0xc8] sm:$0xff]
        %v1853 = vld [vmem:[%s400 + $0xd0] sm:$0xff]
        %v1854 = vld [vmem:[%s400 + $0xd8] sm:$0xff]
        %v1855 = vld [vmem:[%s400 + $0xe0] sm:$0xff]
        %v1856 = vld [vmem:[%s400 + $0xe8] sm:$0xff]
        %v1857 = vld [vmem:[%s400 + $0xf0] sm:$0xff]
        %v1858 = vld [vmem:[%s400 + $0xf8] sm:$0xff]
        %v1859 = vld [vmem:[%s400 + $0x100] sm:$0xff]
        %v1860 = vld [vmem:[%s400 + $0x108] sm:$0xff]
        %v1861 = vld [vmem:[%s400 + $0x110] sm:$0xff]
        %v1862 = vld [vmem:[%s400 + $0x118] sm:$0xff]
        %v1863 = vld [vmem:[%s400 + $0x120] sm:$0xff]
        %v1864 = vld [vmem:[%s400 + $0x128] sm:$0xff]
        %v1865 = vld [vmem:[%s400 + $0x130] sm:$0xff]
        %v1866 = vld [vmem:[%s400 + $0x138] sm:$0xff]
        %v1867 = vld [vmem:[%s400 + $0x140] sm:$0xff]
        %v1868 = vld [vmem:[%s400 + $0x148] sm:$0xff]
        %v1869 = vld [vmem:[%s400 + $0x150] sm:$0xff]
        %v1870 = vld [vmem:[%s400 + $0x158] sm:$0xff]
        %v1871 = vld [vmem:[%s400 + $0x160] sm:$0xff]
        %v1872 = vld [vmem:[%s400 + $0x168] sm:$0xff]
        %v1873 = vld [vmem:[%s400 + $0x170] sm:$0xff]
        %v1874 = vld [vmem:[%s400 + $0x178] sm:$0xff]
        %v1875 = vld [vmem:[%s400 + $0x180] sm:$0xff]
        %v1876 = vld [vmem:[%s400 + $0x188] sm:$0xff]
        %v1877 = vld [vmem:[%s400 + $0x190] sm:$0xff]
        %v1878 = vld [vmem:[%s400 + $0x198] sm:$0xff]
        %v1879 = vld [vmem:[%s400 + $0x1a0] sm:$0xff]
        %v1880 = vld [vmem:[%s400 + $0x1a8] sm:$0xff]
        %v1881 = vld [vmem:[%s400 + $0x1b0] sm:$0xff]
        %v1882 = vld [vmem:[%s400 + $0x1b8] sm:$0xff]
        %v1883 = vld [vmem:[%s400 + $0x1c0] sm:$0xff]
        %v1884 = vld [vmem:[%s400 + $0x1c8] sm:$0xff]
        %v1885 = vld [vmem:[%s400 + $0x1d0] sm:$0xff]
        %v1886 = vld [vmem:[%s400 + $0x1d8] sm:$0xff]
        %v1887 = vld [vmem:[%s400 + $0x1e0] sm:$0xff]
        %v1888 = vld [vmem:[%s400 + $0x1e8] sm:$0xff]
        %v1889 = vld [vmem:[%s400 + $0x1f0] sm:$0xff]
        %v1890 = vld [vmem:[%s400 + $0x1f8] sm:$0xff]
        %v1891 = vld [vmem:[%s400 + $0x200] sm:$0xff]
        %v1892 = vld [vmem:[%s400 + $0x208] sm:$0xff]
        %v1893 = vld [vmem:[%s400 + $0x210] sm:$0xff]
        %v1894 = vld [vmem:[%s400 + $0x218] sm:$0xff]
        %v1895 = vld [vmem:[%s400 + $0x220] sm:$0xff]
        %v1896 = vld [vmem:[%s400 + $0x228] sm:$0xff]
        %v1897 = vld [vmem:[%s400 + $0x230] sm:$0xff]
        %v1898 = vld [vmem:[%s400 + $0x238] sm:$0xff]
        %v1899 = vld [vmem:[%s400 + $0x240] sm:$0xff]
        %v1900 = vld [vmem:[%s400 + $0x248] sm:$0xff]
        %v1901 = vld [vmem:[%s400 + $0x250] sm:$0xff]
        %v1902 = vld [vmem:[%s400 + $0x258] sm:$0xff]
        %v1903 = vld [vmem:[%s400 + $0x260] sm:$0xff]
        %v1904 = vld [vmem:[%s400 + $0x268] sm:$0xff]
        %v1905 = vld [vmem:[%s400 + $0x270] sm:$0xff]
        %v1906 = vld [vmem:[%s400 + $0x278] sm:$0xff]
        %v1907 = vld [vmem:[%s400 + $0x280] sm:$0xff]
        %v1908 = vld [vmem:[%s400 + $0x288] sm:$0xff]
        %v1909 = vld [vmem:[%s400 + $0x290] sm:$0xff]
        %v1910 = vld [vmem:[%s400 + $0x298] sm:$0xff]
        %v1911 = vld [vmem:[%s400 + $0x2a0] sm:$0xff]
        %v1912 = vld [vmem:[%s400 + $0x2a8] sm:$0xff]
        %v1913 = vld [vmem:[%s400 + $0x2b0] sm:$0xff]
        %v1914 = vld [vmem:[%s400 + $0x2b8] sm:$0xff]
        %v1915 = vld [vmem:[%s400 + $0x2c0] sm:$0xff]
        %v1916 = vld [vmem:[%s400 + $0x2c8] sm:$0xff]
        %v1917 = vld [vmem:[%s400 + $0x2d0] sm:$0xff]
        %v1918 = vld [vmem:[%s400 + $0x2d8] sm:$0xff]
        %v1919 = vld [vmem:[%s400 + $0x2e0] sm:$0xff]
        %v1920 = vld [vmem:[%s400 + $0x2e8] sm:$0xff]
        %v1921 = vld [vmem:[%s400 + $0x2f0] sm:$0xff]
        %v1922 = vld [vmem:[%s400 + $0x2f8] sm:$0xff]
        %v1923 = vld [vmem:[%s400 + $0x300] sm:$0xff]
        %v1924 = vld [vmem:[%s400 + $0x308] sm:$0xff]
        %v1925 = vld [vmem:[%s400 + $0x310] sm:$0xff]
        %v1926 = vld [vmem:[%s400 + $0x318] sm:$0xff]
        %v1927 = vadd.f32 %v1827, %v1727
        %v1928 = vadd.f32 %v1828, %v1728
        %v1929 = vadd.f32 %v1829, %v1729
        %v1930 = vadd.f32 %v1830, %v1730
        %v1931 = vadd.f32 %v1831, %v1731
        %v1932 = vadd.f32 %v1832, %v1732
        %v1933 = vadd.f32 %v1833, %v1733
        %v1934 = vadd.f32 %v1834, %v1734
        %v1935 = vadd.f32 %v1835, %v1735
        %v1936 = vadd.f32 %v1836, %v1736
        %v1937 = vadd.f32 %v1837, %v1737
        %v1938 = vadd.f32 %v1838, %v1738
        %v1939 = vadd.f32 %v1839, %v1739
        %v1940 = vadd.f32 %v1840, %v1740
        %v1941 = vadd.f32 %v1841, %v1741
        %v1942 = vadd.f32 %v1842, %v1742
        %v1943 = vadd.f32 %v1843, %v1743
        %v1944 = vadd.f32 %v1844, %v1744
        %v1945 = vadd.f32 %v1845, %v1745
        %v1946 = vadd.f32 %v1846, %v1746
        %v1947 = vadd.f32 %v1847, %v1747
        %v1948 = vadd.f32 %v1848, %v1748
        %v1949 = vadd.f32 %v1849, %v1749
        %v1950 = vadd.f32 %v1850, %v1750
        %v1951 = vadd.f32 %v1851, %v1751
        %v1952 = vadd.f32 %v1852, %v1752
        %v1953 = vadd.f32 %v1853, %v1753
        %v1954 = vadd.f32 %v1854, %v1754
        %v1955 = vadd.f32 %v1855, %v1755
        %v1956 = vadd.f32 %v1856, %v1756
        %v1957 = vadd.f32 %v1857, %v1757
        %v1958 = vadd.f32 %v1858, %v1758
        %v1959 = vadd.f32 %v1859, %v1759
        %v1960 = vadd.f32 %v1860, %v1760
        %v1961 = vadd.f32 %v1861, %v1761
        %v1962 = vadd.f32 %v1862, %v1762
        %v1963 = vadd.f32 %v1863, %v1763
        %v1964 = vadd.f32 %v1864, %v1764
        %v1965 = vadd.f32 %v1865, %v1765
        %v1966 = vadd.f32 %v1866, %v1766
        %v1967 = vadd.f32 %v1867, %v1767
        %v1968 = vadd.f32 %v1868, %v1768
        %v1969 = vadd.f32 %v1869, %v1769
        %v1970 = vadd.f32 %v1870, %v1770
        %v1971 = vadd.f32 %v1871, %v1771
        %v1972 = vadd.f32 %v1872, %v1772
        %v1973 = vadd.f32 %v1873, %v1773
        %v1974 = vadd.f32 %v1874, %v1774
        %v1975 = vadd.f32 %v1875, %v1775
        %v1976 = vadd.f32 %v1876, %v1776
        %v1977 = vadd.f32 %v1877, %v1777
        %v1978 = vadd.f32 %v1878, %v1778
        %v1979 = vadd.f32 %v1879, %v1779
        %v1980 = vadd.f32 %v1880, %v1780
        %v1981 = vadd.f32 %v1881, %v1781
        %v1982 = vadd.f32 %v1882, %v1782
        %v1983 = vadd.f32 %v1883, %v1783
        %v1984 = vadd.f32 %v1884, %v1784
        %v1985 = vadd.f32 %v1885, %v1785
        %v1986 = vadd.f32 %v1886, %v1786
        %v1987 = vadd.f32 %v1887, %v1787
        %v1988 = vadd.f32 %v1888, %v1788
        %v1989 = vadd.f32 %v1889, %v1789
        %v1990 = vadd.f32 %v1890, %v1790
        %v1991 = vadd.f32 %v1891, %v1791
        %v1992 = vadd.f32 %v1892, %v1792
        %v1993 = vadd.f32 %v1893, %v1793
        %v1994 = vadd.f32 %v1894, %v1794
        %v1995 = vadd.f32 %v1895, %v1795
        %v1996 = vadd.f32 %v1896, %v1796
        %v1997 = vadd.f32 %v1897, %v1797
        %v1998 = vadd.f32 %v1898, %v1798
        %v1999 = vadd.f32 %v1899, %v1799
        %v2000 = vadd.f32 %v1900, %v1800
        %v2001 = vadd.f32 %v1901, %v1801
        %v2002 = vadd.f32 %v1902, %v1802
        %v2003 = vadd.f32 %v1903, %v1803
        %v2004 = vadd.f32 %v1904, %v1804
        %v2005 = vadd.f32 %v1905, %v1805
        %v2006 = vadd.f32 %v1906, %v1806
        %v2007 = vadd.f32 %v1907, %v1807
        %v2008 = vadd.f32 %v1908, %v1808
        %v2009 = vadd.f32 %v1909, %v1809
        %v2010 = vadd.f32 %v1910, %v1810
        %v2011 = vadd.f32 %v1911, %v1811
        %v2012 = vadd.f32 %v1912, %v1812
        %v2013 = vadd.f32 %v1913, %v1813
        %v2014 = vadd.f32 %v1914, %v1814
        %v2015 = vadd.f32 %v1915, %v1815
        %v2016 = vadd.f32 %v1916, %v1816
        %v2017 = vadd.f32 %v1917, %v1817
        %v2018 = vadd.f32 %v1918, %v1818
        %v2019 = vadd.f32 %v1919, %v1819
        %v2020 = vadd.f32 %v1920, %v1820
        %v2021 = vadd.f32 %v1921, %v1821
        %v2022 = vadd.f32 %v1922, %v1822
        %v2023 = vadd.f32 %v1923, %v1823
        %v2024 = vadd.f32 %v1924, %v1824
        %v2025 = vadd.f32 %v1925, %v1825
        %v2026 = vadd.f32 %v1926, %v1826
        %v2027 = vld [vmem:[%s4] sm:$0xff]
        %v2028 = vld [vmem:[%s4 + $0x8] sm:$0xff]
        %v2029 = vld [vmem:[%s4 + $0x10] sm:$0xff]
        %v2030 = vld [vmem:[%s4 + $0x18] sm:$0xff]
        %v2031 = vld [vmem:[%s4 + $0x20] sm:$0xff]
        %v2032 = vld [vmem:[%s4 + $0x28] sm:$0xff]
        %v2033 = vld [vmem:[%s4 + $0x30] sm:$0xff]
        %v2034 = vld [vmem:[%s4 + $0x38] sm:$0xff]
        %v2035 = vld [vmem:[%s4 + $0x40] sm:$0xff]
        %v2036 = vld [vmem:[%s4 + $0x48] sm:$0xff]
        %v2037 = vld [vmem:[%s4 + $0x50] sm:$0xff]
        %v2038 = vld [vmem:[%s4 + $0x58] sm:$0xff]
        %v2039 = vld [vmem:[%s4 + $0x60] sm:$0xff]
        %v2040 = vld [vmem:[%s4 + $0x68] sm:$0xff]
        %v2041 = vld [vmem:[%s4 + $0x70] sm:$0xff]
        %v2042 = vld [vmem:[%s4 + $0x78] sm:$0xff]
        %v2043 = vld [vmem:[%s4 + $0x80] sm:$0xff]
        %v2044 = vld [vmem:[%s4 + $0x88] sm:$0xff]
        %v2045 = vld [vmem:[%s4 + $0x90] sm:$0xff]
        %v2046 = vld [vmem:[%s4 + $0x98] sm:$0xff]
        %v2047 = vld [vmem:[%s4 + $0xa0] sm:$0xff]
        %v2048 = vld [vmem:[%s4 + $0xa8] sm:$0xff]
        %v2049 = vld [vmem:[%s4 + $0xb0] sm:$0xff]
        %v2050 = vld [vmem:[%s4 + $0xb8] sm:$0xff]
        %v2051 = vld [vmem:[%s4 + $0xc0] sm:$0xff]
        %v2052 = vld [vmem:[%s4 + $0xc8] sm:$0xff]
        %v2053 = vld [vmem:[%s4 + $0xd0] sm:$0xff]
        %v2054 = vld [vmem:[%s4 + $0xd8] sm:$0xff]
        %v2055 = vld [vmem:[%s4 + $0xe0] sm:$0xff]
        %v2056 = vld [vmem:[%s4 + $0xe8] sm:$0xff]
        %v2057 = vld [vmem:[%s4 + $0xf0] sm:$0xff]
        %v2058 = vld [vmem:[%s4 + $0xf8] sm:$0xff]
        %v2059 = vld [vmem:[%s5] sm:$0x1]
        %v2061 = vlaneseq
        %v2062 = vshrl.u32 %v2061, 7
        %v2063 = vsub.s32 0, %v2062
        %v2064 = vrot.slane %v2059, %v2063
        %2066 = vmatprep.subr.mxu0 0.0
        %2067 = vmatpush1.msra.mxu0 %v2027
        %2068 = vmatprep.subr.mxu0 0.0
        %2069 = vmatpush1.msra.mxu0 %v2028
        %2070 = vmatprep.subr.mxu0 0.0
        %2071 = vmatpush1.msra.mxu0 %v2029
        %2072 = vmatprep.subr.mxu0 0.0
        %2073 = vmatpush1.msra.mxu0 %v2030
        %2074 = vmatprep.subr.mxu0 0.0
        %2075 = vmatpush1.msra.mxu0 %v2031
        %2076 = vmatprep.subr.mxu0 0.0
        %2077 = vmatpush1.msra.mxu0 %v2032
        %2078 = vmatprep.subr.mxu0 0.0
        %2079 = vmatpush1.msra.mxu0 %v2033
        %2080 = vmatprep.subr.mxu0 0.0
        %2081 = vmatpush1.msra.mxu0 %v2034
        %2082 = vmatprep.subr.mxu0 0.0
        %2083 = vmatpush1.msra.mxu0 %v2035
        %2084 = vmatprep.subr.mxu0 0.0
        %2085 = vmatpush1.msra.mxu0 %v2036
        %2086 = vmatprep.subr.mxu0 0.0
        %2087 = vmatpush1.msra.mxu0 %v2037
        %2088 = vmatprep.subr.mxu0 0.0
        %2089 = vmatpush1.msra.mxu0 %v2038
        %2090 = vmatprep.subr.mxu0 0.0
        %2091 = vmatpush1.msra.mxu0 %v2039
        %2092 = vmatprep.subr.mxu0 0.0
        %2093 = vmatpush1.msra.mxu0 %v2040
        %2094 = vmatprep.subr.mxu0 0.0
        %2095 = vmatpush1.msra.mxu0 %v2041
        %2096 = vmatprep.subr.mxu0 0.0
        %2097 = vmatpush1.msra.mxu0 %v2042
        %2098 = vmatprep.subr.mxu0 0.0
        %2099 = vmatpush1.msra.mxu0 %v2043
        %2100 = vmatprep.subr.mxu0 0.0
        %2101 = vmatpush1.msra.mxu0 %v2044
        %2102 = vmatprep.subr.mxu0 0.0
        %2103 = vmatpush1.msra.mxu0 %v2045
        %2104 = vmatprep.subr.mxu0 0.0
        %2105 = vmatpush1.msra.mxu0 %v2046
        %2106 = vmatprep.subr.mxu0 0.0
        %2107 = vmatpush1.msra.mxu0 %v2047
        %2108 = vmatprep.subr.mxu0 0.0
        %2109 = vmatpush1.msra.mxu0 %v2048
        %2110 = vmatprep.subr.mxu0 0.0
        %2111 = vmatpush1.msra.mxu0 %v2049
        %2112 = vmatprep.subr.mxu0 0.0
        %2113 = vmatpush1.msra.mxu0 %v2050
        %2114 = vmatprep.subr.mxu0 0.0
        %2115 = vmatpush1.msra.mxu0 %v2051
        %2116 = vmatprep.subr.mxu0 0.0
        %2117 = vmatpush1.msra.mxu0 %v2052
        %2118 = vmatprep.subr.mxu0 0.0
        %2119 = vmatpush1.msra.mxu0 %v2053
        %2120 = vmatprep.subr.mxu0 0.0
        %2121 = vmatpush1.msra.mxu0 %v2054
        %2122 = vmatprep.subr.mxu0 0.0
        %2123 = vmatpush1.msra.mxu0 %v2055
        %2124 = vmatprep.subr.mxu0 0.0
        %2125 = vmatpush1.msra.mxu0 %v2056
        %2126 = vmatprep.subr.mxu0 0.0
        %2127 = vmatpush1.msra.mxu0 %v2057
        %2128 = vmatprep.subr.mxu0 0.0
        %2129 = vmatpush1.msra.mxu0 %v2058
        %2130 = vmatprep.mubr.f32.mxu0 %v1928
        %2131 = vmatmul.mubr.f32.gmra.mrb[0].mxu0 %v1927
        %v2132 = vpop.f32.mrb[0].mxu0
        %v2133 = vadd.f32 %v2064, %v2132
        %v2134 = vpop.f32.mrb[0].mxu0
        %2135 = vmatprep.mubr.f32.mxu0 %v1930
        %2136 = vmatmul.mubr.f32.gmra.mrb[0].mxu0 %v1929
        %v2137 = vpop.f32.mrb[0].mxu0
        %v2138 = vadd.f32 %v2064, %v2137
        %v2139 = vpop.f32.mrb[0].mxu0
        %2140 = vmatprep.mubr.f32.mxu0 %v1932
        %2141 = vmatmul.mubr.f32.gmra.mrb[0].mxu0 %v1931
        %v2142 = vpop.f32.mrb[0].mxu0
        %v2143 = vadd.f32 %v2064, %v2142
        %v2144 = vpop.f32.mrb[0].mxu0
        %2145 = vmatprep.mubr.f32.mxu0 %v1934
        %2146 = vmatmul.mubr.f32.gmra.mrb[0].mxu0 %v1933
        %v2147 = vpop.f32.mrb[0].mxu0
        %v2148 = vadd.f32 %v2064, %v2147
        %v2149 = vpop.f32.mrb[0].mxu0
        %2150 = vmatprep.mubr.f32.mxu0 %v1936
        %2151 = vmatmul.mubr.f32.gmra.mrb[0].mxu0 %v1935
        %v2152 = vpop.f32.mrb[0].mxu0
        %v2153 = vadd.f32 %v2064, %v2152
        %v2154 = vpop.f32.mrb[0].mxu0
        %2155 = vmatprep.mubr.f32.mxu0 %v1938
        %2156 = vmatmul.mubr.f32.gmra.mrb[0].mxu0 %v1937
        %v2157 = vpop.f32.mrb[0].mxu0
        %v2158 = vadd.f32 %v2064, %v2157
        %v2159 = vpop.f32.mrb[0].mxu0
        %2160 = vmatprep.mubr.f32.mxu0 %v1940
        %2161 = vmatmul.mubr.f32.gmra.mrb[0].mxu0 %v1939
        %v2162 = vpop.f32.mrb[0].mxu0
        %v2163 = vadd.f32 %v2064, %v2162
        %v2164 = vpop.f32.mrb[0].mxu0
        %2165 = vmatprep.mubr.f32.mxu0 %v1942
        %2166 = vmatmul.mubr.f32.gmra.mrb[0].mxu0 %v1941
        %v2167 = vpop.f32.mrb[0].mxu0
        %v2168 = vadd.f32 %v2064, %v2167
        %v2169 = vpop.f32.mrb[0].mxu0
        %2170 = vmatprep.mubr.f32.mxu0 %v1944
        %2171 = vmatmul.mubr.f32.gmra.mrb[0].mxu0 %v1943
        %v2172 = vpop.f32.mrb[0].mxu0
        %v2173 = vadd.f32 %v2064, %v2172
        %v2174 = vpop.f32.mrb[0].mxu0
        %2175 = vmatprep.mubr.f32.mxu0 %v1946
        %2176 = vmatmul.mubr.f32.gmra.mrb[0].mxu0 %v1945
        %v2177 = vpop.f32.mrb[0].mxu0
        %v2178 = vadd.f32 %v2064, %v2177
        %v2179 = vpop.f32.mrb[0].mxu0
        %2180 = vmatprep.mubr.f32.mxu0 %v1948
        %2181 = vmatmul.mubr.f32.gmra.mrb[0].mxu0 %v1947
        %v2182 = vpop.f32.mrb[0].mxu0
        %v2183 = vadd.f32 %v2064, %v2182
        %v2184 = vpop.f32.mrb[0].mxu0
        %2185 = vmatprep.mubr.f32.mxu0 %v1950
        %2186 = vmatmul.mubr.f32.gmra.mrb[0].mxu0 %v1949
        %v2187 = vpop.f32.mrb[0].mxu0
        %v2188 = vadd.f32 %v2064, %v2187
        %v2189 = vpop.f32.mrb[0].mxu0
        %2190 = vmatprep.mubr.f32.mxu0 %v1952
        %2191 = vmatmul.mubr.f32.gmra.mrb[0].mxu0 %v1951
        %v2192 = vpop.f32.mrb[0].mxu0
        %v2193 = vadd.f32 %v2064, %v2192
        %v2194 = vpop.f32.mrb[0].mxu0
        %2195 = vmatprep.mubr.f32.mxu0 %v1954
        %2196 = vmatmul.mubr.f32.gmra.mrb[0].mxu0 %v1953
        %v2197 = vpop.f32.mrb[0].mxu0
        %v2198 = vadd.f32 %v2064, %v2197
        %v2199 = vpop.f32.mrb[0].mxu0
        %2200 = vmatprep.mubr.f32.mxu0 %v1956
        %2201 = vmatmul.mubr.f32.gmra.mrb[0].mxu0 %v1955
        %v2202 = vpop.f32.mrb[0].mxu0
        %v2203 = vadd.f32 %v2064, %v2202
        %v2204 = vpop.f32.mrb[0].mxu0
        %2205 = vmatprep.mubr.f32.mxu0 %v1958
        %2206 = vmatmul.mubr.f32.gmra.mrb[0].mxu0 %v1957
        %v2207 = vpop.f32.mrb[0].mxu0
        %v2208 = vadd.f32 %v2064, %v2207
        %v2209 = vpop.f32.mrb[0].mxu0
        %2210 = vmatprep.mubr.f32.mxu0 %v1960
        %2211 = vmatmul.mubr.f32.gmra.mrb[0].mxu0 %v1959
        %v2212 = vpop.f32.mrb[0].mxu0
        %v2213 = vadd.f32 %v2064, %v2212
        %v2214 = vpop.f32.mrb[0].mxu0
        %2215 = vmatprep.mubr.f32.mxu0 %v1962
        %2216 = vmatmul.mubr.f32.gmra.mrb[0].mxu0 %v1961
        %v2217 = vpop.f32.mrb[0].mxu0
        %v2218 = vadd.f32 %v2064, %v2217
        %v2219 = vpop.f32.mrb[0].mxu0
        %2220 = vmatprep.mubr.f32.mxu0 %v1964
        %2221 = vmatmul.mubr.f32.gmra.mrb[0].mxu0 %v1963
        %v2222 = vpop.f32.mrb[0].mxu0
        %v2223 = vadd.f32 %v2064, %v2222
        %v2224 = vpop.f32.mrb[0].mxu0
        %2225 = vmatprep.mubr.f32.mxu0 %v1966
        %2226 = vmatmul.mubr.f32.gmra.mrb[0].mxu0 %v1965
        %v2227 = vpop.f32.mrb[0].mxu0
        %v2228 = vadd.f32 %v2064, %v2227
        %v2229 = vpop.f32.mrb[0].mxu0
        %2230 = vmatprep.mubr.f32.mxu0 %v1968
        %2231 = vmatmul.mubr.f32.gmra.mrb[0].mxu0 %v1967
        %v2232 = vpop.f32.mrb[0].mxu0
        %v2233 = vadd.f32 %v2064, %v2232
        %v2234 = vpop.f32.mrb[0].mxu0
        %2235 = vmatprep.mubr.f32.mxu0 %v1970
        %2236 = vmatmul.mubr.f32.gmra.mrb[0].mxu0 %v1969
        %v2237 = vpop.f32.mrb[0].mxu0
        %v2238 = vadd.f32 %v2064, %v2237
        %v2239 = vpop.f32.mrb[0].mxu0
        %2240 = vmatprep.mubr.f32.mxu0 %v1972
        %2241 = vmatmul.mubr.f32.gmra.mrb[0].mxu0 %v1971
        %v2242 = vpop.f32.mrb[0].mxu0
        %v2243 = vadd.f32 %v2064, %v2242
        %v2244 = vpop.f32.mrb[0].mxu0
        %2245 = vmatprep.mubr.f32.mxu0 %v1974
        %2246 = vmatmul.mubr.f32.gmra.mrb[0].mxu0 %v1973
        %v2247 = vpop.f32.mrb[0].mxu0
        %v2248 = vadd.f32 %v2064, %v2247
        %v2249 = vpop.f32.mrb[0].mxu0
        %2250 = vmatprep.mubr.f32.mxu0 %v1976
        %2251 = vmatmul.mubr.f32.gmra.mrb[0].mxu0 %v1975
        %v2252 = vpop.f32.mrb[0].mxu0
        %v2253 = vadd.f32 %v2064, %v2252
        %v2254 = vpop.f32.mrb[0].mxu0
        %2255 = vmatprep.mubr.f32.mxu0 %v1978
        %2256 = vmatmul.mubr.f32.gmra.mrb[0].mxu0 %v1977
        %v2257 = vpop.f32.mrb[0].mxu0
        %v2258 = vadd.f32 %v2064, %v2257
        %v2259 = vpop.f32.mrb[0].mxu0
        %2260 = vmatprep.mubr.f32.mxu0 %v1980
        %2261 = vmatmul.mubr.f32.gmra.mrb[0].mxu0 %v1979
        %v2262 = vpop.f32.mrb[0].mxu0
        %v2263 = vadd.f32 %v2064, %v2262
        %v2264 = vpop.f32.mrb[0].mxu0
        %2265 = vmatprep.mubr.f32.mxu0 %v1982
        %2266 = vmatmul.mubr.f32.gmra.mrb[0].mxu0 %v1981
        %v2267 = vpop.f32.mrb[0].mxu0
        %v2268 = vadd.f32 %v2064, %v2267
        %v2269 = vpop.f32.mrb[0].mxu0
        %2270 = vmatprep.mubr.f32.mxu0 %v1984
        %2271 = vmatmul.mubr.f32.gmra.mrb[0].mxu0 %v1983
        %v2272 = vpop.f32.mrb[0].mxu0
        %v2273 = vadd.f32 %v2064, %v2272
        %v2274 = vpop.f32.mrb[0].mxu0
        %2275 = vmatprep.mubr.f32.mxu0 %v1986
        %2276 = vmatmul.mubr.f32.gmra.mrb[0].mxu0 %v1985
        %v2277 = vpop.f32.mrb[0].mxu0
        %v2278 = vadd.f32 %v2064, %v2277
        %v2279 = vpop.f32.mrb[0].mxu0
        %2280 = vmatprep.mubr.f32.mxu0 %v1988
        %2281 = vmatmul.mubr.f32.gmra.mrb[0].mxu0 %v1987
        %v2282 = vpop.f32.mrb[0].mxu0
        %v2283 = vadd.f32 %v2064, %v2282
        %v2284 = vpop.f32.mrb[0].mxu0
        %2285 = vmatprep.mubr.f32.mxu0 %v1990
        %2286 = vmatmul.mubr.f32.gmra.mrb[0].mxu0 %v1989
        %v2287 = vpop.f32.mrb[0].mxu0
        %v2288 = vadd.f32 %v2064, %v2287
        %v2289 = vpop.f32.mrb[0].mxu0
        %2290 = vmatprep.mubr.f32.mxu0 %v1992
        %2291 = vmatmul.mubr.f32.gmra.mrb[0].mxu0 %v1991
        %v2292 = vpop.f32.mrb[0].mxu0
        %v2293 = vadd.f32 %v2064, %v2292
        %v2294 = vpop.f32.mrb[0].mxu0
        %2295 = vmatprep.mubr.f32.mxu0 %v1994
        %2296 = vmatmul.mubr.f32.gmra.mrb[0].mxu0 %v1993
        %v2297 = vpop.f32.mrb[0].mxu0
        %v2298 = vadd.f32 %v2064, %v2297
        %v2299 = vpop.f32.mrb[0].mxu0
        %2300 = vmatprep.mubr.f32.mxu0 %v1996
        %2301 = vmatmul.mubr.f32.gmra.mrb[0].mxu0 %v1995
        %v2302 = vpop.f32.mrb[0].mxu0
        %v2303 = vadd.f32 %v2064, %v2302
        %v2304 = vpop.f32.mrb[0].mxu0
        %2305 = vmatprep.mubr.f32.mxu0 %v1998
        %2306 = vmatmul.mubr.f32.gmra.mrb[0].mxu0 %v1997
        %v2307 = vpop.f32.mrb[0].mxu0
        %v2308 = vadd.f32 %v2064, %v2307
        %v2309 = vpop.f32.mrb[0].mxu0
        %2310 = vmatprep.mubr.f32.mxu0 %v2000
        %2311 = vmatmul.mubr.f32.gmra.mrb[0].mxu0 %v1999
        %v2312 = vpop.f32.mrb[0].mxu0
        %v2313 = vadd.f32 %v2064, %v2312
        %v2314 = vpop.f32.mrb[0].mxu0
        %2315 = vmatprep.mubr.f32.mxu0 %v2002
        %2316 = vmatmul.mubr.f32.gmra.mrb[0].mxu0 %v2001
        %v2317 = vpop.f32.mrb[0].mxu0
        %v2318 = vadd.f32 %v2064, %v2317
        %v2319 = vpop.f32.mrb[0].mxu0
        %2320 = vmatprep.mubr.f32.mxu0 %v2004
        %2321 = vmatmul.mubr.f32.gmra.mrb[0].mxu0 %v2003
        %v2322 = vpop.f32.mrb[0].mxu0
        %v2323 = vadd.f32 %v2064, %v2322
        %v2324 = vpop.f32.mrb[0].mxu0
        %2325 = vmatprep.mubr.f32.mxu0 %v2006
        %2326 = vmatmul.mubr.f32.gmra.mrb[0].mxu0 %v2005
        %v2327 = vpop.f32.mrb[0].mxu0
        %v2328 = vadd.f32 %v2064, %v2327
        %v2329 = vpop.f32.mrb[0].mxu0
        %2330 = vmatprep.mubr.f32.mxu0 %v2008
        %2331 = vmatmul.mubr.f32.gmra.mrb[0].mxu0 %v2007
        %v2332 = vpop.f32.mrb[0].mxu0
        %v2333 = vadd.f32 %v2064, %v2332
        %v2334 = vpop.f32.mrb[0].mxu0
        %2335 = vmatprep.mubr.f32.mxu0 %v2010
        %2336 = vmatmul.mubr.f32.gmra.mrb[0].mxu0 %v2009
        %v2337 = vpop.f32.mrb[0].mxu0
        %v2338 = vadd.f32 %v2064, %v2337
        %v2339 = vpop.f32.mrb[0].mxu0
        %2340 = vmatprep.mubr.f32.mxu0 %v2012
        %2341 = vmatmul.mubr.f32.gmra.mrb[0].mxu0 %v2011
        %v2342 = vpop.f32.mrb[0].mxu0
        %v2343 = vadd.f32 %v2064, %v2342
        %v2344 = vpop.f32.mrb[0].mxu0
        %2345 = vmatprep.mubr.f32.mxu0 %v2014
        %2346 = vmatmul.mubr.f32.gmra.mrb[0].mxu0 %v2013
        %v2347 = vpop.f32.mrb[0].mxu0
        %v2348 = vadd.f32 %v2064, %v2347
        %v2349 = vpop.f32.mrb[0].mxu0
        %2350 = vmatprep.mubr.f32.mxu0 %v2016
        %2351 = vmatmul.mubr.f32.gmra.mrb[0].mxu0 %v2015
        %v2352 = vpop.f32.mrb[0].mxu0
        %v2353 = vadd.f32 %v2064, %v2352
        %v2354 = vpop.f32.mrb[0].mxu0
        %2355 = vmatprep.mubr.f32.mxu0 %v2018
        %2356 = vmatmul.mubr.f32.gmra.mrb[0].mxu0 %v2017
        %v2357 = vpop.f32.mrb[0].mxu0
        %v2358 = vadd.f32 %v2064, %v2357
        %v2359 = vpop.f32.mrb[0].mxu0
        %2360 = vmatprep.mubr.f32.mxu0 %v2020
        %2361 = vmatmul.mubr.f32.gmra.mrb[0].mxu0 %v2019
        %v2362 = vpop.f32.mrb[0].mxu0
        %v2363 = vadd.f32 %v2064, %v2362
        %v2364 = vpop.f32.mrb[0].mxu0
        %2365 = vmatprep.mubr.f32.mxu0 %v2022
        %2366 = vmatmul.mubr.f32.gmra.mrb[0].mxu0 %v2021
        %v2367 = vpop.f32.mrb[0].mxu0
        %v2368 = vadd.f32 %v2064, %v2367
        %v2369 = vpop.f32.mrb[0].mxu0
        %2370 = vmatprep.mubr.f32.mxu0 %v2024
        %2371 = vmatmul.mubr.f32.gmra.mrb[0].mxu0 %v2023
        %v2372 = vpop.f32.mrb[0].mxu0
        %v2373 = vadd.f32 %v2064, %v2372
        %v2374 = vpop.f32.mrb[0].mxu0
        %2375 = vmatprep.mubr.f32.mxu0 %v2026
        %2376 = vmatmul.mubr.f32.gmra.mrb[0].mxu0 %v2025
        %v2377 = vpop.f32.mrb[0].mxu0
        %v2378 = vadd.f32 %v2064, %v2377
        %v2379 = vpop.f32.mrb[0].mxu0
        %2380 = vdwg.mxu0
        %v2381 = vxor.u32 %v2133, 2147483648
        %v2382 = vxor.u32 %v2138, 2147483648
        %v2383 = vxor.u32 %v2143, 2147483648
        %v2384 = vxor.u32 %v2148, 2147483648
        %v2385 = vxor.u32 %v2153, 2147483648
        %v2386 = vxor.u32 %v2158, 2147483648
        %v2387 = vxor.u32 %v2163, 2147483648
        %v2388 = vxor.u32 %v2168, 2147483648
        %v2389 = vxor.u32 %v2173, 2147483648
        %v2390 = vxor.u32 %v2178, 2147483648
        %v2391 = vxor.u32 %v2183, 2147483648
        %v2392 = vxor.u32 %v2188, 2147483648
        %v2393 = vxor.u32 %v2193, 2147483648
        %v2394 = vxor.u32 %v2198, 2147483648
        %v2395 = vxor.u32 %v2203, 2147483648
        %v2396 = vxor.u32 %v2208, 2147483648
        %v2397 = vxor.u32 %v2213, 2147483648
        %v2398 = vxor.u32 %v2218, 2147483648
        %v2399 = vxor.u32 %v2223, 2147483648
        %v2400 = vxor.u32 %v2228, 2147483648
        %v2401 = vxor.u32 %v2233, 2147483648
        %v2402 = vxor.u32 %v2238, 2147483648
        %v2403 = vxor.u32 %v2243, 2147483648
        %v2404 = vxor.u32 %v2248, 2147483648
        %v2405 = vxor.u32 %v2253, 2147483648
        %v2406 = vxor.u32 %v2258, 2147483648
        %v2407 = vxor.u32 %v2263, 2147483648
        %v2408 = vxor.u32 %v2268, 2147483648
        %v2409 = vxor.u32 %v2273, 2147483648
        %v2410 = vxor.u32 %v2278, 2147483648
        %v2411 = vxor.u32 %v2283, 2147483648
        %v2412 = vxor.u32 %v2288, 2147483648
        %v2413 = vxor.u32 %v2293, 2147483648
        %v2414 = vxor.u32 %v2298, 2147483648
        %v2415 = vxor.u32 %v2303, 2147483648
        %v2416 = vxor.u32 %v2308, 2147483648
        %v2417 = vxor.u32 %v2313, 2147483648
        %v2418 = vxor.u32 %v2318, 2147483648
        %v2419 = vxor.u32 %v2323, 2147483648
        %v2420 = vxor.u32 %v2328, 2147483648
        %v2421 = vxor.u32 %v2333, 2147483648
        %v2422 = vxor.u32 %v2338, 2147483648
        %v2423 = vxor.u32 %v2343, 2147483648
        %v2424 = vxor.u32 %v2348, 2147483648
        %v2425 = vxor.u32 %v2353, 2147483648
        %v2426 = vxor.u32 %v2358, 2147483648
        %v2427 = vxor.u32 %v2363, 2147483648
        %v2428 = vxor.u32 %v2368, 2147483648
        %v2429 = vxor.u32 %v2373, 2147483648
        %v2430 = vxor.u32 %v2378, 2147483648
        %v2431 = vmul.f32 %v2381, 1.442695
        %v2432 = vpow.pop %v2431
        %v2433 = vmul.f32 %v2382, 1.442695
        %v2434 = vpow.pop %v2433
        %v2435 = vmul.f32 %v2383, 1.442695
        %v2436 = vpow.pop %v2435
        %v2437 = vmul.f32 %v2384, 1.442695
        %v2438 = vpow.pop %v2437
        %v2439 = vmul.f32 %v2385, 1.442695
        %v2440 = vpow.pop %v2439
        %v2441 = vmul.f32 %v2386, 1.442695
        %v2442 = vpow.pop %v2441
        %v2443 = vmul.f32 %v2387, 1.442695
        %v2444 = vpow.pop %v2443
        %v2445 = vmul.f32 %v2388, 1.442695
        %v2446 = vpow.pop %v2445
        %v2447 = vmul.f32 %v2389, 1.442695
        %v2448 = vpow.pop %v2447
        %v2449 = vmul.f32 %v2390, 1.442695
        %v2450 = vpow.pop %v2449
        %v2451 = vmul.f32 %v2391, 1.442695
        %v2452 = vpow.pop %v2451
        %v2453 = vmul.f32 %v2392, 1.442695
        %v2454 = vpow.pop %v2453
        %v2455 = vmul.f32 %v2393, 1.442695
        %v2456 = vpow.pop %v2455
        %v2457 = vmul.f32 %v2394, 1.442695
        %v2458 = vpow.pop %v2457
        %v2459 = vmul.f32 %v2395, 1.442695
        %v2460 = vpow.pop %v2459
        %v2461 = vmul.f32 %v2396, 1.442695
        %v2462 = vpow.pop %v2461
        %v2463 = vmul.f32 %v2397, 1.442695
        %v2464 = vpow.pop %v2463
        %v2465 = vmul.f32 %v2398, 1.442695
        %v2466 = vpow.pop %v2465
        %v2467 = vmul.f32 %v2399, 1.442695
        %v2468 = vpow.pop %v2467
        %v2469 = vmul.f32 %v2400, 1.442695
        %v2470 = vpow.pop %v2469
        %v2471 = vmul.f32 %v2401, 1.442695
        %v2472 = vpow.pop %v2471
        %v2473 = vmul.f32 %v2402, 1.442695
        %v2474 = vpow.pop %v2473
        %v2475 = vmul.f32 %v2403, 1.442695
        %v2476 = vpow.pop %v2475
        %v2477 = vmul.f32 %v2404, 1.442695
        %v2478 = vpow.pop %v2477
        %v2479 = vmul.f32 %v2405, 1.442695
        %v2480 = vpow.pop %v2479
        %v2481 = vmul.f32 %v2406, 1.442695
        %v2482 = vpow.pop %v2481
        %v2483 = vmul.f32 %v2407, 1.442695
        %v2484 = vpow.pop %v2483
        %v2485 = vmul.f32 %v2408, 1.442695
        %v2486 = vpow.pop %v2485
        %v2487 = vmul.f32 %v2409, 1.442695
        %v2488 = vpow.pop %v2487
        %v2489 = vmul.f32 %v2410, 1.442695
        %v2490 = vpow.pop %v2489
        %v2491 = vmul.f32 %v2411, 1.442695
        %v2492 = vpow.pop %v2491
        %v2493 = vmul.f32 %v2412, 1.442695
        %v2494 = vpow.pop %v2493
        %v2495 = vmul.f32 %v2413, 1.442695
        %v2496 = vpow.pop %v2495
        %v2497 = vmul.f32 %v2414, 1.442695
        %v2498 = vpow.pop %v2497
        %v2499 = vmul.f32 %v2415, 1.442695
        %v2500 = vpow.pop %v2499
        %v2501 = vmul.f32 %v2416, 1.442695
        %v2502 = vpow.pop %v2501
        %v2503 = vmul.f32 %v2417, 1.442695
        %v2504 = vpow.pop %v2503
        %v2505 = vmul.f32 %v2418, 1.442695
        %v2506 = vpow.pop %v2505
        %v2507 = vmul.f32 %v2419, 1.442695
        %v2508 = vpow.pop %v2507
        %v2509 = vmul.f32 %v2420, 1.442695
        %v2510 = vpow.pop %v2509
        %v2511 = vmul.f32 %v2421, 1.442695
        %v2512 = vpow.pop %v2511
        %v2513 = vmul.f32 %v2422, 1.442695
        %v2514 = vpow.pop %v2513
        %v2515 = vmul.f32 %v2423, 1.442695
        %v2516 = vpow.pop %v2515
        %v2517 = vmul.f32 %v2424, 1.442695
        %v2518 = vpow.pop %v2517
        %v2519 = vmul.f32 %v2425, 1.442695
        %v2520 = vpow.pop %v2519
        %v2521 = vmul.f32 %v2426, 1.442695
        %v2522 = vpow.pop %v2521
        %v2523 = vmul.f32 %v2427, 1.442695
        %v2524 = vpow.pop %v2523
        %v2525 = vmul.f32 %v2428, 1.442695
        %v2526 = vpow.pop %v2525
        %v2527 = vmul.f32 %v2429, 1.442695
        %v2528 = vpow.pop %v2527
        %v2529 = vmul.f32 %v2430, 1.442695
        %v2530 = vpow.pop %v2529
        %v2531 = vadd.f32 %v2432, 1.0
        %v2532 = vadd.f32 %v2434, 1.0
        %v2533 = vadd.f32 %v2436, 1.0
        %v2534 = vadd.f32 %v2438, 1.0
        %v2535 = vadd.f32 %v2440, 1.0
        %v2536 = vadd.f32 %v2442, 1.0
        %v2537 = vadd.f32 %v2444, 1.0
        %v2538 = vadd.f32 %v2446, 1.0
        %v2539 = vadd.f32 %v2448, 1.0
        %v2540 = vadd.f32 %v2450, 1.0
        %v2541 = vadd.f32 %v2452, 1.0
        %v2542 = vadd.f32 %v2454, 1.0
        %v2543 = vadd.f32 %v2456, 1.0
        %v2544 = vadd.f32 %v2458, 1.0
        %v2545 = vadd.f32 %v2460, 1.0
        %v2546 = vadd.f32 %v2462, 1.0
        %v2547 = vadd.f32 %v2464, 1.0
        %v2548 = vadd.f32 %v2466, 1.0
        %v2549 = vadd.f32 %v2468, 1.0
        %v2550 = vadd.f32 %v2470, 1.0
        %v2551 = vadd.f32 %v2472, 1.0
        %v2552 = vadd.f32 %v2474, 1.0
        %v2553 = vadd.f32 %v2476, 1.0
        %v2554 = vadd.f32 %v2478, 1.0
        %v2555 = vadd.f32 %v2480, 1.0
        %v2556 = vadd.f32 %v2482, 1.0
        %v2557 = vadd.f32 %v2484, 1.0
        %v2558 = vadd.f32 %v2486, 1.0
        %v2559 = vadd.f32 %v2488, 1.0
        %v2560 = vadd.f32 %v2490, 1.0
        %v2561 = vadd.f32 %v2492, 1.0
        %v2562 = vadd.f32 %v2494, 1.0
        %v2563 = vadd.f32 %v2496, 1.0
        %v2564 = vadd.f32 %v2498, 1.0
        %v2565 = vadd.f32 %v2500, 1.0
        %v2566 = vadd.f32 %v2502, 1.0
        %v2567 = vadd.f32 %v2504, 1.0
        %v2568 = vadd.f32 %v2506, 1.0
        %v2569 = vadd.f32 %v2508, 1.0
        %v2570 = vadd.f32 %v2510, 1.0
        %v2571 = vadd.f32 %v2512, 1.0
        %v2572 = vadd.f32 %v2514, 1.0
        %v2573 = vadd.f32 %v2516, 1.0
        %v2574 = vadd.f32 %v2518, 1.0
        %v2575 = vadd.f32 %v2520, 1.0
        %v2576 = vadd.f32 %v2522, 1.0
        %v2577 = vadd.f32 %v2524, 1.0
        %v2578 = vadd.f32 %v2526, 1.0
        %v2579 = vadd.f32 %v2528, 1.0
        %v2580 = vadd.f32 %v2530, 1.0
        %v2581 = vrcp.pop %v2531
        %v2582 = vmul.f32 1.0, %v2581
        %v2583 = vrcp.pop %v2532
        %v2584 = vmul.f32 1.0, %v2583
        %v2585 = vrcp.pop %v2533
        %v2586 = vmul.f32 1.0, %v2585
        %v2587 = vrcp.pop %v2534
        %v2588 = vmul.f32 1.0, %v2587
        %v2589 = vrcp.pop %v2535
        %v2590 = vmul.f32 1.0, %v2589
        %v2591 = vrcp.pop %v2536
        %v2592 = vmul.f32 1.0, %v2591
        %v2593 = vrcp.pop %v2537
        %v2594 = vmul.f32 1.0, %v2593
        %v2595 = vrcp.pop %v2538
        %v2596 = vmul.f32 1.0, %v2595
        %v2597 = vrcp.pop %v2539
        %v2598 = vmul.f32 1.0, %v2597
        %v2599 = vrcp.pop %v2540
        %v2600 = vmul.f32 1.0, %v2599
        %v2601 = vrcp.pop %v2541
        %v2602 = vmul.f32 1.0, %v2601
        %v2603 = vrcp.pop %v2542
        %v2604 = vmul.f32 1.0, %v2603
        %v2605 = vrcp.pop %v2543
        %v2606 = vmul.f32 1.0, %v2605
        %v2607 = vrcp.pop %v2544
        %v2608 = vmul.f32 1.0, %v2607
        %v2609 = vrcp.pop %v2545
        %v2610 = vmul.f32 1.0, %v2609
        %v2611 = vrcp.pop %v2546
        %v2612 = vmul.f32 1.0, %v2611
        %v2613 = vrcp.pop %v2547
        %v2614 = vmul.f32 1.0, %v2613
        %v2615 = vrcp.pop %v2548
        %v2616 = vmul.f32 1.0, %v2615
        %v2617 = vrcp.pop %v2549
        %v2618 = vmul.f32 1.0, %v2617
        %v2619 = vrcp.pop %v2550
        %v2620 = vmul.f32 1.0, %v2619
        %v2621 = vrcp.pop %v2551
        %v2622 = vmul.f32 1.0, %v2621
        %v2623 = vrcp.pop %v2552
        %v2624 = vmul.f32 1.0, %v2623
        %v2625 = vrcp.pop %v2553
        %v2626 = vmul.f32 1.0, %v2625
        %v2627 = vrcp.pop %v2554
        %v2628 = vmul.f32 1.0, %v2627
        %v2629 = vrcp.pop %v2555
        %v2630 = vmul.f32 1.0, %v2629
        %v2631 = vrcp.pop %v2556
        %v2632 = vmul.f32 1.0, %v2631
        %v2633 = vrcp.pop %v2557
        %v2634 = vmul.f32 1.0, %v2633
        %v2635 = vrcp.pop %v2558
        %v2636 = vmul.f32 1.0, %v2635
        %v2637 = vrcp.pop %v2559
        %v2638 = vmul.f32 1.0, %v2637
        %v2639 = vrcp.pop %v2560
        %v2640 = vmul.f32 1.0, %v2639
        %v2641 = vrcp.pop %v2561
        %v2642 = vmul.f32 1.0, %v2641
        %v2643 = vrcp.pop %v2562
        %v2644 = vmul.f32 1.0, %v2643
        %v2645 = vrcp.pop %v2563
        %v2646 = vmul.f32 1.0, %v2645
        %v2647 = vrcp.pop %v2564
        %v2648 = vmul.f32 1.0, %v2647
        %v2649 = vrcp.pop %v2565
        %v2650 = vmul.f32 1.0, %v2649
        %v2651 = vrcp.pop %v2566
        %v2652 = vmul.f32 1.0, %v2651
        %v2653 = vrcp.pop %v2567
        %v2654 = vmul.f32 1.0, %v2653
        %v2655 = vrcp.pop %v2568
        %v2656 = vmul.f32 1.0, %v2655
        %v2657 = vrcp.pop %v2569
        %v2658 = vmul.f32 1.0, %v2657
        %v2659 = vrcp.pop %v2570
        %v2660 = vmul.f32 1.0, %v2659
        %v2661 = vrcp.pop %v2571
        %v2662 = vmul.f32 1.0, %v2661
        %v2663 = vrcp.pop %v2572
        %v2664 = vmul.f32 1.0, %v2663
        %v2665 = vrcp.pop %v2573
        %v2666 = vmul.f32 1.0, %v2665
        %v2667 = vrcp.pop %v2574
        %v2668 = vmul.f32 1.0, %v2667
        %v2669 = vrcp.pop %v2575
        %v2670 = vmul.f32 1.0, %v2669
        %v2671 = vrcp.pop %v2576
        %v2672 = vmul.f32 1.0, %v2671
        %v2673 = vrcp.pop %v2577
        %v2674 = vmul.f32 1.0, %v2673
        %v2675 = vrcp.pop %v2578
        %v2676 = vmul.f32 1.0, %v2675
        %v2677 = vrcp.pop %v2579
        %v2678 = vmul.f32 1.0, %v2677
        %v2679 = vrcp.pop %v2580
        %v2680 = vmul.f32 1.0, %v2679
        %v2681 = vmul.f32 %v2133, %v2582
        %v2682 = vmul.f32 %v2138, %v2584
        %v2683 = vmul.f32 %v2143, %v2586
        %v2684 = vmul.f32 %v2148, %v2588
        %v2685 = vmul.f32 %v2153, %v2590
        %v2686 = vmul.f32 %v2158, %v2592
        %v2687 = vmul.f32 %v2163, %v2594
        %v2688 = vmul.f32 %v2168, %v2596
        %v2689 = vmul.f32 %v2173, %v2598
        %v2690 = vmul.f32 %v2178, %v2600
        %v2691 = vmul.f32 %v2183, %v2602
        %v2692 = vmul.f32 %v2188, %v2604
        %v2693 = vmul.f32 %v2193, %v2606
        %v2694 = vmul.f32 %v2198, %v2608
        %v2695 = vmul.f32 %v2203, %v2610
        %v2696 = vmul.f32 %v2208, %v2612
        %v2697 = vmul.f32 %v2213, %v2614
        %v2698 = vmul.f32 %v2218, %v2616
        %v2699 = vmul.f32 %v2223, %v2618
        %v2700 = vmul.f32 %v2228, %v2620
        %v2701 = vmul.f32 %v2233, %v2622
        %v2702 = vmul.f32 %v2238, %v2624
        %v2703 = vmul.f32 %v2243, %v2626
        %v2704 = vmul.f32 %v2248, %v2628
        %v2705 = vmul.f32 %v2253, %v2630
        %v2706 = vmul.f32 %v2258, %v2632
        %v2707 = vmul.f32 %v2263, %v2634
        %v2708 = vmul.f32 %v2268, %v2636
        %v2709 = vmul.f32 %v2273, %v2638
        %v2710 = vmul.f32 %v2278, %v2640
        %v2711 = vmul.f32 %v2283, %v2642
        %v2712 = vmul.f32 %v2288, %v2644
        %v2713 = vmul.f32 %v2293, %v2646
        %v2714 = vmul.f32 %v2298, %v2648
        %v2715 = vmul.f32 %v2303, %v2650
        %v2716 = vmul.f32 %v2308, %v2652
        %v2717 = vmul.f32 %v2313, %v2654
        %v2718 = vmul.f32 %v2318, %v2656
        %v2719 = vmul.f32 %v2323, %v2658
        %v2720 = vmul.f32 %v2328, %v2660
        %v2721 = vmul.f32 %v2333, %v2662
        %v2722 = vmul.f32 %v2338, %v2664
        %v2723 = vmul.f32 %v2343, %v2666
        %v2724 = vmul.f32 %v2348, %v2668
        %v2725 = vmul.f32 %v2353, %v2670
        %v2726 = vmul.f32 %v2358, %v2672
        %v2727 = vmul.f32 %v2363, %v2674
        %v2728 = vmul.f32 %v2368, %v2676
        %v2729 = vmul.f32 %v2373, %v2678
        %v2730 = vmul.f32 %v2378, %v2680
        %v2731 = vld [vmem:[%s6] sm:$0xff]
        %v2732 = vld [vmem:[%s6 + $0x8] sm:$0xff]
        %v2733 = vld [vmem:[%s6 + $0x10] sm:$0xff]
        %v2734 = vld [vmem:[%s6 + $0x18] sm:$0xff]
        %v2735 = vld [vmem:[%s6 + $0x20] sm:$0xff]
        %v2736 = vld [vmem:[%s6 + $0x28] sm:$0xff]
        %v2737 = vld [vmem:[%s6 + $0x30] sm:$0xff]
        %v2738 = vld [vmem:[%s6 + $0x38] sm:$0xff]
        %v2739 = vld [vmem:[%s6 + $0x40] sm:$0xff]
        %v2740 = vld [vmem:[%s6 + $0x48] sm:$0xff]
        %v2741 = vld [vmem:[%s6 + $0x50] sm:$0xff]
        %v2742 = vld [vmem:[%s6 + $0x58] sm:$0xff]
        %v2743 = vld [vmem:[%s6 + $0x60] sm:$0xff]
        %v2744 = vld [vmem:[%s6 + $0x68] sm:$0xff]
        %v2745 = vld [vmem:[%s6 + $0x70] sm:$0xff]
        %v2746 = vld [vmem:[%s6 + $0x78] sm:$0xff]
        %v2747 = vld [vmem:[%s7] sm:$0x1]
        %v2749 = vlaneseq
        %v2750 = vshrl.u32 %v2749, 7
        %v2751 = vsub.s32 0, %v2750
        %v2752 = vrot.slane %v2747, %v2751
        %2754 = vmatprep.subr.mxu0 0.0
        %2755 = vmatpush1.msra.mxu0 %v2731
        %2756 = vmatprep.subr.mxu0 0.0
        %2757 = vmatpush1.msra.mxu0 %v2732
        %2758 = vmatprep.subr.mxu0 0.0
        %2759 = vmatpush1.msra.mxu0 %v2733
        %2760 = vmatprep.subr.mxu0 0.0
        %2761 = vmatpush1.msra.mxu0 %v2734
        %2762 = vmatprep.subr.mxu0 0.0
        %2763 = vmatpush1.msra.mxu0 %v2735
        %2764 = vmatprep.subr.mxu0 0.0
        %2765 = vmatpush1.msra.mxu0 %v2736
        %2766 = vmatprep.subr.mxu0 0.0
        %2767 = vmatpush1.msra.mxu0 %v2737
        %2768 = vmatprep.subr.mxu0 0.0
        %2769 = vmatpush1.msra.mxu0 %v2738
        %2770 = vmatprep.subr.mxu0 0.0
        %2771 = vmatpush1.msra.mxu0 %v2739
        %2772 = vmatprep.subr.mxu0 0.0
        %2773 = vmatpush1.msra.mxu0 %v2740
        %2774 = vmatprep.subr.mxu0 0.0
        %2775 = vmatpush1.msra.mxu0 %v2741
        %2776 = vmatprep.subr.mxu0 0.0
        %2777 = vmatpush1.msra.mxu0 %v2742
        %2778 = vmatprep.subr.mxu0 0.0
        %2779 = vmatpush1.msra.mxu0 %v2743
        %2780 = vmatprep.subr.mxu0 0.0
        %2781 = vmatpush1.msra.mxu0 %v2744
        %2782 = vmatprep.subr.mxu0 0.0
        %2783 = vmatpush1.msra.mxu0 %v2745
        %2784 = vmatprep.subr.mxu0 0.0
        %2785 = vmatpush1.msra.mxu0 %v2746
        %2786 = vmatprep.subr.mxu0 0.0
        %2787 = vmatpush1.msra.mxu0 0.0
        %2788 = vmatprep.subr.mxu0 0.0
        %2789 = vmatpush1.msra.mxu0 0.0
        %2790 = vmatprep.subr.mxu0 0.0
        %2791 = vmatpush1.msra.mxu0 0.0
        %2792 = vmatprep.subr.mxu0 0.0
        %2793 = vmatpush1.msra.mxu0 0.0
        %2794 = vmatprep.subr.mxu0 0.0
        %2795 = vmatpush1.msra.mxu0 0.0
        %2796 = vmatprep.subr.mxu0 0.0
        %2797 = vmatpush1.msra.mxu0 0.0
        %2798 = vmatprep.subr.mxu0 0.0
        %2799 = vmatpush1.msra.mxu0 0.0
        %2800 = vmatprep.subr.mxu0 0.0
        %2801 = vmatpush1.msra.mxu0 0.0
        %2802 = vmatprep.subr.mxu0 0.0
        %2803 = vmatpush1.msra.mxu0 0.0
        %2804 = vmatprep.subr.mxu0 0.0
        %2805 = vmatpush1.msra.mxu0 0.0
        %2806 = vmatprep.subr.mxu0 0.0
        %2807 = vmatpush1.msra.mxu0 0.0
        %2808 = vmatprep.subr.mxu0 0.0
        %2809 = vmatpush1.msra.mxu0 0.0
        %2810 = vmatprep.subr.mxu0 0.0
        %2811 = vmatpush1.msra.mxu0 0.0
        %2812 = vmatprep.subr.mxu0 0.0
        %2813 = vmatpush1.msra.mxu0 0.0
        %2814 = vmatprep.subr.mxu0 0.0
        %2815 = vmatpush1.msra.mxu0 0.0
        %2816 = vmatprep.subr.mxu0 0.0
        %2817 = vmatpush1.msra.mxu0 0.0
        %2818 = vmatprep.mubr.f32.mxu0 0.0
        %2819 = vmatmul.mubr.f32.gmra.mrb[0].mxu0 %v2681
        %v2820 = vpop.f32.mrb[0].mxu0
        %v2821 = vadd.f32 %v2752, %v2820
        %v2822 = vpop.f32.mrb[0].mxu0
        %2823 = vmatprep.mubr.f32.mxu0 0.0
        %2824 = vmatmul.mubr.f32.gmra.mrb[0].mxu0 %v2682
        %v2825 = vpop.f32.mrb[0].mxu0
        %v2826 = vadd.f32 %v2752, %v2825
        %v2827 = vpop.f32.mrb[0].mxu0
        %2828 = vmatprep.mubr.f32.mxu0 0.0
        %2829 = vmatmul.mubr.f32.gmra.mrb[0].mxu0 %v2683
        %v2830 = vpop.f32.mrb[0].mxu0
        %v2831 = vadd.f32 %v2752, %v2830
        %v2832 = vpop.f32.mrb[0].mxu0
        %2833 = vmatprep.mubr.f32.mxu0 0.0
        %2834 = vmatmul.mubr.f32.gmra.mrb[0].mxu0 %v2684
        %v2835 = vpop.f32.mrb[0].mxu0
        %v2836 = vadd.f32 %v2752, %v2835
        %v2837 = vpop.f32.mrb[0].mxu0
        %2838 = vmatprep.mubr.f32.mxu0 0.0
        %2839 = vmatmul.mubr.f32.gmra.mrb[0].mxu0 %v2685
        %v2840 = vpop.f32.mrb[0].mxu0
        %v2841 = vadd.f32 %v2752, %v2840
        %v2842 = vpop.f32.mrb[0].mxu0
        %2843 = vmatprep.mubr.f32.mxu0 0.0
        %2844 = vmatmul.mubr.f32.gmra.mrb[0].mxu0 %v2686
        %v2845 = vpop.f32.mrb[0].mxu0
        %v2846 = vadd.f32 %v2752, %v2845
        %v2847 = vpop.f32.mrb[0].mxu0
        %2848 = vmatprep.mubr.f32.mxu0 0.0
        %2849 = vmatmul.mubr.f32.gmra.mrb[0].mxu0 %v2687
        %v2850 = vpop.f32.mrb[0].mxu0
        %v2851 = vadd.f32 %v2752, %v2850
        %v2852 = vpop.f32.mrb[0].mxu0
        %2853 = vmatprep.mubr.f32.mxu0 0.0
        %2854 = vmatmul.mubr.f32.gmra.mrb[0].mxu0 %v2688
        %v2855 = vpop.f32.mrb[0].mxu0
        %v2856 = vadd.f32 %v2752, %v2855
        %v2857 = vpop.f32.mrb[0].mxu0
        %2858 = vmatprep.mubr.f32.mxu0 0.0
        %2859 = vmatmul.mubr.f32.gmra.mrb[0].mxu0 %v2689
        %v2860 = vpop.f32.mrb[0].mxu0
        %v2861 = vadd.f32 %v2752, %v2860
        %v2862 = vpop.f32.mrb[0].mxu0
        %2863 = vmatprep.mubr.f32.mxu0 0.0
        %2864 = vmatmul.mubr.f32.gmra.mrb[0].mxu0 %v2690
        %v2865 = vpop.f32.mrb[0].mxu0
        %v2866 = vadd.f32 %v2752, %v2865
        %v2867 = vpop.f32.mrb[0].mxu0
        %2868 = vmatprep.mubr.f32.mxu0 0.0
        %2869 = vmatmul.mubr.f32.gmra.mrb[0].mxu0 %v2691
        %v2870 = vpop.f32.mrb[0].mxu0
        %v2871 = vadd.f32 %v2752, %v2870
        %v2872 = vpop.f32.mrb[0].mxu0
        %2873 = vmatprep.mubr.f32.mxu0 0.0
        %2874 = vmatmul.mubr.f32.gmra.mrb[0].mxu0 %v2692
        %v2875 = vpop.f32.mrb[0].mxu0
        %v2876 = vadd.f32 %v2752, %v2875
        %v2877 = vpop.f32.mrb[0].mxu0
        %2878 = vmatprep.mubr.f32.mxu0 0.0
        %2879 = vmatmul.mubr.f32.gmra.mrb[0].mxu0 %v2693
        %v2880 = vpop.f32.mrb[0].mxu0
        %v2881 = vadd.f32 %v2752, %v2880
        %v2882 = vpop.f32.mrb[0].mxu0
        %2883 = vmatprep.mubr.f32.mxu0 0.0
        %2884 = vmatmul.mubr.f32.gmra.mrb[0].mxu0 %v2694
        %v2885 = vpop.f32.mrb[0].mxu0
        %v2886 = vadd.f32 %v2752, %v2885
        %v2887 = vpop.f32.mrb[0].mxu0
        %2888 = vmatprep.mubr.f32.mxu0 0.0
        %2889 = vmatmul.mubr.f32.gmra.mrb[0].mxu0 %v2695
        %v2890 = vpop.f32.mrb[0].mxu0
        %v2891 = vadd.f32 %v2752, %v2890
        %v2892 = vpop.f32.mrb[0].mxu0
        %2893 = vmatprep.mubr.f32.mxu0 0.0
        %2894 = vmatmul.mubr.f32.gmra.mrb[0].mxu0 %v2696
        %v2895 = vpop.f32.mrb[0].mxu0
        %v2896 = vadd.f32 %v2752, %v2895
        %v2897 = vpop.f32.mrb[0].mxu0
        %2898 = vmatprep.mubr.f32.mxu0 0.0
        %2899 = vmatmul.mubr.f32.gmra.mrb[0].mxu0 %v2697
        %v2900 = vpop.f32.mrb[0].mxu0
        %v2901 = vadd.f32 %v2752, %v2900
        %v2902 = vpop.f32.mrb[0].mxu0
        %2903 = vmatprep.mubr.f32.mxu0 0.0
        %2904 = vmatmul.mubr.f32.gmra.mrb[0].mxu0 %v2698
        %v2905 = vpop.f32.mrb[0].mxu0
        %v2906 = vadd.f32 %v2752, %v2905
        %v2907 = vpop.f32.mrb[0].mxu0
        %2908 = vmatprep.mubr.f32.mxu0 0.0
        %2909 = vmatmul.mubr.f32.gmra.mrb[0].mxu0 %v2699
        %v2910 = vpop.f32.mrb[0].mxu0
        %v2911 = vadd.f32 %v2752, %v2910
        %v2912 = vpop.f32.mrb[0].mxu0
        %2913 = vmatprep.mubr.f32.mxu0 0.0
        %2914 = vmatmul.mubr.f32.gmra.mrb[0].mxu0 %v2700
        %v2915 = vpop.f32.mrb[0].mxu0
        %v2916 = vadd.f32 %v2752, %v2915
        %v2917 = vpop.f32.mrb[0].mxu0
        %2918 = vmatprep.mubr.f32.mxu0 0.0
        %2919 = vmatmul.mubr.f32.gmra.mrb[0].mxu0 %v2701
        %v2920 = vpop.f32.mrb[0].mxu0
        %v2921 = vadd.f32 %v2752, %v2920
        %v2922 = vpop.f32.mrb[0].mxu0
        %2923 = vmatprep.mubr.f32.mxu0 0.0
        %2924 = vmatmul.mubr.f32.gmra.mrb[0].mxu0 %v2702
        %v2925 = vpop.f32.mrb[0].mxu0
        %v2926 = vadd.f32 %v2752, %v2925
        %v2927 = vpop.f32.mrb[0].mxu0
        %2928 = vmatprep.mubr.f32.mxu0 0.0
        %2929 = vmatmul.mubr.f32.gmra.mrb[0].mxu0 %v2703
        %v2930 = vpop.f32.mrb[0].mxu0
        %v2931 = vadd.f32 %v2752, %v2930
        %v2932 = vpop.f32.mrb[0].mxu0
        %2933 = vmatprep.mubr.f32.mxu0 0.0
        %2934 = vmatmul.mubr.f32.gmra.mrb[0].mxu0 %v2704
        %v2935 = vpop.f32.mrb[0].mxu0
        %v2936 = vadd.f32 %v2752, %v2935
        %v2937 = vpop.f32.mrb[0].mxu0
        %2938 = vmatprep.mubr.f32.mxu0 0.0
        %2939 = vmatmul.mubr.f32.gmra.mrb[0].mxu0 %v2705
        %v2940 = vpop.f32.mrb[0].mxu0
        %v2941 = vadd.f32 %v2752, %v2940
        %v2942 = vpop.f32.mrb[0].mxu0
        %2943 = vmatprep.mubr.f32.mxu0 0.0
        %2944 = vmatmul.mubr.f32.gmra.mrb[0].mxu0 %v2706
        %v2945 = vpop.f32.mrb[0].mxu0
        %v2946 = vadd.f32 %v2752, %v2945
        %v2947 = vpop.f32.mrb[0].mxu0
        %2948 = vmatprep.mubr.f32.mxu0 0.0
        %2949 = vmatmul.mubr.f32.gmra.mrb[0].mxu0 %v2707
        %v2950 = vpop.f32.mrb[0].mxu0
        %v2951 = vadd.f32 %v2752, %v2950
        %v2952 = vpop.f32.mrb[0].mxu0
        %2953 = vmatprep.mubr.f32.mxu0 0.0
        %2954 = vmatmul.mubr.f32.gmra.mrb[0].mxu0 %v2708
        %v2955 = vpop.f32.mrb[0].mxu0
        %v2956 = vadd.f32 %v2752, %v2955
        %v2957 = vpop.f32.mrb[0].mxu0
        %2958 = vmatprep.mubr.f32.mxu0 0.0
        %2959 = vmatmul.mubr.f32.gmra.mrb[0].mxu0 %v2709
        %v2960 = vpop.f32.mrb[0].mxu0
        %v2961 = vadd.f32 %v2752, %v2960
        %v2962 = vpop.f32.mrb[0].mxu0
        %2963 = vmatprep.mubr.f32.mxu0 0.0
        %2964 = vmatmul.mubr.f32.gmra.mrb[0].mxu0 %v2710
        %v2965 = vpop.f32.mrb[0].mxu0
        %v2966 = vadd.f32 %v2752, %v2965
        %v2967 = vpop.f32.mrb[0].mxu0
        %2968 = vmatprep.mubr.f32.mxu0 0.0
        %2969 = vmatmul.mubr.f32.gmra.mrb[0].mxu0 %v2711
        %v2970 = vpop.f32.mrb[0].mxu0
        %v2971 = vadd.f32 %v2752, %v2970
        %v2972 = vpop.f32.mrb[0].mxu0
        %2973 = vmatprep.mubr.f32.mxu0 0.0
        %2974 = vmatmul.mubr.f32.gmra.mrb[0].mxu0 %v2712
        %v2975 = vpop.f32.mrb[0].mxu0
        %v2976 = vadd.f32 %v2752, %v2975
        %v2977 = vpop.f32.mrb[0].mxu0
        %2978 = vmatprep.mubr.f32.mxu0 0.0
        %2979 = vmatmul.mubr.f32.gmra.mrb[0].mxu0 %v2713
        %v2980 = vpop.f32.mrb[0].mxu0
        %v2981 = vadd.f32 %v2752, %v2980
        %v2982 = vpop.f32.mrb[0].mxu0
        %2983 = vmatprep.mubr.f32.mxu0 0.0
        %2984 = vmatmul.mubr.f32.gmra.mrb[0].mxu0 %v2714
        %v2985 = vpop.f32.mrb[0].mxu0
        %v2986 = vadd.f32 %v2752, %v2985
        %v2987 = vpop.f32.mrb[0].mxu0
        %2988 = vmatprep.mubr.f32.mxu0 0.0
        %2989 = vmatmul.mubr.f32.gmra.mrb[0].mxu0 %v2715
        %v2990 = vpop.f32.mrb[0].mxu0
        %v2991 = vadd.f32 %v2752, %v2990
        %v2992 = vpop.f32.mrb[0].mxu0
        %2993 = vmatprep.mubr.f32.mxu0 0.0
        %2994 = vmatmul.mubr.f32.gmra.mrb[0].mxu0 %v2716
        %v2995 = vpop.f32.mrb[0].mxu0
        %v2996 = vadd.f32 %v2752, %v2995
        %v2997 = vpop.f32.mrb[0].mxu0
        %2998 = vmatprep.mubr.f32.mxu0 0.0
        %2999 = vmatmul.mubr.f32.gmra.mrb[0].mxu0 %v2717
        %v3000 = vpop.f32.mrb[0].mxu0
        %v3001 = vadd.f32 %v2752, %v3000
        %v3002 = vpop.f32.mrb[0].mxu0
        %3003 = vmatprep.mubr.f32.mxu0 0.0
        %3004 = vmatmul.mubr.f32.gmra.mrb[0].mxu0 %v2718
        %v3005 = vpop.f32.mrb[0].mxu0
        %v3006 = vadd.f32 %v2752, %v3005
        %v3007 = vpop.f32.mrb[0].mxu0
        %3008 = vmatprep.mubr.f32.mxu0 0.0
        %3009 = vmatmul.mubr.f32.gmra.mrb[0].mxu0 %v2719
        %v3010 = vpop.f32.mrb[0].mxu0
        %v3011 = vadd.f32 %v2752, %v3010
        %v3012 = vpop.f32.mrb[0].mxu0
        %3013 = vmatprep.mubr.f32.mxu0 0.0
        %3014 = vmatmul.mubr.f32.gmra.mrb[0].mxu0 %v2720
        %v3015 = vpop.f32.mrb[0].mxu0
        %v3016 = vadd.f32 %v2752, %v3015
        %v3017 = vpop.f32.mrb[0].mxu0
        %3018 = vmatprep.mubr.f32.mxu0 0.0
        %3019 = vmatmul.mubr.f32.gmra.mrb[0].mxu0 %v2721
        %v3020 = vpop.f32.mrb[0].mxu0
        %v3021 = vadd.f32 %v2752, %v3020
        %v3022 = vpop.f32.mrb[0].mxu0
        %3023 = vmatprep.mubr.f32.mxu0 0.0
        %3024 = vmatmul.mubr.f32.gmra.mrb[0].mxu0 %v2722
        %v3025 = vpop.f32.mrb[0].mxu0
        %v3026 = vadd.f32 %v2752, %v3025
        %v3027 = vpop.f32.mrb[0].mxu0
        %3028 = vmatprep.mubr.f32.mxu0 0.0
        %3029 = vmatmul.mubr.f32.gmra.mrb[0].mxu0 %v2723
        %v3030 = vpop.f32.mrb[0].mxu0
        %v3031 = vadd.f32 %v2752, %v3030
        %v3032 = vpop.f32.mrb[0].mxu0
        %3033 = vmatprep.mubr.f32.mxu0 0.0
        %3034 = vmatmul.mubr.f32.gmra.mrb[0].mxu0 %v2724
        %v3035 = vpop.f32.mrb[0].mxu0
        %v3036 = vadd.f32 %v2752, %v3035
        %v3037 = vpop.f32.mrb[0].mxu0
        %3038 = vmatprep.mubr.f32.mxu0 0.0
        %3039 = vmatmul.mubr.f32.gmra.mrb[0].mxu0 %v2725
        %v3040 = vpop.f32.mrb[0].mxu0
        %v3041 = vadd.f32 %v2752, %v3040
        %v3042 = vpop.f32.mrb[0].mxu0
        %3043 = vmatprep.mubr.f32.mxu0 0.0
        %3044 = vmatmul.mubr.f32.gmra.mrb[0].mxu0 %v2726
        %v3045 = vpop.f32.mrb[0].mxu0
        %v3046 = vadd.f32 %v2752, %v3045
        %v3047 = vpop.f32.mrb[0].mxu0
        %3048 = vmatprep.mubr.f32.mxu0 0.0
        %3049 = vmatmul.mubr.f32.gmra.mrb[0].mxu0 %v2727
        %v3050 = vpop.f32.mrb[0].mxu0
        %v3051 = vadd.f32 %v2752, %v3050
        %v3052 = vpop.f32.mrb[0].mxu0
        %3053 = vmatprep.mubr.f32.mxu0 0.0
        %3054 = vmatmul.mubr.f32.gmra.mrb[0].mxu0 %v2728
        %v3055 = vpop.f32.mrb[0].mxu0
        %v3056 = vadd.f32 %v2752, %v3055
        %v3057 = vpop.f32.mrb[0].mxu0
        %3058 = vmatprep.mubr.f32.mxu0 0.0
        %3059 = vmatmul.mubr.f32.gmra.mrb[0].mxu0 %v2729
        %v3060 = vpop.f32.mrb[0].mxu0
        %v3061 = vadd.f32 %v2752, %v3060
        %v3062 = vpop.f32.mrb[0].mxu0
        %3063 = vmatprep.mubr.f32.mxu0 0.0
        %3064 = vmatmul.mubr.f32.gmra.mrb[0].mxu0 %v2730
        %v3065 = vpop.f32.mrb[0].mxu0
        %v3066 = vadd.f32 %v2752, %v3065
        %v3067 = vpop.f32.mrb[0].mxu0
        %3068 = vdwg.mxu0
        %v3069 = vxor.u32 %v2821, 2147483648
        %v3070 = vxor.u32 %v2826, 2147483648
        %v3071 = vxor.u32 %v2831, 2147483648
        %v3072 = vxor.u32 %v2836, 2147483648
        %v3073 = vxor.u32 %v2841, 2147483648
        %v3074 = vxor.u32 %v2846, 2147483648
        %v3075 = vxor.u32 %v2851, 2147483648
        %v3076 = vxor.u32 %v2856, 2147483648
        %v3077 = vxor.u32 %v2861, 2147483648
        %v3078 = vxor.u32 %v2866, 2147483648
        %v3079 = vxor.u32 %v2871, 2147483648
        %v3080 = vxor.u32 %v2876, 2147483648
        %v3081 = vxor.u32 %v2881, 2147483648
        %v3082 = vxor.u32 %v2886, 2147483648
        %v3083 = vxor.u32 %v2891, 2147483648
        %v3084 = vxor.u32 %v2896, 2147483648
        %v3085 = vxor.u32 %v2901, 2147483648
        %v3086 = vxor.u32 %v2906, 2147483648
        %v3087 = vxor.u32 %v2911, 2147483648
        %v3088 = vxor.u32 %v2916, 2147483648
        %v3089 = vxor.u32 %v2921, 2147483648
        %v3090 = vxor.u32 %v2926, 2147483648
        %v3091 = vxor.u32 %v2931, 2147483648
        %v3092 = vxor.u32 %v2936, 2147483648
        %v3093 = vxor.u32 %v2941, 2147483648
        %v3094 = vxor.u32 %v2946, 2147483648
        %v3095 = vxor.u32 %v2951, 2147483648
        %v3096 = vxor.u32 %v2956, 2147483648
        %v3097 = vxor.u32 %v2961, 2147483648
        %v3098 = vxor.u32 %v2966, 2147483648
        %v3099 = vxor.u32 %v2971, 2147483648
        %v3100 = vxor.u32 %v2976, 2147483648
        %v3101 = vxor.u32 %v2981, 2147483648
        %v3102 = vxor.u32 %v2986, 2147483648
        %v3103 = vxor.u32 %v2991, 2147483648
        %v3104 = vxor.u32 %v2996, 2147483648
        %v3105 = vxor.u32 %v3001, 2147483648
        %v3106 = vxor.u32 %v3006, 2147483648
        %v3107 = vxor.u32 %v3011, 2147483648
        %v3108 = vxor.u32 %v3016, 2147483648
        %v3109 = vxor.u32 %v3021, 2147483648
        %v3110 = vxor.u32 %v3026, 2147483648
        %v3111 = vxor.u32 %v3031, 2147483648
        %v3112 = vxor.u32 %v3036, 2147483648
        %v3113 = vxor.u32 %v3041, 2147483648
        %v3114 = vxor.u32 %v3046, 2147483648
        %v3115 = vxor.u32 %v3051, 2147483648
        %v3116 = vxor.u32 %v3056, 2147483648
        %v3117 = vxor.u32 %v3061, 2147483648
        %v3118 = vxor.u32 %v3066, 2147483648
        %v3119 = vmul.f32 %v3069, 1.442695
        %v3120 = vpow.pop %v3119
        %v3121 = vmul.f32 %v3070, 1.442695
        %v3122 = vpow.pop %v3121
        %v3123 = vmul.f32 %v3071, 1.442695
        %v3124 = vpow.pop %v3123
        %v3125 = vmul.f32 %v3072, 1.442695
        %v3126 = vpow.pop %v3125
        %v3127 = vmul.f32 %v3073, 1.442695
        %v3128 = vpow.pop %v3127
        %v3129 = vmul.f32 %v3074, 1.442695
        %v3130 = vpow.pop %v3129
        %v3131 = vmul.f32 %v3075, 1.442695
        %v3132 = vpow.pop %v3131
        %v3133 = vmul.f32 %v3076, 1.442695
        %v3134 = vpow.pop %v3133
        %v3135 = vmul.f32 %v3077, 1.442695
        %v3136 = vpow.pop %v3135
        %v3137 = vmul.f32 %v3078, 1.442695
        %v3138 = vpow.pop %v3137
        %v3139 = vmul.f32 %v3079, 1.442695
        %v3140 = vpow.pop %v3139
        %v3141 = vmul.f32 %v3080, 1.442695
        %v3142 = vpow.pop %v3141
        %v3143 = vmul.f32 %v3081, 1.442695
        %v3144 = vpow.pop %v3143
        %v3145 = vmul.f32 %v3082, 1.442695
        %v3146 = vpow.pop %v3145
        %v3147 = vmul.f32 %v3083, 1.442695
        %v3148 = vpow.pop %v3147
        %v3149 = vmul.f32 %v3084, 1.442695
        %v3150 = vpow.pop %v3149
        %v3151 = vmul.f32 %v3085, 1.442695
        %v3152 = vpow.pop %v3151
        %v3153 = vmul.f32 %v3086, 1.442695
        %v3154 = vpow.pop %v3153
        %v3155 = vmul.f32 %v3087, 1.442695
        %v3156 = vpow.pop %v3155
        %v3157 = vmul.f32 %v3088, 1.442695
        %v3158 = vpow.pop %v3157
        %v3159 = vmul.f32 %v3089, 1.442695
        %v3160 = vpow.pop %v3159
        %v3161 = vmul.f32 %v3090, 1.442695
        %v3162 = vpow.pop %v3161
        %v3163 = vmul.f32 %v3091, 1.442695
        %v3164 = vpow.pop %v3163
        %v3165 = vmul.f32 %v3092, 1.442695
        %v3166 = vpow.pop %v3165
        %v3167 = vmul.f32 %v3093, 1.442695
        %v3168 = vpow.pop %v3167
        %v3169 = vmul.f32 %v3094, 1.442695
        %v3170 = vpow.pop %v3169
        %v3171 = vmul.f32 %v3095, 1.442695
        %v3172 = vpow.pop %v3171
        %v3173 = vmul.f32 %v3096, 1.442695
        %v3174 = vpow.pop %v3173
        %v3175 = vmul.f32 %v3097, 1.442695
        %v3176 = vpow.pop %v3175
        %v3177 = vmul.f32 %v3098, 1.442695
        %v3178 = vpow.pop %v3177
        %v3179 = vmul.f32 %v3099, 1.442695
        %v3180 = vpow.pop %v3179
        %v3181 = vmul.f32 %v3100, 1.442695
        %v3182 = vpow.pop %v3181
        %v3183 = vmul.f32 %v3101, 1.442695
        %v3184 = vpow.pop %v3183
        %v3185 = vmul.f32 %v3102, 1.442695
        %v3186 = vpow.pop %v3185
        %v3187 = vmul.f32 %v3103, 1.442695
        %v3188 = vpow.pop %v3187
        %v3189 = vmul.f32 %v3104, 1.442695
        %v3190 = vpow.pop %v3189
        %v3191 = vmul.f32 %v3105, 1.442695
        %v3192 = vpow.pop %v3191
        %v3193 = vmul.f32 %v3106, 1.442695
        %v3194 = vpow.pop %v3193
        %v3195 = vmul.f32 %v3107, 1.442695
        %v3196 = vpow.pop %v3195
        %v3197 = vmul.f32 %v3108, 1.442695
        %v3198 = vpow.pop %v3197
        %v3199 = vmul.f32 %v3109, 1.442695
        %v3200 = vpow.pop %v3199
        %v3201 = vmul.f32 %v3110, 1.442695
        %v3202 = vpow.pop %v3201
        %v3203 = vmul.f32 %v3111, 1.442695
        %v3204 = vpow.pop %v3203
        %v3205 = vmul.f32 %v3112, 1.442695
        %v3206 = vpow.pop %v3205
        %v3207 = vmul.f32 %v3113, 1.442695
        %v3208 = vpow.pop %v3207
        %v3209 = vmul.f32 %v3114, 1.442695
        %v3210 = vpow.pop %v3209
        %v3211 = vmul.f32 %v3115, 1.442695
        %v3212 = vpow.pop %v3211
        %v3213 = vmul.f32 %v3116, 1.442695
        %v3214 = vpow.pop %v3213
        %v3215 = vmul.f32 %v3117, 1.442695
        %v3216 = vpow.pop %v3215
        %v3217 = vmul.f32 %v3118, 1.442695
        %v3218 = vpow.pop %v3217
        %v3219 = vadd.f32 %v3120, 1.0
        %v3220 = vadd.f32 %v3122, 1.0
        %v3221 = vadd.f32 %v3124, 1.0
        %v3222 = vadd.f32 %v3126, 1.0
        %v3223 = vadd.f32 %v3128, 1.0
        %v3224 = vadd.f32 %v3130, 1.0
        %v3225 = vadd.f32 %v3132, 1.0
        %v3226 = vadd.f32 %v3134, 1.0
        %v3227 = vadd.f32 %v3136, 1.0
        %v3228 = vadd.f32 %v3138, 1.0
        %v3229 = vadd.f32 %v3140, 1.0
        %v3230 = vadd.f32 %v3142, 1.0
        %v3231 = vadd.f32 %v3144, 1.0
        %v3232 = vadd.f32 %v3146, 1.0
        %v3233 = vadd.f32 %v3148, 1.0
        %v3234 = vadd.f32 %v3150, 1.0
        %v3235 = vadd.f32 %v3152, 1.0
        %v3236 = vadd.f32 %v3154, 1.0
        %v3237 = vadd.f32 %v3156, 1.0
        %v3238 = vadd.f32 %v3158, 1.0
        %v3239 = vadd.f32 %v3160, 1.0
        %v3240 = vadd.f32 %v3162, 1.0
        %v3241 = vadd.f32 %v3164, 1.0
        %v3242 = vadd.f32 %v3166, 1.0
        %v3243 = vadd.f32 %v3168, 1.0
        %v3244 = vadd.f32 %v3170, 1.0
        %v3245 = vadd.f32 %v3172, 1.0
        %v3246 = vadd.f32 %v3174, 1.0
        %v3247 = vadd.f32 %v3176, 1.0
        %v3248 = vadd.f32 %v3178, 1.0
        %v3249 = vadd.f32 %v3180, 1.0
        %v3250 = vadd.f32 %v3182, 1.0
        %v3251 = vadd.f32 %v3184, 1.0
        %v3252 = vadd.f32 %v3186, 1.0
        %v3253 = vadd.f32 %v3188, 1.0
        %v3254 = vadd.f32 %v3190, 1.0
        %v3255 = vadd.f32 %v3192, 1.0
        %v3256 = vadd.f32 %v3194, 1.0
        %v3257 = vadd.f32 %v3196, 1.0
        %v3258 = vadd.f32 %v3198, 1.0
        %v3259 = vadd.f32 %v3200, 1.0
        %v3260 = vadd.f32 %v3202, 1.0
        %v3261 = vadd.f32 %v3204, 1.0
        %v3262 = vadd.f32 %v3206, 1.0
        %v3263 = vadd.f32 %v3208, 1.0
        %v3264 = vadd.f32 %v3210, 1.0
        %v3265 = vadd.f32 %v3212, 1.0
        %v3266 = vadd.f32 %v3214, 1.0
        %v3267 = vadd.f32 %v3216, 1.0
        %v3268 = vadd.f32 %v3218, 1.0
        %v3269 = vrcp.pop %v3219
        %v3270 = vmul.f32 1.0, %v3269
        %v3271 = vrcp.pop %v3220
        %v3272 = vmul.f32 1.0, %v3271
        %v3273 = vrcp.pop %v3221
        %v3274 = vmul.f32 1.0, %v3273
        %v3275 = vrcp.pop %v3222
        %v3276 = vmul.f32 1.0, %v3275
        %v3277 = vrcp.pop %v3223
        %v3278 = vmul.f32 1.0, %v3277
        %v3279 = vrcp.pop %v3224
        %v3280 = vmul.f32 1.0, %v3279
        %v3281 = vrcp.pop %v3225
        %v3282 = vmul.f32 1.0, %v3281
        %v3283 = vrcp.pop %v3226
        %v3284 = vmul.f32 1.0, %v3283
        %v3285 = vrcp.pop %v3227
        %v3286 = vmul.f32 1.0, %v3285
        %v3287 = vrcp.pop %v3228
        %v3288 = vmul.f32 1.0, %v3287
        %v3289 = vrcp.pop %v3229
        %v3290 = vmul.f32 1.0, %v3289
        %v3291 = vrcp.pop %v3230
        %v3292 = vmul.f32 1.0, %v3291
        %v3293 = vrcp.pop %v3231
        %v3294 = vmul.f32 1.0, %v3293
        %v3295 = vrcp.pop %v3232
        %v3296 = vmul.f32 1.0, %v3295
        %v3297 = vrcp.pop %v3233
        %v3298 = vmul.f32 1.0, %v3297
        %v3299 = vrcp.pop %v3234
        %v3300 = vmul.f32 1.0, %v3299
        %v3301 = vrcp.pop %v3235
        %v3302 = vmul.f32 1.0, %v3301
        %v3303 = vrcp.pop %v3236
        %v3304 = vmul.f32 1.0, %v3303
        %v3305 = vrcp.pop %v3237
        %v3306 = vmul.f32 1.0, %v3305
        %v3307 = vrcp.pop %v3238
        %v3308 = vmul.f32 1.0, %v3307
        %v3309 = vrcp.pop %v3239
        %v3310 = vmul.f32 1.0, %v3309
        %v3311 = vrcp.pop %v3240
        %v3312 = vmul.f32 1.0, %v3311
        %v3313 = vrcp.pop %v3241
        %v3314 = vmul.f32 1.0, %v3313
        %v3315 = vrcp.pop %v3242
        %v3316 = vmul.f32 1.0, %v3315
        %v3317 = vrcp.pop %v3243
        %v3318 = vmul.f32 1.0, %v3317
        %v3319 = vrcp.pop %v3244
        %v3320 = vmul.f32 1.0, %v3319
        %v3321 = vrcp.pop %v3245
        %v3322 = vmul.f32 1.0, %v3321
        %v3323 = vrcp.pop %v3246
        %v3324 = vmul.f32 1.0, %v3323
        %v3325 = vrcp.pop %v3247
        %v3326 = vmul.f32 1.0, %v3325
        %v3327 = vrcp.pop %v3248
        %v3328 = vmul.f32 1.0, %v3327
        %v3329 = vrcp.pop %v3249
        %v3330 = vmul.f32 1.0, %v3329
        %v3331 = vrcp.pop %v3250
        %v3332 = vmul.f32 1.0, %v3331
        %v3333 = vrcp.pop %v3251
        %v3334 = vmul.f32 1.0, %v3333
        %v3335 = vrcp.pop %v3252
        %v3336 = vmul.f32 1.0, %v3335
        %v3337 = vrcp.pop %v3253
        %v3338 = vmul.f32 1.0, %v3337
        %v3339 = vrcp.pop %v3254
        %v3340 = vmul.f32 1.0, %v3339
        %v3341 = vrcp.pop %v3255
        %v3342 = vmul.f32 1.0, %v3341
        %v3343 = vrcp.pop %v3256
        %v3344 = vmul.f32 1.0, %v3343
        %v3345 = vrcp.pop %v3257
        %v3346 = vmul.f32 1.0, %v3345
        %v3347 = vrcp.pop %v3258
        %v3348 = vmul.f32 1.0, %v3347
        %v3349 = vrcp.pop %v3259
        %v3350 = vmul.f32 1.0, %v3349
        %v3351 = vrcp.pop %v3260
        %v3352 = vmul.f32 1.0, %v3351
        %v3353 = vrcp.pop %v3261
        %v3354 = vmul.f32 1.0, %v3353
        %v3355 = vrcp.pop %v3262
        %v3356 = vmul.f32 1.0, %v3355
        %v3357 = vrcp.pop %v3263
        %v3358 = vmul.f32 1.0, %v3357
        %v3359 = vrcp.pop %v3264
        %v3360 = vmul.f32 1.0, %v3359
        %v3361 = vrcp.pop %v3265
        %v3362 = vmul.f32 1.0, %v3361
        %v3363 = vrcp.pop %v3266
        %v3364 = vmul.f32 1.0, %v3363
        %v3365 = vrcp.pop %v3267
        %v3366 = vmul.f32 1.0, %v3365
        %v3367 = vrcp.pop %v3268
        %v3368 = vmul.f32 1.0, %v3367
        %v3369 = vmul.f32 %v2821, %v3270
        %v3370 = vmul.f32 %v2826, %v3272
        %v3371 = vmul.f32 %v2831, %v3274
        %v3372 = vmul.f32 %v2836, %v3276
        %v3373 = vmul.f32 %v2841, %v3278
        %v3374 = vmul.f32 %v2846, %v3280
        %v3375 = vmul.f32 %v2851, %v3282
        %v3376 = vmul.f32 %v2856, %v3284
        %v3377 = vmul.f32 %v2861, %v3286
        %v3378 = vmul.f32 %v2866, %v3288
        %v3379 = vmul.f32 %v2871, %v3290
        %v3380 = vmul.f32 %v2876, %v3292
        %v3381 = vmul.f32 %v2881, %v3294
        %v3382 = vmul.f32 %v2886, %v3296
        %v3383 = vmul.f32 %v2891, %v3298
        %v3384 = vmul.f32 %v2896, %v3300
        %v3385 = vmul.f32 %v2901, %v3302
        %v3386 = vmul.f32 %v2906, %v3304
        %v3387 = vmul.f32 %v2911, %v3306
        %v3388 = vmul.f32 %v2916, %v3308
        %v3389 = vmul.f32 %v2921, %v3310
        %v3390 = vmul.f32 %v2926, %v3312
        %v3391 = vmul.f32 %v2931, %v3314
        %v3392 = vmul.f32 %v2936, %v3316
        %v3393 = vmul.f32 %v2941, %v3318
        %v3394 = vmul.f32 %v2946, %v3320
        %v3395 = vmul.f32 %v2951, %v3322
        %v3396 = vmul.f32 %v2956, %v3324
        %v3397 = vmul.f32 %v2961, %v3326
        %v3398 = vmul.f32 %v2966, %v3328
        %v3399 = vmul.f32 %v2971, %v3330
        %v3400 = vmul.f32 %v2976, %v3332
        %v3401 = vmul.f32 %v2981, %v3334
        %v3402 = vmul.f32 %v2986, %v3336
        %v3403 = vmul.f32 %v2991, %v3338
        %v3404 = vmul.f32 %v2996, %v3340
        %v3405 = vmul.f32 %v3001, %v3342
        %v3406 = vmul.f32 %v3006, %v3344
        %v3407 = vmul.f32 %v3011, %v3346
        %v3408 = vmul.f32 %v3016, %v3348
        %v3409 = vmul.f32 %v3021, %v3350
        %v3410 = vmul.f32 %v3026, %v3352
        %v3411 = vmul.f32 %v3031, %v3354
        %v3412 = vmul.f32 %v3036, %v3356
        %v3413 = vmul.f32 %v3041, %v3358
        %v3414 = vmul.f32 %v3046, %v3360
        %v3415 = vmul.f32 %v3051, %v3362
        %v3416 = vmul.f32 %v3056, %v3364
        %v3417 = vmul.f32 %v3061, %v3366
        %v3418 = vmul.f32 %v3066, %v3368
        %v3419 = vld [vmem:[%s8] sm:$0xff]
        %v3420 = vld [vmem:[%s8 + $0x8] sm:$0xff]
        %v3421 = vld [vmem:[%s8 + $0x10] sm:$0xff]
        %v3422 = vld [vmem:[%s8 + $0x18] sm:$0xff]
        %v3423 = vld [vmem:[%s8 + $0x20] sm:$0xff]
        %v3424 = vld [vmem:[%s8 + $0x28] sm:$0xff]
        %v3425 = vld [vmem:[%s8 + $0x30] sm:$0xff]
        %v3426 = vld [vmem:[%s8 + $0x38] sm:$0xff]
        %v3427 = vld [vmem:[%s9] sm:$0x1]
        %v3429 = vlaneseq
        %v3430 = vshrl.u32 %v3429, 7
        %v3431 = vsub.s32 0, %v3430
        %v3432 = vrot.slane %v3427, %v3431
        %vm3434 = vcmask 523264
        %v3436 = vsel %vm3434, %v3369, 0
        %v3439 = vsel %vm3434, %v3370, 0
        %v3442 = vsel %vm3434, %v3371, 0
        %v3445 = vsel %vm3434, %v3372, 0
        %v3448 = vsel %vm3434, %v3373, 0
        %v3451 = vsel %vm3434, %v3374, 0
        %v3454 = vsel %vm3434, %v3375, 0
        %v3457 = vsel %vm3434, %v3376, 0
        %v3460 = vsel %vm3434, %v3377, 0
        %v3463 = vsel %vm3434, %v3378, 0
        %v3466 = vsel %vm3434, %v3379, 0
        %v3469 = vsel %vm3434, %v3380, 0
        %v3472 = vsel %vm3434, %v3381, 0
        %v3475 = vsel %vm3434, %v3382, 0
        %v3478 = vsel %vm3434, %v3383, 0
        %v3481 = vsel %vm3434, %v3384, 0
        %v3484 = vsel %vm3434, %v3385, 0
        %v3487 = vsel %vm3434, %v3386, 0
        %v3490 = vsel %vm3434, %v3387, 0
        %v3493 = vsel %vm3434, %v3388, 0
        %v3496 = vsel %vm3434, %v3389, 0
        %v3499 = vsel %vm3434, %v3390, 0
        %v3502 = vsel %vm3434, %v3391, 0
        %v3505 = vsel %vm3434, %v3392, 0
        %v3508 = vsel %vm3434, %v3393, 0
        %v3511 = vsel %vm3434, %v3394, 0
        %v3514 = vsel %vm3434, %v3395, 0
        %v3517 = vsel %vm3434, %v3396, 0
        %v3520 = vsel %vm3434, %v3397, 0
        %v3523 = vsel %vm3434, %v3398, 0
        %v3526 = vsel %vm3434, %v3399, 0
        %v3529 = vsel %vm3434, %v3400, 0
        %v3532 = vsel %vm3434, %v3401, 0
        %v3535 = vsel %vm3434, %v3402, 0
        %v3538 = vsel %vm3434, %v3403, 0
        %v3541 = vsel %vm3434, %v3404, 0
        %v3544 = vsel %vm3434, %v3405, 0
        %v3547 = vsel %vm3434, %v3406, 0
        %v3550 = vsel %vm3434, %v3407, 0
        %v3553 = vsel %vm3434, %v3408, 0
        %v3556 = vsel %vm3434, %v3409, 0
        %v3559 = vsel %vm3434, %v3410, 0
        %v3562 = vsel %vm3434, %v3411, 0
        %v3565 = vsel %vm3434, %v3412, 0
        %v3568 = vsel %vm3434, %v3413, 0
        %v3571 = vsel %vm3434, %v3414, 0
        %v3574 = vsel %vm3434, %v3415, 0
        %v3577 = vsel %vm3434, %v3416, 0
        %v3580 = vsel %vm3434, %v3417, 0
        %v3583 = vsel %vm3434, %v3418, 0
        %3585 = vmatprep.subr.mxu0 0.0
        %3586 = vmatpush1.msra.mxu0 %v3419
        %3587 = vmatprep.subr.mxu0 0.0
        %3588 = vmatpush1.msra.mxu0 %v3420
        %3589 = vmatprep.subr.mxu0 0.0
        %3590 = vmatpush1.msra.mxu0 %v3421
        %3591 = vmatprep.subr.mxu0 0.0
        %3592 = vmatpush1.msra.mxu0 %v3422
        %3593 = vmatprep.subr.mxu0 0.0
        %3594 = vmatpush1.msra.mxu0 %v3423
        %3595 = vmatprep.subr.mxu0 0.0
        %3596 = vmatpush1.msra.mxu0 %v3424
        %3597 = vmatprep.subr.mxu0 0.0
        %3598 = vmatpush1.msra.mxu0 %v3425
        %3599 = vmatprep.subr.mxu0 0.0
        %3600 = vmatpush1.msra.mxu0 %v3426
        %3601 = vmatprep.subr.mxu0 0.0
        %3602 = vmatpush1.msra.mxu0 0.0
        %3603 = vmatprep.subr.mxu0 0.0
        %3604 = vmatpush1.msra.mxu0 0.0
        %3605 = vmatprep.subr.mxu0 0.0
        %3606 = vmatpush1.msra.mxu0 0.0
        %3607 = vmatprep.subr.mxu0 0.0
        %3608 = vmatpush1.msra.mxu0 0.0
        %3609 = vmatprep.subr.mxu0 0.0
        %3610 = vmatpush1.msra.mxu0 0.0
        %3611 = vmatprep.subr.mxu0 0.0
        %3612 = vmatpush1.msra.mxu0 0.0
        %3613 = vmatprep.subr.mxu0 0.0
        %3614 = vmatpush1.msra.mxu0 0.0
        %3615 = vmatprep.subr.mxu0 0.0
        %3616 = vmatpush1.msra.mxu0 0.0
        %3617 = vmatprep.subr.mxu0 0.0
        %3618 = vmatpush1.msra.mxu0 0.0
        %3619 = vmatprep.subr.mxu0 0.0
        %3620 = vmatpush1.msra.mxu0 0.0
        %3621 = vmatprep.subr.mxu0 0.0
        %3622 = vmatpush1.msra.mxu0 0.0
        %3623 = vmatprep.subr.mxu0 0.0
        %3624 = vmatpush1.msra.mxu0 0.0
        %3625 = vmatprep.subr.mxu0 0.0
        %3626 = vmatpush1.msra.mxu0 0.0
        %3627 = vmatprep.subr.mxu0 0.0
        %3628 = vmatpush1.msra.mxu0 0.0
        %3629 = vmatprep.subr.mxu0 0.0
        %3630 = vmatpush1.msra.mxu0 0.0
        %3631 = vmatprep.subr.mxu0 0.0
        %3632 = vmatpush1.msra.mxu0 0.0
        %3633 = vmatprep.subr.mxu0 0.0
        %3634 = vmatpush1.msra.mxu0 0.0
        %3635 = vmatprep.subr.mxu0 0.0
        %3636 = vmatpush1.msra.mxu0 0.0
        %3637 = vmatprep.subr.mxu0 0.0
        %3638 = vmatpush1.msra.mxu0 0.0
        %3639 = vmatprep.subr.mxu0 0.0
        %3640 = vmatpush1.msra.mxu0 0.0
        %3641 = vmatprep.subr.mxu0 0.0
        %3642 = vmatpush1.msra.mxu0 0.0
        %3643 = vmatprep.subr.mxu0 0.0
        %3644 = vmatpush1.msra.mxu0 0.0
        %3645 = vmatprep.subr.mxu0 0.0
        %3646 = vmatpush1.msra.mxu0 0.0
        %3647 = vmatprep.subr.mxu0 0.0
        %3648 = vmatpush1.msra.mxu0 0.0
        %3649 = vmatprep.mubr.f32.mxu0 0.0
        %3650 = vmatmul.mubr.f32.gmra.mrb[0].mxu0 %v3436
        %v3651 = vpop.f32.mrb[0].mxu0
        %v3652 = vadd.f32 %v3432, %v3651
        %v3653 = vpop.f32.mrb[0].mxu0
        %3654 = vmatprep.mubr.f32.mxu0 0.0
        %3655 = vmatmul.mubr.f32.gmra.mrb[0].mxu0 %v3439
        %v3656 = vpop.f32.mrb[0].mxu0
        %v3657 = vadd.f32 %v3432, %v3656
        %v3658 = vpop.f32.mrb[0].mxu0
        %3659 = vmatprep.mubr.f32.mxu0 0.0
        %3660 = vmatmul.mubr.f32.gmra.mrb[0].mxu0 %v3442
        %v3661 = vpop.f32.mrb[0].mxu0
        %v3662 = vadd.f32 %v3432, %v3661
        %v3663 = vpop.f32.mrb[0].mxu0
        %3664 = vmatprep.mubr.f32.mxu0 0.0
        %3665 = vmatmul.mubr.f32.gmra.mrb[0].mxu0 %v3445
        %v3666 = vpop.f32.mrb[0].mxu0
        %v3667 = vadd.f32 %v3432, %v3666
        %v3668 = vpop.f32.mrb[0].mxu0
        %3669 = vmatprep.mubr.f32.mxu0 0.0
        %3670 = vmatmul.mubr.f32.gmra.mrb[0].mxu0 %v3448
        %v3671 = vpop.f32.mrb[0].mxu0
        %v3672 = vadd.f32 %v3432, %v3671
        %v3673 = vpop.f32.mrb[0].mxu0
        %3674 = vmatprep.mubr.f32.mxu0 0.0
        %3675 = vmatmul.mubr.f32.gmra.mrb[0].mxu0 %v3451
        %v3676 = vpop.f32.mrb[0].mxu0
        %v3677 = vadd.f32 %v3432, %v3676
        %v3678 = vpop.f32.mrb[0].mxu0
        %3679 = vmatprep.mubr.f32.mxu0 0.0
        %3680 = vmatmul.mubr.f32.gmra.mrb[0].mxu0 %v3454
        %v3681 = vpop.f32.mrb[0].mxu0
        %v3682 = vadd.f32 %v3432, %v3681
        %v3683 = vpop.f32.mrb[0].mxu0
        %3684 = vmatprep.mubr.f32.mxu0 0.0
        %3685 = vmatmul.mubr.f32.gmra.mrb[0].mxu0 %v3457
        %v3686 = vpop.f32.mrb[0].mxu0
        %v3687 = vadd.f32 %v3432, %v3686
        %v3688 = vpop.f32.mrb[0].mxu0
        %3689 = vmatprep.mubr.f32.mxu0 0.0
        %3690 = vmatmul.mubr.f32.gmra.mrb[0].mxu0 %v3460
        %v3691 = vpop.f32.mrb[0].mxu0
        %v3692 = vadd.f32 %v3432, %v3691
        %v3693 = vpop.f32.mrb[0].mxu0
        %3694 = vmatprep.mubr.f32.mxu0 0.0
        %3695 = vmatmul.mubr.f32.gmra.mrb[0].mxu0 %v3463
        %v3696 = vpop.f32.mrb[0].mxu0
        %v3697 = vadd.f32 %v3432, %v3696
        %v3698 = vpop.f32.mrb[0].mxu0
        %3699 = vmatprep.mubr.f32.mxu0 0.0
        %3700 = vmatmul.mubr.f32.gmra.mrb[0].mxu0 %v3466
        %v3701 = vpop.f32.mrb[0].mxu0
        %v3702 = vadd.f32 %v3432, %v3701
        %v3703 = vpop.f32.mrb[0].mxu0
        %3704 = vmatprep.mubr.f32.mxu0 0.0
        %3705 = vmatmul.mubr.f32.gmra.mrb[0].mxu0 %v3469
        %v3706 = vpop.f32.mrb[0].mxu0
        %v3707 = vadd.f32 %v3432, %v3706
        %v3708 = vpop.f32.mrb[0].mxu0
        %3709 = vmatprep.mubr.f32.mxu0 0.0
        %3710 = vmatmul.mubr.f32.gmra.mrb[0].mxu0 %v3472
        %v3711 = vpop.f32.mrb[0].mxu0
        %v3712 = vadd.f32 %v3432, %v3711
        %v3713 = vpop.f32.mrb[0].mxu0
        %3714 = vmatprep.mubr.f32.mxu0 0.0
        %3715 = vmatmul.mubr.f32.gmra.mrb[0].mxu0 %v3475
        %v3716 = vpop.f32.mrb[0].mxu0
        %v3717 = vadd.f32 %v3432, %v3716
        %v3718 = vpop.f32.mrb[0].mxu0
        %3719 = vmatprep.mubr.f32.mxu0 0.0
        %3720 = vmatmul.mubr.f32.gmra.mrb[0].mxu0 %v3478
        %v3721 = vpop.f32.mrb[0].mxu0
        %v3722 = vadd.f32 %v3432, %v3721
        %v3723 = vpop.f32.mrb[0].mxu0
        %3724 = vmatprep.mubr.f32.mxu0 0.0
        %3725 = vmatmul.mubr.f32.gmra.mrb[0].mxu0 %v3481
        %v3726 = vpop.f32.mrb[0].mxu0
        %v3727 = vadd.f32 %v3432, %v3726
        %v3728 = vpop.f32.mrb[0].mxu0
        %3729 = vmatprep.mubr.f32.mxu0 0.0
        %3730 = vmatmul.mubr.f32.gmra.mrb[0].mxu0 %v3484
        %v3731 = vpop.f32.mrb[0].mxu0
        %v3732 = vadd.f32 %v3432, %v3731
        %v3733 = vpop.f32.mrb[0].mxu0
        %3734 = vmatprep.mubr.f32.mxu0 0.0
        %3735 = vmatmul.mubr.f32.gmra.mrb[0].mxu0 %v3487
        %v3736 = vpop.f32.mrb[0].mxu0
        %v3737 = vadd.f32 %v3432, %v3736
        %v3738 = vpop.f32.mrb[0].mxu0
        %3739 = vmatprep.mubr.f32.mxu0 0.0
        %3740 = vmatmul.mubr.f32.gmra.mrb[0].mxu0 %v3490
        %v3741 = vpop.f32.mrb[0].mxu0
        %v3742 = vadd.f32 %v3432, %v3741
        %v3743 = vpop.f32.mrb[0].mxu0
        %3744 = vmatprep.mubr.f32.mxu0 0.0
        %3745 = vmatmul.mubr.f32.gmra.mrb[0].mxu0 %v3493
        %v3746 = vpop.f32.mrb[0].mxu0
        %v3747 = vadd.f32 %v3432, %v3746
        %v3748 = vpop.f32.mrb[0].mxu0
        %3749 = vmatprep.mubr.f32.mxu0 0.0
        %3750 = vmatmul.mubr.f32.gmra.mrb[0].mxu0 %v3496
        %v3751 = vpop.f32.mrb[0].mxu0
        %v3752 = vadd.f32 %v3432, %v3751
        %v3753 = vpop.f32.mrb[0].mxu0
        %3754 = vmatprep.mubr.f32.mxu0 0.0
        %3755 = vmatmul.mubr.f32.gmra.mrb[0].mxu0 %v3499
        %v3756 = vpop.f32.mrb[0].mxu0
        %v3757 = vadd.f32 %v3432, %v3756
        %v3758 = vpop.f32.mrb[0].mxu0
        %3759 = vmatprep.mubr.f32.mxu0 0.0
        %3760 = vmatmul.mubr.f32.gmra.mrb[0].mxu0 %v3502
        %v3761 = vpop.f32.mrb[0].mxu0
        %v3762 = vadd.f32 %v3432, %v3761
        %v3763 = vpop.f32.mrb[0].mxu0
        %3764 = vmatprep.mubr.f32.mxu0 0.0
        %3765 = vmatmul.mubr.f32.gmra.mrb[0].mxu0 %v3505
        %v3766 = vpop.f32.mrb[0].mxu0
        %v3767 = vadd.f32 %v3432, %v3766
        %v3768 = vpop.f32.mrb[0].mxu0
        %3769 = vmatprep.mubr.f32.mxu0 0.0
        %3770 = vmatmul.mubr.f32.gmra.mrb[0].mxu0 %v3508
        %v3771 = vpop.f32.mrb[0].mxu0
        %v3772 = vadd.f32 %v3432, %v3771
        %v3773 = vpop.f32.mrb[0].mxu0
        %3774 = vmatprep.mubr.f32.mxu0 0.0
        %3775 = vmatmul.mubr.f32.gmra.mrb[0].mxu0 %v3511
        %v3776 = vpop.f32.mrb[0].mxu0
        %v3777 = vadd.f32 %v3432, %v3776
        %v3778 = vpop.f32.mrb[0].mxu0
        %3779 = vmatprep.mubr.f32.mxu0 0.0
        %3780 = vmatmul.mubr.f32.gmra.mrb[0].mxu0 %v3514
        %v3781 = vpop.f32.mrb[0].mxu0
        %v3782 = vadd.f32 %v3432, %v3781
        %v3783 = vpop.f32.mrb[0].mxu0
        %3784 = vmatprep.mubr.f32.mxu0 0.0
        %3785 = vmatmul.mubr.f32.gmra.mrb[0].mxu0 %v3517
        %v3786 = vpop.f32.mrb[0].mxu0
        %v3787 = vadd.f32 %v3432, %v3786
        %v3788 = vpop.f32.mrb[0].mxu0
        %3789 = vmatprep.mubr.f32.mxu0 0.0
        %3790 = vmatmul.mubr.f32.gmra.mrb[0].mxu0 %v3520
        %v3791 = vpop.f32.mrb[0].mxu0
        %v3792 = vadd.f32 %v3432, %v3791
        %v3793 = vpop.f32.mrb[0].mxu0
        %3794 = vmatprep.mubr.f32.mxu0 0.0
        %3795 = vmatmul.mubr.f32.gmra.mrb[0].mxu0 %v3523
        %v3796 = vpop.f32.mrb[0].mxu0
        %v3797 = vadd.f32 %v3432, %v3796
        %v3798 = vpop.f32.mrb[0].mxu0
        %3799 = vmatprep.mubr.f32.mxu0 0.0
        %3800 = vmatmul.mubr.f32.gmra.mrb[0].mxu0 %v3526
        %v3801 = vpop.f32.mrb[0].mxu0
        %v3802 = vadd.f32 %v3432, %v3801
        %v3803 = vpop.f32.mrb[0].mxu0
        %3804 = vmatprep.mubr.f32.mxu0 0.0
        %3805 = vmatmul.mubr.f32.gmra.mrb[0].mxu0 %v3529
        %v3806 = vpop.f32.mrb[0].mxu0
        %v3807 = vadd.f32 %v3432, %v3806
        %v3808 = vpop.f32.mrb[0].mxu0
        %3809 = vmatprep.mubr.f32.mxu0 0.0
        %3810 = vmatmul.mubr.f32.gmra.mrb[0].mxu0 %v3532
        %v3811 = vpop.f32.mrb[0].mxu0
        %v3812 = vadd.f32 %v3432, %v3811
        %v3813 = vpop.f32.mrb[0].mxu0
        %3814 = vmatprep.mubr.f32.mxu0 0.0
        %3815 = vmatmul.mubr.f32.gmra.mrb[0].mxu0 %v3535
        %v3816 = vpop.f32.mrb[0].mxu0
        %v3817 = vadd.f32 %v3432, %v3816
        %v3818 = vpop.f32.mrb[0].mxu0
        %3819 = vmatprep.mubr.f32.mxu0 0.0
        %3820 = vmatmul.mubr.f32.gmra.mrb[0].mxu0 %v3538
        %v3821 = vpop.f32.mrb[0].mxu0
        %v3822 = vadd.f32 %v3432, %v3821
        %v3823 = vpop.f32.mrb[0].mxu0
        %3824 = vmatprep.mubr.f32.mxu0 0.0
        %3825 = vmatmul.mubr.f32.gmra.mrb[0].mxu0 %v3541
        %v3826 = vpop.f32.mrb[0].mxu0
        %v3827 = vadd.f32 %v3432, %v3826
        %v3828 = vpop.f32.mrb[0].mxu0
        %3829 = vmatprep.mubr.f32.mxu0 0.0
        %3830 = vmatmul.mubr.f32.gmra.mrb[0].mxu0 %v3544
        %v3831 = vpop.f32.mrb[0].mxu0
        %v3832 = vadd.f32 %v3432, %v3831
        %v3833 = vpop.f32.mrb[0].mxu0
        %3834 = vmatprep.mubr.f32.mxu0 0.0
        %3835 = vmatmul.mubr.f32.gmra.mrb[0].mxu0 %v3547
        %v3836 = vpop.f32.mrb[0].mxu0
        %v3837 = vadd.f32 %v3432, %v3836
        %v3838 = vpop.f32.mrb[0].mxu0
        %3839 = vmatprep.mubr.f32.mxu0 0.0
        %3840 = vmatmul.mubr.f32.gmra.mrb[0].mxu0 %v3550
        %v3841 = vpop.f32.mrb[0].mxu0
        %v3842 = vadd.f32 %v3432, %v3841
        %v3843 = vpop.f32.mrb[0].mxu0
        %3844 = vmatprep.mubr.f32.mxu0 0.0
        %3845 = vmatmul.mubr.f32.gmra.mrb[0].mxu0 %v3553
        %v3846 = vpop.f32.mrb[0].mxu0
        %v3847 = vadd.f32 %v3432, %v3846
        %v3848 = vpop.f32.mrb[0].mxu0
        %3849 = vmatprep.mubr.f32.mxu0 0.0
        %3850 = vmatmul.mubr.f32.gmra.mrb[0].mxu0 %v3556
        %v3851 = vpop.f32.mrb[0].mxu0
        %v3852 = vadd.f32 %v3432, %v3851
        %v3853 = vpop.f32.mrb[0].mxu0
        %3854 = vmatprep.mubr.f32.mxu0 0.0
        %3855 = vmatmul.mubr.f32.gmra.mrb[0].mxu0 %v3559
        %v3856 = vpop.f32.mrb[0].mxu0
        %v3857 = vadd.f32 %v3432, %v3856
        %v3858 = vpop.f32.mrb[0].mxu0
        %3859 = vmatprep.mubr.f32.mxu0 0.0
        %3860 = vmatmul.mubr.f32.gmra.mrb[0].mxu0 %v3562
        %v3861 = vpop.f32.mrb[0].mxu0
        %v3862 = vadd.f32 %v3432, %v3861
        %v3863 = vpop.f32.mrb[0].mxu0
        %3864 = vmatprep.mubr.f32.mxu0 0.0
        %3865 = vmatmul.mubr.f32.gmra.mrb[0].mxu0 %v3565
        %v3866 = vpop.f32.mrb[0].mxu0
        %v3867 = vadd.f32 %v3432, %v3866
        %v3868 = vpop.f32.mrb[0].mxu0
        %3869 = vmatprep.mubr.f32.mxu0 0.0
        %3870 = vmatmul.mubr.f32.gmra.mrb[0].mxu0 %v3568
        %v3871 = vpop.f32.mrb[0].mxu0
        %v3872 = vadd.f32 %v3432, %v3871
        %v3873 = vpop.f32.mrb[0].mxu0
        %3874 = vmatprep.mubr.f32.mxu0 0.0
        %3875 = vmatmul.mubr.f32.gmra.mrb[0].mxu0 %v3571
        %v3876 = vpop.f32.mrb[0].mxu0
        %v3877 = vadd.f32 %v3432, %v3876
        %v3878 = vpop.f32.mrb[0].mxu0
        %3879 = vmatprep.mubr.f32.mxu0 0.0
        %3880 = vmatmul.mubr.f32.gmra.mrb[0].mxu0 %v3574
        %v3881 = vpop.f32.mrb[0].mxu0
        %v3882 = vadd.f32 %v3432, %v3881
        %v3883 = vpop.f32.mrb[0].mxu0
        %3884 = vmatprep.mubr.f32.mxu0 0.0
        %3885 = vmatmul.mubr.f32.gmra.mrb[0].mxu0 %v3577
        %v3886 = vpop.f32.mrb[0].mxu0
        %v3887 = vadd.f32 %v3432, %v3886
        %v3888 = vpop.f32.mrb[0].mxu0
        %3889 = vmatprep.mubr.f32.mxu0 0.0
        %3890 = vmatmul.mubr.f32.gmra.mrb[0].mxu0 %v3580
        %v3891 = vpop.f32.mrb[0].mxu0
        %v3892 = vadd.f32 %v3432, %v3891
        %v3893 = vpop.f32.mrb[0].mxu0
        %3894 = vmatprep.mubr.f32.mxu0 0.0
        %3895 = vmatmul.mubr.f32.gmra.mrb[0].mxu0 %v3583
        %v3896 = vpop.f32.mrb[0].mxu0
        %v3897 = vadd.f32 %v3432, %v3896
        %v3898 = vpop.f32.mrb[0].mxu0
        %3899 = vdwg.mxu0
        %v3900 = vxor.u32 %v3652, 2147483648
        %v3901 = vxor.u32 %v3657, 2147483648
        %v3902 = vxor.u32 %v3662, 2147483648
        %v3903 = vxor.u32 %v3667, 2147483648
        %v3904 = vxor.u32 %v3672, 2147483648
        %v3905 = vxor.u32 %v3677, 2147483648
        %v3906 = vxor.u32 %v3682, 2147483648
        %v3907 = vxor.u32 %v3687, 2147483648
        %v3908 = vxor.u32 %v3692, 2147483648
        %v3909 = vxor.u32 %v3697, 2147483648
        %v3910 = vxor.u32 %v3702, 2147483648
        %v3911 = vxor.u32 %v3707, 2147483648
        %v3912 = vxor.u32 %v3712, 2147483648
        %v3913 = vxor.u32 %v3717, 2147483648
        %v3914 = vxor.u32 %v3722, 2147483648
        %v3915 = vxor.u32 %v3727, 2147483648
        %v3916 = vxor.u32 %v3732, 2147483648
        %v3917 = vxor.u32 %v3737, 2147483648
        %v3918 = vxor.u32 %v3742, 2147483648
        %v3919 = vxor.u32 %v3747, 2147483648
        %v3920 = vxor.u32 %v3752, 2147483648
        %v3921 = vxor.u32 %v3757, 2147483648
        %v3922 = vxor.u32 %v3762, 2147483648
        %v3923 = vxor.u32 %v3767, 2147483648
        %v3924 = vxor.u32 %v3772, 2147483648
        %v3925 = vxor.u32 %v3777, 2147483648
        %v3926 = vxor.u32 %v3782, 2147483648
        %v3927 = vxor.u32 %v3787, 2147483648
        %v3928 = vxor.u32 %v3792, 2147483648
        %v3929 = vxor.u32 %v3797, 2147483648
        %v3930 = vxor.u32 %v3802, 2147483648
        %v3931 = vxor.u32 %v3807, 2147483648
        %v3932 = vxor.u32 %v3812, 2147483648
        %v3933 = vxor.u32 %v3817, 2147483648
        %v3934 = vxor.u32 %v3822, 2147483648
        %v3935 = vxor.u32 %v3827, 2147483648
        %v3936 = vxor.u32 %v3832, 2147483648
        %v3937 = vxor.u32 %v3837, 2147483648
        %v3938 = vxor.u32 %v3842, 2147483648
        %v3939 = vxor.u32 %v3847, 2147483648
        %v3940 = vxor.u32 %v3852, 2147483648
        %v3941 = vxor.u32 %v3857, 2147483648
        %v3942 = vxor.u32 %v3862, 2147483648
        %v3943 = vxor.u32 %v3867, 2147483648
        %v3944 = vxor.u32 %v3872, 2147483648
        %v3945 = vxor.u32 %v3877, 2147483648
        %v3946 = vxor.u32 %v3882, 2147483648
        %v3947 = vxor.u32 %v3887, 2147483648
        %v3948 = vxor.u32 %v3892, 2147483648
        %v3949 = vxor.u32 %v3897, 2147483648
        %v3950 = vmul.f32 %v3900, 1.442695
        %v3951 = vpow.pop %v3950
        %v3952 = vmul.f32 %v3901, 1.442695
        %v3953 = vpow.pop %v3952
        %v3954 = vmul.f32 %v3902, 1.442695
        %v3955 = vpow.pop %v3954
        %v3956 = vmul.f32 %v3903, 1.442695
        %v3957 = vpow.pop %v3956
        %v3958 = vmul.f32 %v3904, 1.442695
        %v3959 = vpow.pop %v3958
        %v3960 = vmul.f32 %v3905, 1.442695
        %v3961 = vpow.pop %v3960
        %v3962 = vmul.f32 %v3906, 1.442695
        %v3963 = vpow.pop %v3962
        %v3964 = vmul.f32 %v3907, 1.442695
        %v3965 = vpow.pop %v3964
        %v3966 = vmul.f32 %v3908, 1.442695
        %v3967 = vpow.pop %v3966
        %v3968 = vmul.f32 %v3909, 1.442695
        %v3969 = vpow.pop %v3968
        %v3970 = vmul.f32 %v3910, 1.442695
        %v3971 = vpow.pop %v3970
        %v3972 = vmul.f32 %v3911, 1.442695
        %v3973 = vpow.pop %v3972
        %v3974 = vmul.f32 %v3912, 1.442695
        %v3975 = vpow.pop %v3974
        %v3976 = vmul.f32 %v3913, 1.442695
        %v3977 = vpow.pop %v3976
        %v3978 = vmul.f32 %v3914, 1.442695
        %v3979 = vpow.pop %v3978
        %v3980 = vmul.f32 %v3915, 1.442695
        %v3981 = vpow.pop %v3980
        %v3982 = vmul.f32 %v3916, 1.442695
        %v3983 = vpow.pop %v3982
        %v3984 = vmul.f32 %v3917, 1.442695
        %v3985 = vpow.pop %v3984
        %v3986 = vmul.f32 %v3918, 1.442695
        %v3987 = vpow.pop %v3986
        %v3988 = vmul.f32 %v3919, 1.442695
        %v3989 = vpow.pop %v3988
        %v3990 = vmul.f32 %v3920, 1.442695
        %v3991 = vpow.pop %v3990
        %v3992 = vmul.f32 %v3921, 1.442695
        %v3993 = vpow.pop %v3992
        %v3994 = vmul.f32 %v3922, 1.442695
        %v3995 = vpow.pop %v3994
        %v3996 = vmul.f32 %v3923, 1.442695
        %v3997 = vpow.pop %v3996
        %v3998 = vmul.f32 %v3924, 1.442695
        %v3999 = vpow.pop %v3998
        %v4000 = vmul.f32 %v3925, 1.442695
        %v4001 = vpow.pop %v4000
        %v4002 = vmul.f32 %v3926, 1.442695
        %v4003 = vpow.pop %v4002
        %v4004 = vmul.f32 %v3927, 1.442695
        %v4005 = vpow.pop %v4004
        %v4006 = vmul.f32 %v3928, 1.442695
        %v4007 = vpow.pop %v4006
        %v4008 = vmul.f32 %v3929, 1.442695
        %v4009 = vpow.pop %v4008
        %v4010 = vmul.f32 %v3930, 1.442695
        %v4011 = vpow.pop %v4010
        %v4012 = vmul.f32 %v3931, 1.442695
        %v4013 = vpow.pop %v4012
        %v4014 = vmul.f32 %v3932, 1.442695
        %v4015 = vpow.pop %v4014
        %v4016 = vmul.f32 %v3933, 1.442695
        %v4017 = vpow.pop %v4016
        %v4018 = vmul.f32 %v3934, 1.442695
        %v4019 = vpow.pop %v4018
        %v4020 = vmul.f32 %v3935, 1.442695
        %v4021 = vpow.pop %v4020
        %v4022 = vmul.f32 %v3936, 1.442695
        %v4023 = vpow.pop %v4022
        %v4024 = vmul.f32 %v3937, 1.442695
        %v4025 = vpow.pop %v4024
        %v4026 = vmul.f32 %v3938, 1.442695
        %v4027 = vpow.pop %v4026
        %v4028 = vmul.f32 %v3939, 1.442695
        %v4029 = vpow.pop %v4028
        %v4030 = vmul.f32 %v3940, 1.442695
        %v4031 = vpow.pop %v4030
        %v4032 = vmul.f32 %v3941, 1.442695
        %v4033 = vpow.pop %v4032
        %v4034 = vmul.f32 %v3942, 1.442695
        %v4035 = vpow.pop %v4034
        %v4036 = vmul.f32 %v3943, 1.442695
        %v4037 = vpow.pop %v4036
        %v4038 = vmul.f32 %v3944, 1.442695
        %v4039 = vpow.pop %v4038
        %v4040 = vmul.f32 %v3945, 1.442695
        %v4041 = vpow.pop %v4040
        %v4042 = vmul.f32 %v3946, 1.442695
        %v4043 = vpow.pop %v4042
        %v4044 = vmul.f32 %v3947, 1.442695
        %v4045 = vpow.pop %v4044
        %v4046 = vmul.f32 %v3948, 1.442695
        %v4047 = vpow.pop %v4046
        %v4048 = vmul.f32 %v3949, 1.442695
        %v4049 = vpow.pop %v4048
        %v4050 = vadd.f32 %v3951, 1.0
        %v4051 = vadd.f32 %v3953, 1.0
        %v4052 = vadd.f32 %v3955, 1.0
        %v4053 = vadd.f32 %v3957, 1.0
        %v4054 = vadd.f32 %v3959, 1.0
        %v4055 = vadd.f32 %v3961, 1.0
        %v4056 = vadd.f32 %v3963, 1.0
        %v4057 = vadd.f32 %v3965, 1.0
        %v4058 = vadd.f32 %v3967, 1.0
        %v4059 = vadd.f32 %v3969, 1.0
        %v4060 = vadd.f32 %v3971, 1.0
        %v4061 = vadd.f32 %v3973, 1.0
        %v4062 = vadd.f32 %v3975, 1.0
        %v4063 = vadd.f32 %v3977, 1.0
        %v4064 = vadd.f32 %v3979, 1.0
        %v4065 = vadd.f32 %v3981, 1.0
        %v4066 = vadd.f32 %v3983, 1.0
        %v4067 = vadd.f32 %v3985, 1.0
        %v4068 = vadd.f32 %v3987, 1.0
        %v4069 = vadd.f32 %v3989, 1.0
        %v4070 = vadd.f32 %v3991, 1.0
        %v4071 = vadd.f32 %v3993, 1.0
        %v4072 = vadd.f32 %v3995, 1.0
        %v4073 = vadd.f32 %v3997, 1.0
        %v4074 = vadd.f32 %v3999, 1.0
        %v4075 = vadd.f32 %v4001, 1.0
        %v4076 = vadd.f32 %v4003, 1.0
        %v4077 = vadd.f32 %v4005, 1.0
        %v4078 = vadd.f32 %v4007, 1.0
        %v4079 = vadd.f32 %v4009, 1.0
        %v4080 = vadd.f32 %v4011, 1.0
        %v4081 = vadd.f32 %v4013, 1.0
        %v4082 = vadd.f32 %v4015, 1.0
        %v4083 = vadd.f32 %v4017, 1.0
        %v4084 = vadd.f32 %v4019, 1.0
        %v4085 = vadd.f32 %v4021, 1.0
        %v4086 = vadd.f32 %v4023, 1.0
        %v4087 = vadd.f32 %v4025, 1.0
        %v4088 = vadd.f32 %v4027, 1.0
        %v4089 = vadd.f32 %v4029, 1.0
        %v4090 = vadd.f32 %v4031, 1.0
        %v4091 = vadd.f32 %v4033, 1.0
        %v4092 = vadd.f32 %v4035, 1.0
        %v4093 = vadd.f32 %v4037, 1.0
        %v4094 = vadd.f32 %v4039, 1.0
        %v4095 = vadd.f32 %v4041, 1.0
        %v4096 = vadd.f32 %v4043, 1.0
        %v4097 = vadd.f32 %v4045, 1.0
        %v4098 = vadd.f32 %v4047, 1.0
        %v4099 = vadd.f32 %v4049, 1.0
        %v4100 = vrcp.pop %v4050
        %v4101 = vmul.f32 1.0, %v4100
        %v4102 = vrcp.pop %v4051
        %v4103 = vmul.f32 1.0, %v4102
        %v4104 = vrcp.pop %v4052
        %v4105 = vmul.f32 1.0, %v4104
        %v4106 = vrcp.pop %v4053
        %v4107 = vmul.f32 1.0, %v4106
        %v4108 = vrcp.pop %v4054
        %v4109 = vmul.f32 1.0, %v4108
        %v4110 = vrcp.pop %v4055
        %v4111 = vmul.f32 1.0, %v4110
        %v4112 = vrcp.pop %v4056
        %v4113 = vmul.f32 1.0, %v4112
        %v4114 = vrcp.pop %v4057
        %v4115 = vmul.f32 1.0, %v4114
        %v4116 = vrcp.pop %v4058
        %v4117 = vmul.f32 1.0, %v4116
        %v4118 = vrcp.pop %v4059
        %v4119 = vmul.f32 1.0, %v4118
        %v4120 = vrcp.pop %v4060
        %v4121 = vmul.f32 1.0, %v4120
        %v4122 = vrcp.pop %v4061
        %v4123 = vmul.f32 1.0, %v4122
        %v4124 = vrcp.pop %v4062
        %v4125 = vmul.f32 1.0, %v4124
        %v4126 = vrcp.pop %v4063
        %v4127 = vmul.f32 1.0, %v4126
        %v4128 = vrcp.pop %v4064
        %v4129 = vmul.f32 1.0, %v4128
        %v4130 = vrcp.pop %v4065
        %v4131 = vmul.f32 1.0, %v4130
        %v4132 = vrcp.pop %v4066
        %v4133 = vmul.f32 1.0, %v4132
        %v4134 = vrcp.pop %v4067
        %v4135 = vmul.f32 1.0, %v4134
        %v4136 = vrcp.pop %v4068
        %v4137 = vmul.f32 1.0, %v4136
        %v4138 = vrcp.pop %v4069
        %v4139 = vmul.f32 1.0, %v4138
        %v4140 = vrcp.pop %v4070
        %v4141 = vmul.f32 1.0, %v4140
        %v4142 = vrcp.pop %v4071
        %v4143 = vmul.f32 1.0, %v4142
        %v4144 = vrcp.pop %v4072
        %v4145 = vmul.f32 1.0, %v4144
        %v4146 = vrcp.pop %v4073
        %v4147 = vmul.f32 1.0, %v4146
        %v4148 = vrcp.pop %v4074
        %v4149 = vmul.f32 1.0, %v4148
        %v4150 = vrcp.pop %v4075
        %v4151 = vmul.f32 1.0, %v4150
        %v4152 = vrcp.pop %v4076
        %v4153 = vmul.f32 1.0, %v4152
        %v4154 = vrcp.pop %v4077
        %v4155 = vmul.f32 1.0, %v4154
        %v4156 = vrcp.pop %v4078
        %v4157 = vmul.f32 1.0, %v4156
        %v4158 = vrcp.pop %v4079
        %v4159 = vmul.f32 1.0, %v4158
        %v4160 = vrcp.pop %v4080
        %v4161 = vmul.f32 1.0, %v4160
        %v4162 = vrcp.pop %v4081
        %v4163 = vmul.f32 1.0, %v4162
        %v4164 = vrcp.pop %v4082
        %v4165 = vmul.f32 1.0, %v4164
        %v4166 = vrcp.pop %v4083
        %v4167 = vmul.f32 1.0, %v4166
        %v4168 = vrcp.pop %v4084
        %v4169 = vmul.f32 1.0, %v4168
        %v4170 = vrcp.pop %v4085
        %v4171 = vmul.f32 1.0, %v4170
        %v4172 = vrcp.pop %v4086
        %v4173 = vmul.f32 1.0, %v4172
        %v4174 = vrcp.pop %v4087
        %v4175 = vmul.f32 1.0, %v4174
        %v4176 = vrcp.pop %v4088
        %v4177 = vmul.f32 1.0, %v4176
        %v4178 = vrcp.pop %v4089
        %v4179 = vmul.f32 1.0, %v4178
        %v4180 = vrcp.pop %v4090
        %v4181 = vmul.f32 1.0, %v4180
        %v4182 = vrcp.pop %v4091
        %v4183 = vmul.f32 1.0, %v4182
        %v4184 = vrcp.pop %v4092
        %v4185 = vmul.f32 1.0, %v4184
        %v4186 = vrcp.pop %v4093
        %v4187 = vmul.f32 1.0, %v4186
        %v4188 = vrcp.pop %v4094
        %v4189 = vmul.f32 1.0, %v4188
        %v4190 = vrcp.pop %v4095
        %v4191 = vmul.f32 1.0, %v4190
        %v4192 = vrcp.pop %v4096
        %v4193 = vmul.f32 1.0, %v4192
        %v4194 = vrcp.pop %v4097
        %v4195 = vmul.f32 1.0, %v4194
        %v4196 = vrcp.pop %v4098
        %v4197 = vmul.f32 1.0, %v4196
        %v4198 = vrcp.pop %v4099
        %v4199 = vmul.f32 1.0, %v4198
        %v4200 = vmul.f32 %v3652, %v4101
        %v4201 = vmul.f32 %v3657, %v4103
        %v4202 = vmul.f32 %v3662, %v4105
        %v4203 = vmul.f32 %v3667, %v4107
        %v4204 = vmul.f32 %v3672, %v4109
        %v4205 = vmul.f32 %v3677, %v4111
        %v4206 = vmul.f32 %v3682, %v4113
        %v4207 = vmul.f32 %v3687, %v4115
        %v4208 = vmul.f32 %v3692, %v4117
        %v4209 = vmul.f32 %v3697, %v4119
        %v4210 = vmul.f32 %v3702, %v4121
        %v4211 = vmul.f32 %v3707, %v4123
        %v4212 = vmul.f32 %v3712, %v4125
        %v4213 = vmul.f32 %v3717, %v4127
        %v4214 = vmul.f32 %v3722, %v4129
        %v4215 = vmul.f32 %v3727, %v4131
        %v4216 = vmul.f32 %v3732, %v4133
        %v4217 = vmul.f32 %v3737, %v4135
        %v4218 = vmul.f32 %v3742, %v4137
        %v4219 = vmul.f32 %v3747, %v4139
        %v4220 = vmul.f32 %v3752, %v4141
        %v4221 = vmul.f32 %v3757, %v4143
        %v4222 = vmul.f32 %v3762, %v4145
        %v4223 = vmul.f32 %v3767, %v4147
        %v4224 = vmul.f32 %v3772, %v4149
        %v4225 = vmul.f32 %v3777, %v4151
        %v4226 = vmul.f32 %v3782, %v4153
        %v4227 = vmul.f32 %v3787, %v4155
        %v4228 = vmul.f32 %v3792, %v4157
        %v4229 = vmul.f32 %v3797, %v4159
        %v4230 = vmul.f32 %v3802, %v4161
        %v4231 = vmul.f32 %v3807, %v4163
        %v4232 = vmul.f32 %v3812, %v4165
        %v4233 = vmul.f32 %v3817, %v4167
        %v4234 = vmul.f32 %v3822, %v4169
        %v4235 = vmul.f32 %v3827, %v4171
        %v4236 = vmul.f32 %v3832, %v4173
        %v4237 = vmul.f32 %v3837, %v4175
        %v4238 = vmul.f32 %v3842, %v4177
        %v4239 = vmul.f32 %v3847, %v4179
        %v4240 = vmul.f32 %v3852, %v4181
        %v4241 = vmul.f32 %v3857, %v4183
        %v4242 = vmul.f32 %v3862, %v4185
        %v4243 = vmul.f32 %v3867, %v4187
        %v4244 = vmul.f32 %v3872, %v4189
        %v4245 = vmul.f32 %v3877, %v4191
        %v4246 = vmul.f32 %v3882, %v4193
        %v4247 = vmul.f32 %v3887, %v4195
        %v4248 = vmul.f32 %v3892, %v4197
        %v4249 = vmul.f32 %v3897, %v4199
        %v4250 = vld [vmem:[%s10] sm:$0xff]
        %v4251 = vld [vmem:[%s10 + $0x8] sm:$0xff]
        %v4252 = vld [vmem:[%s10 + $0x10] sm:$0xff]
        %v4253 = vld [vmem:[%s10 + $0x18] sm:$0xff]
        %v4254 = vld [vmem:[%s11] sm:$0x1]
        %v4256 = vlaneseq
        %v4257 = vshrl.u32 %v4256, 7
        %v4258 = vsub.s32 0, %v4257
        %v4259 = vrot.slane %v4254, %v4258
        %vm4261 = vcmask 261120
        %v4263 = vsel %vm4261, %v4200, 0
        %v4266 = vsel %vm4261, %v4201, 0
        %v4269 = vsel %vm4261, %v4202, 0
        %v4272 = vsel %vm4261, %v4203, 0
        %v4275 = vsel %vm4261, %v4204, 0
        %v4278 = vsel %vm4261, %v4205, 0
        %v4281 = vsel %vm4261, %v4206, 0
        %v4284 = vsel %vm4261, %v4207, 0
        %v4287 = vsel %vm4261, %v4208, 0
        %v4290 = vsel %vm4261, %v4209, 0
        %v4293 = vsel %vm4261, %v4210, 0
        %v4296 = vsel %vm4261, %v4211, 0
        %v4299 = vsel %vm4261, %v4212, 0
        %v4302 = vsel %vm4261, %v4213, 0
        %v4305 = vsel %vm4261, %v4214, 0
        %v4308 = vsel %vm4261, %v4215, 0
        %v4311 = vsel %vm4261, %v4216, 0
        %v4314 = vsel %vm4261, %v4217, 0
        %v4317 = vsel %vm4261, %v4218, 0
        %v4320 = vsel %vm4261, %v4219, 0
        %v4323 = vsel %vm4261, %v4220, 0
        %v4326 = vsel %vm4261, %v4221, 0
        %v4329 = vsel %vm4261, %v4222, 0
        %v4332 = vsel %vm4261, %v4223, 0
        %v4335 = vsel %vm4261, %v4224, 0
        %v4338 = vsel %vm4261, %v4225, 0
        %v4341 = vsel %vm4261, %v4226, 0
        %v4344 = vsel %vm4261, %v4227, 0
        %v4347 = vsel %vm4261, %v4228, 0
        %v4350 = vsel %vm4261, %v4229, 0
        %v4353 = vsel %vm4261, %v4230, 0
        %v4356 = vsel %vm4261, %v4231, 0
        %v4359 = vsel %vm4261, %v4232, 0
        %v4362 = vsel %vm4261, %v4233, 0
        %v4365 = vsel %vm4261, %v4234, 0
        %v4368 = vsel %vm4261, %v4235, 0
        %v4371 = vsel %vm4261, %v4236, 0
        %v4374 = vsel %vm4261, %v4237, 0
        %v4377 = vsel %vm4261, %v4238, 0
        %v4380 = vsel %vm4261, %v4239, 0
        %v4383 = vsel %vm4261, %v4240, 0
        %v4386 = vsel %vm4261, %v4241, 0
        %v4389 = vsel %vm4261, %v4242, 0
        %v4392 = vsel %vm4261, %v4243, 0
        %v4395 = vsel %vm4261, %v4244, 0
        %v4398 = vsel %vm4261, %v4245, 0
        %v4401 = vsel %vm4261, %v4246, 0
        %v4404 = vsel %vm4261, %v4247, 0
        %v4407 = vsel %vm4261, %v4248, 0
        %v4410 = vsel %vm4261, %v4249, 0
        %4412 = vmatprep.subr.mxu0 0.0
        %4413 = vmatpush1.msra.mxu0 %v4250
        %4414 = vmatprep.subr.mxu0 0.0
        %4415 = vmatpush1.msra.mxu0 %v4251
        %4416 = vmatprep.subr.mxu0 0.0
        %4417 = vmatpush1.msra.mxu0 %v4252
        %4418 = vmatprep.subr.mxu0 0.0
        %4419 = vmatpush1.msra.mxu0 %v4253
        %4420 = vmatprep.subr.mxu0 0.0
        %4421 = vmatpush1.msra.mxu0 0.0
        %4422 = vmatprep.subr.mxu0 0.0
        %4423 = vmatpush1.msra.mxu0 0.0
        %4424 = vmatprep.subr.mxu0 0.0
        %4425 = vmatpush1.msra.mxu0 0.0
        %4426 = vmatprep.subr.mxu0 0.0
        %4427 = vmatpush1.msra.mxu0 0.0
        %4428 = vmatprep.subr.mxu0 0.0
        %4429 = vmatpush1.msra.mxu0 0.0
        %4430 = vmatprep.subr.mxu0 0.0
        %4431 = vmatpush1.msra.mxu0 0.0
        %4432 = vmatprep.subr.mxu0 0.0
        %4433 = vmatpush1.msra.mxu0 0.0
        %4434 = vmatprep.subr.mxu0 0.0
        %4435 = vmatpush1.msra.mxu0 0.0
        %4436 = vmatprep.subr.mxu0 0.0
        %4437 = vmatpush1.msra.mxu0 0.0
        %4438 = vmatprep.subr.mxu0 0.0
        %4439 = vmatpush1.msra.mxu0 0.0
        %4440 = vmatprep.subr.mxu0 0.0
        %4441 = vmatpush1.msra.mxu0 0.0
        %4442 = vmatprep.subr.mxu0 0.0
        %4443 = vmatpush1.msra.mxu0 0.0
        %4444 = vmatprep.subr.mxu0 0.0
        %4445 = vmatpush1.msra.mxu0 0.0
        %4446 = vmatprep.subr.mxu0 0.0
        %4447 = vmatpush1.msra.mxu0 0.0
        %4448 = vmatprep.subr.mxu0 0.0
        %4449 = vmatpush1.msra.mxu0 0.0
        %4450 = vmatprep.subr.mxu0 0.0
        %4451 = vmatpush1.msra.mxu0 0.0
        %4452 = vmatprep.subr.mxu0 0.0
        %4453 = vmatpush1.msra.mxu0 0.0
        %4454 = vmatprep.subr.mxu0 0.0
        %4455 = vmatpush1.msra.mxu0 0.0
        %4456 = vmatprep.subr.mxu0 0.0
        %4457 = vmatpush1.msra.mxu0 0.0
        %4458 = vmatprep.subr.mxu0 0.0
        %4459 = vmatpush1.msra.mxu0 0.0
        %4460 = vmatprep.subr.mxu0 0.0
        %4461 = vmatpush1.msra.mxu0 0.0
        %4462 = vmatprep.subr.mxu0 0.0
        %4463 = vmatpush1.msra.mxu0 0.0
        %4464 = vmatprep.subr.mxu0 0.0
        %4465 = vmatpush1.msra.mxu0 0.0
        %4466 = vmatprep.subr.mxu0 0.0
        %4467 = vmatpush1.msra.mxu0 0.0
        %4468 = vmatprep.subr.mxu0 0.0
        %4469 = vmatpush1.msra.mxu0 0.0
        %4470 = vmatprep.subr.mxu0 0.0
        %4471 = vmatpush1.msra.mxu0 0.0
        %4472 = vmatprep.subr.mxu0 0.0
        %4473 = vmatpush1.msra.mxu0 0.0
        %4474 = vmatprep.subr.mxu0 0.0
        %4475 = vmatpush1.msra.mxu0 0.0
        %4476 = vmatprep.mubr.f32.mxu0 0.0
        %4477 = vmatmul.mubr.f32.gmra.mrb[0].mxu0 %v4263
        %v4478 = vpop.f32.mrb[0].mxu0
        %v4479 = vadd.f32 %v4259, %v4478
        %v4480 = vpop.f32.mrb[0].mxu0
        %4481 = vmatprep.mubr.f32.mxu0 0.0
        %4482 = vmatmul.mubr.f32.gmra.mrb[0].mxu0 %v4266
        %v4483 = vpop.f32.mrb[0].mxu0
        %v4484 = vadd.f32 %v4259, %v4483
        %v4485 = vpop.f32.mrb[0].mxu0
        %4486 = vmatprep.mubr.f32.mxu0 0.0
        %4487 = vmatmul.mubr.f32.gmra.mrb[0].mxu0 %v4269
        %v4488 = vpop.f32.mrb[0].mxu0
        %v4489 = vadd.f32 %v4259, %v4488
        %v4490 = vpop.f32.mrb[0].mxu0
        %4491 = vmatprep.mubr.f32.mxu0 0.0
        %4492 = vmatmul.mubr.f32.gmra.mrb[0].mxu0 %v4272
        %v4493 = vpop.f32.mrb[0].mxu0
        %v4494 = vadd.f32 %v4259, %v4493
        %v4495 = vpop.f32.mrb[0].mxu0
        %4496 = vmatprep.mubr.f32.mxu0 0.0
        %4497 = vmatmul.mubr.f32.gmra.mrb[0].mxu0 %v4275
        %v4498 = vpop.f32.mrb[0].mxu0
        %v4499 = vadd.f32 %v4259, %v4498
        %v4500 = vpop.f32.mrb[0].mxu0
        %4501 = vmatprep.mubr.f32.mxu0 0.0
        %4502 = vmatmul.mubr.f32.gmra.mrb[0].mxu0 %v4278
        %v4503 = vpop.f32.mrb[0].mxu0
        %v4504 = vadd.f32 %v4259, %v4503
        %v4505 = vpop.f32.mrb[0].mxu0
        %4506 = vmatprep.mubr.f32.mxu0 0.0
        %4507 = vmatmul.mubr.f32.gmra.mrb[0].mxu0 %v4281
        %v4508 = vpop.f32.mrb[0].mxu0
        %v4509 = vadd.f32 %v4259, %v4508
        %v4510 = vpop.f32.mrb[0].mxu0
        %4511 = vmatprep.mubr.f32.mxu0 0.0
        %4512 = vmatmul.mubr.f32.gmra.mrb[0].mxu0 %v4284
        %v4513 = vpop.f32.mrb[0].mxu0
        %v4514 = vadd.f32 %v4259, %v4513
        %v4515 = vpop.f32.mrb[0].mxu0
        %4516 = vmatprep.mubr.f32.mxu0 0.0
        %4517 = vmatmul.mubr.f32.gmra.mrb[0].mxu0 %v4287
        %v4518 = vpop.f32.mrb[0].mxu0
        %v4519 = vadd.f32 %v4259, %v4518
        %v4520 = vpop.f32.mrb[0].mxu0
        %4521 = vmatprep.mubr.f32.mxu0 0.0
        %4522 = vmatmul.mubr.f32.gmra.mrb[0].mxu0 %v4290
        %v4523 = vpop.f32.mrb[0].mxu0
        %v4524 = vadd.f32 %v4259, %v4523
        %v4525 = vpop.f32.mrb[0].mxu0
        %4526 = vmatprep.mubr.f32.mxu0 0.0
        %4527 = vmatmul.mubr.f32.gmra.mrb[0].mxu0 %v4293
        %v4528 = vpop.f32.mrb[0].mxu0
        %v4529 = vadd.f32 %v4259, %v4528
        %v4530 = vpop.f32.mrb[0].mxu0
        %4531 = vmatprep.mubr.f32.mxu0 0.0
        %4532 = vmatmul.mubr.f32.gmra.mrb[0].mxu0 %v4296
        %v4533 = vpop.f32.mrb[0].mxu0
        %v4534 = vadd.f32 %v4259, %v4533
        %v4535 = vpop.f32.mrb[0].mxu0
        %4536 = vmatprep.mubr.f32.mxu0 0.0
        %4537 = vmatmul.mubr.f32.gmra.mrb[0].mxu0 %v4299
        %v4538 = vpop.f32.mrb[0].mxu0
        %v4539 = vadd.f32 %v4259, %v4538
        %v4540 = vpop.f32.mrb[0].mxu0
        %4541 = vmatprep.mubr.f32.mxu0 0.0
        %4542 = vmatmul.mubr.f32.gmra.mrb[0].mxu0 %v4302
        %v4543 = vpop.f32.mrb[0].mxu0
        %v4544 = vadd.f32 %v4259, %v4543
        %v4545 = vpop.f32.mrb[0].mxu0
        %4546 = vmatprep.mubr.f32.mxu0 0.0
        %4547 = vmatmul.mubr.f32.gmra.mrb[0].mxu0 %v4305
        %v4548 = vpop.f32.mrb[0].mxu0
        %v4549 = vadd.f32 %v4259, %v4548
        %v4550 = vpop.f32.mrb[0].mxu0
        %4551 = vmatprep.mubr.f32.mxu0 0.0
        %4552 = vmatmul.mubr.f32.gmra.mrb[0].mxu0 %v4308
        %v4553 = vpop.f32.mrb[0].mxu0
        %v4554 = vadd.f32 %v4259, %v4553
        %v4555 = vpop.f32.mrb[0].mxu0
        %4556 = vmatprep.mubr.f32.mxu0 0.0
        %4557 = vmatmul.mubr.f32.gmra.mrb[0].mxu0 %v4311
        %v4558 = vpop.f32.mrb[0].mxu0
        %v4559 = vadd.f32 %v4259, %v4558
        %v4560 = vpop.f32.mrb[0].mxu0
        %4561 = vmatprep.mubr.f32.mxu0 0.0
        %4562 = vmatmul.mubr.f32.gmra.mrb[0].mxu0 %v4314
        %v4563 = vpop.f32.mrb[0].mxu0
        %v4564 = vadd.f32 %v4259, %v4563
        %v4565 = vpop.f32.mrb[0].mxu0
        %4566 = vmatprep.mubr.f32.mxu0 0.0
        %4567 = vmatmul.mubr.f32.gmra.mrb[0].mxu0 %v4317
        %v4568 = vpop.f32.mrb[0].mxu0
        %v4569 = vadd.f32 %v4259, %v4568
        %v4570 = vpop.f32.mrb[0].mxu0
        %4571 = vmatprep.mubr.f32.mxu0 0.0
        %4572 = vmatmul.mubr.f32.gmra.mrb[0].mxu0 %v4320
        %v4573 = vpop.f32.mrb[0].mxu0
        %v4574 = vadd.f32 %v4259, %v4573
        %v4575 = vpop.f32.mrb[0].mxu0
        %4576 = vmatprep.mubr.f32.mxu0 0.0
        %4577 = vmatmul.mubr.f32.gmra.mrb[0].mxu0 %v4323
        %v4578 = vpop.f32.mrb[0].mxu0
        %v4579 = vadd.f32 %v4259, %v4578
        %v4580 = vpop.f32.mrb[0].mxu0
        %4581 = vmatprep.mubr.f32.mxu0 0.0
        %4582 = vmatmul.mubr.f32.gmra.mrb[0].mxu0 %v4326
        %v4583 = vpop.f32.mrb[0].mxu0
        %v4584 = vadd.f32 %v4259, %v4583
        %v4585 = vpop.f32.mrb[0].mxu0
        %4586 = vmatprep.mubr.f32.mxu0 0.0
        %4587 = vmatmul.mubr.f32.gmra.mrb[0].mxu0 %v4329
        %v4588 = vpop.f32.mrb[0].mxu0
        %v4589 = vadd.f32 %v4259, %v4588
        %v4590 = vpop.f32.mrb[0].mxu0
        %4591 = vmatprep.mubr.f32.mxu0 0.0
        %4592 = vmatmul.mubr.f32.gmra.mrb[0].mxu0 %v4332
        %v4593 = vpop.f32.mrb[0].mxu0
        %v4594 = vadd.f32 %v4259, %v4593
        %v4595 = vpop.f32.mrb[0].mxu0
        %4596 = vmatprep.mubr.f32.mxu0 0.0
        %4597 = vmatmul.mubr.f32.gmra.mrb[0].mxu0 %v4335
        %v4598 = vpop.f32.mrb[0].mxu0
        %v4599 = vadd.f32 %v4259, %v4598
        %v4600 = vpop.f32.mrb[0].mxu0
        %4601 = vmatprep.mubr.f32.mxu0 0.0
        %4602 = vmatmul.mubr.f32.gmra.mrb[0].mxu0 %v4338
        %v4603 = vpop.f32.mrb[0].mxu0
        %v4604 = vadd.f32 %v4259, %v4603
        %v4605 = vpop.f32.mrb[0].mxu0
        %4606 = vmatprep.mubr.f32.mxu0 0.0
        %4607 = vmatmul.mubr.f32.gmra.mrb[0].mxu0 %v4341
        %v4608 = vpop.f32.mrb[0].mxu0
        %v4609 = vadd.f32 %v4259, %v4608
        %v4610 = vpop.f32.mrb[0].mxu0
        %4611 = vmatprep.mubr.f32.mxu0 0.0
        %4612 = vmatmul.mubr.f32.gmra.mrb[0].mxu0 %v4344
        %v4613 = vpop.f32.mrb[0].mxu0
        %v4614 = vadd.f32 %v4259, %v4613
        %v4615 = vpop.f32.mrb[0].mxu0
        %4616 = vmatprep.mubr.f32.mxu0 0.0
        %4617 = vmatmul.mubr.f32.gmra.mrb[0].mxu0 %v4347
        %v4618 = vpop.f32.mrb[0].mxu0
        %v4619 = vadd.f32 %v4259, %v4618
        %v4620 = vpop.f32.mrb[0].mxu0
        %4621 = vmatprep.mubr.f32.mxu0 0.0
        %4622 = vmatmul.mubr.f32.gmra.mrb[0].mxu0 %v4350
        %v4623 = vpop.f32.mrb[0].mxu0
        %v4624 = vadd.f32 %v4259, %v4623
        %v4625 = vpop.f32.mrb[0].mxu0
        %4626 = vmatprep.mubr.f32.mxu0 0.0
        %4627 = vmatmul.mubr.f32.gmra.mrb[0].mxu0 %v4353
        %v4628 = vpop.f32.mrb[0].mxu0
        %v4629 = vadd.f32 %v4259, %v4628
        %v4630 = vpop.f32.mrb[0].mxu0
        %4631 = vmatprep.mubr.f32.mxu0 0.0
        %4632 = vmatmul.mubr.f32.gmra.mrb[0].mxu0 %v4356
        %v4633 = vpop.f32.mrb[0].mxu0
        %v4634 = vadd.f32 %v4259, %v4633
        %v4635 = vpop.f32.mrb[0].mxu0
        %4636 = vmatprep.mubr.f32.mxu0 0.0
        %4637 = vmatmul.mubr.f32.gmra.mrb[0].mxu0 %v4359
        %v4638 = vpop.f32.mrb[0].mxu0
        %v4639 = vadd.f32 %v4259, %v4638
        %v4640 = vpop.f32.mrb[0].mxu0
        %4641 = vmatprep.mubr.f32.mxu0 0.0
        %4642 = vmatmul.mubr.f32.gmra.mrb[0].mxu0 %v4362
        %v4643 = vpop.f32.mrb[0].mxu0
        %v4644 = vadd.f32 %v4259, %v4643
        %v4645 = vpop.f32.mrb[0].mxu0
        %4646 = vmatprep.mubr.f32.mxu0 0.0
        %4647 = vmatmul.mubr.f32.gmra.mrb[0].mxu0 %v4365
        %v4648 = vpop.f32.mrb[0].mxu0
        %v4649 = vadd.f32 %v4259, %v4648
        %v4650 = vpop.f32.mrb[0].mxu0
        %4651 = vmatprep.mubr.f32.mxu0 0.0
        %4652 = vmatmul.mubr.f32.gmra.mrb[0].mxu0 %v4368
        %v4653 = vpop.f32.mrb[0].mxu0
        %v4654 = vadd.f32 %v4259, %v4653
        %v4655 = vpop.f32.mrb[0].mxu0
        %4656 = vmatprep.mubr.f32.mxu0 0.0
        %4657 = vmatmul.mubr.f32.gmra.mrb[0].mxu0 %v4371
        %v4658 = vpop.f32.mrb[0].mxu0
        %v4659 = vadd.f32 %v4259, %v4658
        %v4660 = vpop.f32.mrb[0].mxu0
        %4661 = vmatprep.mubr.f32.mxu0 0.0
        %4662 = vmatmul.mubr.f32.gmra.mrb[0].mxu0 %v4374
        %v4663 = vpop.f32.mrb[0].mxu0
        %v4664 = vadd.f32 %v4259, %v4663
        %v4665 = vpop.f32.mrb[0].mxu0
        %4666 = vmatprep.mubr.f32.mxu0 0.0
        %4667 = vmatmul.mubr.f32.gmra.mrb[0].mxu0 %v4377
        %v4668 = vpop.f32.mrb[0].mxu0
        %v4669 = vadd.f32 %v4259, %v4668
        %v4670 = vpop.f32.mrb[0].mxu0
        %4671 = vmatprep.mubr.f32.mxu0 0.0
        %4672 = vmatmul.mubr.f32.gmra.mrb[0].mxu0 %v4380
        %v4673 = vpop.f32.mrb[0].mxu0
        %v4674 = vadd.f32 %v4259, %v4673
        %v4675 = vpop.f32.mrb[0].mxu0
        %4676 = vmatprep.mubr.f32.mxu0 0.0
        %4677 = vmatmul.mubr.f32.gmra.mrb[0].mxu0 %v4383
        %v4678 = vpop.f32.mrb[0].mxu0
        %v4679 = vadd.f32 %v4259, %v4678
        %v4680 = vpop.f32.mrb[0].mxu0
        %4681 = vmatprep.mubr.f32.mxu0 0.0
        %4682 = vmatmul.mubr.f32.gmra.mrb[0].mxu0 %v4386
        %v4683 = vpop.f32.mrb[0].mxu0
        %v4684 = vadd.f32 %v4259, %v4683
        %v4685 = vpop.f32.mrb[0].mxu0
        %4686 = vmatprep.mubr.f32.mxu0 0.0
        %4687 = vmatmul.mubr.f32.gmra.mrb[0].mxu0 %v4389
        %v4688 = vpop.f32.mrb[0].mxu0
        %v4689 = vadd.f32 %v4259, %v4688
        %v4690 = vpop.f32.mrb[0].mxu0
        %4691 = vmatprep.mubr.f32.mxu0 0.0
        %4692 = vmatmul.mubr.f32.gmra.mrb[0].mxu0 %v4392
        %v4693 = vpop.f32.mrb[0].mxu0
        %v4694 = vadd.f32 %v4259, %v4693
        %v4695 = vpop.f32.mrb[0].mxu0
        %4696 = vmatprep.mubr.f32.mxu0 0.0
        %4697 = vmatmul.mubr.f32.gmra.mrb[0].mxu0 %v4395
        %v4698 = vpop.f32.mrb[0].mxu0
        %v4699 = vadd.f32 %v4259, %v4698
        %v4700 = vpop.f32.mrb[0].mxu0
        %4701 = vmatprep.mubr.f32.mxu0 0.0
        %4702 = vmatmul.mubr.f32.gmra.mrb[0].mxu0 %v4398
        %v4703 = vpop.f32.mrb[0].mxu0
        %v4704 = vadd.f32 %v4259, %v4703
        %v4705 = vpop.f32.mrb[0].mxu0
        %4706 = vmatprep.mubr.f32.mxu0 0.0
        %4707 = vmatmul.mubr.f32.gmra.mrb[0].mxu0 %v4401
        %v4708 = vpop.f32.mrb[0].mxu0
        %v4709 = vadd.f32 %v4259, %v4708
        %v4710 = vpop.f32.mrb[0].mxu0
        %4711 = vmatprep.mubr.f32.mxu0 0.0
        %4712 = vmatmul.mubr.f32.gmra.mrb[0].mxu0 %v4404
        %v4713 = vpop.f32.mrb[0].mxu0
        %v4714 = vadd.f32 %v4259, %v4713
        %v4715 = vpop.f32.mrb[0].mxu0
        %4716 = vmatprep.mubr.f32.mxu0 0.0
        %4717 = vmatmul.mubr.f32.gmra.mrb[0].mxu0 %v4407
        %v4718 = vpop.f32.mrb[0].mxu0
        %v4719 = vadd.f32 %v4259, %v4718
        %v4720 = vpop.f32.mrb[0].mxu0
        %4721 = vmatprep.mubr.f32.mxu0 0.0
        %4722 = vmatmul.mubr.f32.gmra.mrb[0].mxu0 %v4410
        %v4723 = vpop.f32.mrb[0].mxu0
        %v4724 = vadd.f32 %v4259, %v4723
        %v4725 = vpop.f32.mrb[0].mxu0
        %4726 = vdwg.mxu0
        %4727 = vset.pattern.permute.xlu0 3
        %4728 = vperm.xlu0 %4727, %v459
        %v4729 = vpop.permute.xlu0 %4728
        %4731 = vset.pattern.permute.xlu0 3
        %4732 = vperm.xlu0 %4731, %v460
        %v4733 = vpop.permute.xlu0 %4732
        %4735 = vset.pattern.permute.xlu0 3
        %4736 = vperm.xlu0 %4735, %v461
        %v4737 = vpop.permute.xlu0 %4736
        %4739 = vset.pattern.permute.xlu0 3
        %4740 = vperm.xlu0 %4739, %v462
        %v4741 = vpop.permute.xlu0 %4740
        %4743 = vset.pattern.permute.xlu0 3
        %4744 = vperm.xlu0 %4743, %v463
        %v4745 = vpop.permute.xlu0 %4744
        %4747 = vset.pattern.permute.xlu0 3
        %4748 = vperm.xlu0 %4747, %v464
        %v4749 = vpop.permute.xlu0 %4748
        %4751 = vset.pattern.permute.xlu0 3
        %4752 = vperm.xlu0 %4751, %v465
        %v4753 = vpop.permute.xlu0 %4752
        %4755 = vset.pattern.permute.xlu0 3
        %4756 = vperm.xlu0 %4755, %v466
        %v4757 = vpop.permute.xlu0 %4756
        %4759 = vset.pattern.permute.xlu0 3
        %4760 = vperm.xlu0 %4759, %v467
        %v4761 = vpop.permute.xlu0 %4760
        %4763 = vset.pattern.permute.xlu0 3
        %4764 = vperm.xlu0 %4763, %v468
        %v4765 = vpop.permute.xlu0 %4764
        %4767 = vset.pattern.permute.xlu0 3
        %4768 = vperm.xlu0 %4767, %v469
        %v4769 = vpop.permute.xlu0 %4768
        %4771 = vset.pattern.permute.xlu0 3
        %4772 = vperm.xlu0 %4771, %v470
        %v4773 = vpop.permute.xlu0 %4772
        %4775 = vset.pattern.permute.xlu0 3
        %4776 = vperm.xlu0 %4775, %v471
        %v4777 = vpop.permute.xlu0 %4776
        %4779 = vset.pattern.permute.xlu0 3
        %4780 = vperm.xlu0 %4779, %v472
        %v4781 = vpop.permute.xlu0 %4780
        %4783 = vset.pattern.permute.xlu0 3
        %4784 = vperm.xlu0 %4783, %v473
        %v4785 = vpop.permute.xlu0 %4784
        %4787 = vset.pattern.permute.xlu0 3
        %4788 = vperm.xlu0 %4787, %v474
        %v4789 = vpop.permute.xlu0 %4788
        %4791 = vset.pattern.permute.xlu0 3
        %4792 = vperm.xlu0 %4791, %v475
        %v4793 = vpop.permute.xlu0 %4792
        %4795 = vset.pattern.permute.xlu0 3
        %4796 = vperm.xlu0 %4795, %v476
        %v4797 = vpop.permute.xlu0 %4796
        %4799 = vset.pattern.permute.xlu0 3
        %4800 = vperm.xlu0 %4799, %v477
        %v4801 = vpop.permute.xlu0 %4800
        %4803 = vset.pattern.permute.xlu0 3
        %4804 = vperm.xlu0 %4803, %v478
        %v4805 = vpop.permute.xlu0 %4804
        %4807 = vset.pattern.permute.xlu0 3
        %4808 = vperm.xlu0 %4807, %v479
        %v4809 = vpop.permute.xlu0 %4808
        %4811 = vset.pattern.permute.xlu0 3
        %4812 = vperm.xlu0 %4811, %v480
        %v4813 = vpop.permute.xlu0 %4812
        %4815 = vset.pattern.permute.xlu0 3
        %4816 = vperm.xlu0 %4815, %v481
        %v4817 = vpop.permute.xlu0 %4816
        %4819 = vset.pattern.permute.xlu0 3
        %4820 = vperm.xlu0 %4819, %v482
        %v4821 = vpop.permute.xlu0 %4820
        %4823 = vset.pattern.permute.xlu0 3
        %4824 = vperm.xlu0 %4823, %v483
        %v4825 = vpop.permute.xlu0 %4824
        %4827 = vset.pattern.permute.xlu0 3
        %4828 = vperm.xlu0 %4827, %v484
        %v4829 = vpop.permute.xlu0 %4828
        %4831 = vset.pattern.permute.xlu0 3
        %4832 = vperm.xlu0 %4831, %v485
        %v4833 = vpop.permute.xlu0 %4832
        %4835 = vset.pattern.permute.xlu0 3
        %4836 = vperm.xlu0 %4835, %v486
        %v4837 = vpop.permute.xlu0 %4836
        %4839 = vset.pattern.permute.xlu0 3
        %4840 = vperm.xlu0 %4839, %v487
        %v4841 = vpop.permute.xlu0 %4840
        %4843 = vset.pattern.permute.xlu0 3
        %4844 = vperm.xlu0 %4843, %v488
        %v4845 = vpop.permute.xlu0 %4844
        %4847 = vset.pattern.permute.xlu0 3
        %4848 = vperm.xlu0 %4847, %v489
        %v4849 = vpop.permute.xlu0 %4848
        %4851 = vset.pattern.permute.xlu0 3
        %4852 = vperm.xlu0 %4851, %v490
        %v4853 = vpop.permute.xlu0 %4852
        %4855 = vset.pattern.permute.xlu0 3
        %4856 = vperm.xlu0 %4855, %v491
        %v4857 = vpop.permute.xlu0 %4856
        %4859 = vset.pattern.permute.xlu0 3
        %4860 = vperm.xlu0 %4859, %v492
        %v4861 = vpop.permute.xlu0 %4860
        %4863 = vset.pattern.permute.xlu0 3
        %4864 = vperm.xlu0 %4863, %v493
        %v4865 = vpop.permute.xlu0 %4864
        %4867 = vset.pattern.permute.xlu0 3
        %4868 = vperm.xlu0 %4867, %v494
        %v4869 = vpop.permute.xlu0 %4868
        %4871 = vset.pattern.permute.xlu0 3
        %4872 = vperm.xlu0 %4871, %v495
        %v4873 = vpop.permute.xlu0 %4872
        %4875 = vset.pattern.permute.xlu0 3
        %4876 = vperm.xlu0 %4875, %v496
        %v4877 = vpop.permute.xlu0 %4876
        %4879 = vset.pattern.permute.xlu0 3
        %4880 = vperm.xlu0 %4879, %v497
        %v4881 = vpop.permute.xlu0 %4880
        %4883 = vset.pattern.permute.xlu0 3
        %4884 = vperm.xlu0 %4883, %v498
        %v4885 = vpop.permute.xlu0 %4884
        %4887 = vset.pattern.permute.xlu0 3
        %4888 = vperm.xlu0 %4887, %v499
        %v4889 = vpop.permute.xlu0 %4888
        %4891 = vset.pattern.permute.xlu0 3
        %4892 = vperm.xlu0 %4891, %v500
        %v4893 = vpop.permute.xlu0 %4892
        %4895 = vset.pattern.permute.xlu0 3
        %4896 = vperm.xlu0 %4895, %v501
        %v4897 = vpop.permute.xlu0 %4896
        %4899 = vset.pattern.permute.xlu0 3
        %4900 = vperm.xlu0 %4899, %v502
        %v4901 = vpop.permute.xlu0 %4900
        %4903 = vset.pattern.permute.xlu0 3
        %4904 = vperm.xlu0 %4903, %v503
        %v4905 = vpop.permute.xlu0 %4904
        %4907 = vset.pattern.permute.xlu0 3
        %4908 = vperm.xlu0 %4907, %v504
        %v4909 = vpop.permute.xlu0 %4908
        %4911 = vset.pattern.permute.xlu0 3
        %4912 = vperm.xlu0 %4911, %v505
        %v4913 = vpop.permute.xlu0 %4912
        %4915 = vset.pattern.permute.xlu0 3
        %4916 = vperm.xlu0 %4915, %v506
        %v4917 = vpop.permute.xlu0 %4916
        %4919 = vset.pattern.permute.xlu0 3
        %4920 = vperm.xlu0 %4919, %v507
        %v4921 = vpop.permute.xlu0 %4920
        %4923 = vset.pattern.permute.xlu0 3
        %4924 = vperm.xlu0 %4923, %v508
        %v4925 = vpop.permute.xlu0 %4924
        %v4927 = vmul.f32 %v4479, %v4729
        %v4928 = vmul.f32 %v4484, %v4733
        %v4929 = vmul.f32 %v4489, %v4737
        %v4930 = vmul.f32 %v4494, %v4741
        %v4931 = vmul.f32 %v4499, %v4745
        %v4932 = vmul.f32 %v4504, %v4749
        %v4933 = vmul.f32 %v4509, %v4753
        %v4934 = vmul.f32 %v4514, %v4757
        %v4935 = vmul.f32 %v4519, %v4761
        %v4936 = vmul.f32 %v4524, %v4765
        %v4937 = vmul.f32 %v4529, %v4769
        %v4938 = vmul.f32 %v4534, %v4773
        %v4939 = vmul.f32 %v4539, %v4777
        %v4940 = vmul.f32 %v4544, %v4781
        %v4941 = vmul.f32 %v4549, %v4785
        %v4942 = vmul.f32 %v4554, %v4789
        %v4943 = vmul.f32 %v4559, %v4793
        %v4944 = vmul.f32 %v4564, %v4797
        %v4945 = vmul.f32 %v4569, %v4801
        %v4946 = vmul.f32 %v4574, %v4805
        %v4947 = vmul.f32 %v4579, %v4809
        %v4948 = vmul.f32 %v4584, %v4813
        %v4949 = vmul.f32 %v4589, %v4817
        %v4950 = vmul.f32 %v4594, %v4821
        %v4951 = vmul.f32 %v4599, %v4825
        %v4952 = vmul.f32 %v4604, %v4829
        %v4953 = vmul.f32 %v4609, %v4833
        %v4954 = vmul.f32 %v4614, %v4837
        %v4955 = vmul.f32 %v4619, %v4841
        %v4956 = vmul.f32 %v4624, %v4845
        %v4957 = vmul.f32 %v4629, %v4849
        %v4958 = vmul.f32 %v4634, %v4853
        %v4959 = vmul.f32 %v4639, %v4857
        %v4960 = vmul.f32 %v4644, %v4861
        %v4961 = vmul.f32 %v4649, %v4865
        %v4962 = vmul.f32 %v4654, %v4869
        %v4963 = vmul.f32 %v4659, %v4873
        %v4964 = vmul.f32 %v4664, %v4877
        %v4965 = vmul.f32 %v4669, %v4881
        %v4966 = vmul.f32 %v4674, %v4885
        %v4967 = vmul.f32 %v4679, %v4889
        %v4968 = vmul.f32 %v4684, %v4893
        %v4969 = vmul.f32 %v4689, %v4897
        %v4970 = vmul.f32 %v4694, %v4901
        %v4971 = vmul.f32 %v4699, %v4905
        %v4972 = vmul.f32 %v4704, %v4909
        %v4973 = vmul.f32 %v4709, %v4913
        %v4974 = vmul.f32 %v4714, %v4917
        %v4975 = vmul.f32 %v4719, %v4921
        %v4976 = vmul.f32 %v4724, %v4925
        %vm4977 = vcmask 23552
        %4978 = vst.msk [vmem:[%s457] sm:$0xff] %vm4977, %v4927
        %4979 = vst.msk [vmem:[%s457 + $0x8] sm:$0xff] %vm4977, %v4928
        %4980 = vst.msk [vmem:[%s457 + $0x10] sm:$0xff] %vm4977, %v4929
        %4981 = vst.msk [vmem:[%s457 + $0x18] sm:$0xff] %vm4977, %v4930
        %4982 = vst.msk [vmem:[%s457 + $0x20] sm:$0xff] %vm4977, %v4931
        %4983 = vst.msk [vmem:[%s457 + $0x28] sm:$0xff] %vm4977, %v4932
        %4984 = vst.msk [vmem:[%s457 + $0x30] sm:$0xff] %vm4977, %v4933
        %4985 = vst.msk [vmem:[%s457 + $0x38] sm:$0xff] %vm4977, %v4934
        %4986 = vst.msk [vmem:[%s457 + $0x40] sm:$0xff] %vm4977, %v4935
        %4987 = vst.msk [vmem:[%s457 + $0x48] sm:$0xff] %vm4977, %v4936
        %4988 = vst.msk [vmem:[%s457 + $0x50] sm:$0xff] %vm4977, %v4937
        %4989 = vst.msk [vmem:[%s457 + $0x58] sm:$0xff] %vm4977, %v4938
        %4990 = vst.msk [vmem:[%s457 + $0x60] sm:$0xff] %vm4977, %v4939
        %4991 = vst.msk [vmem:[%s457 + $0x68] sm:$0xff] %vm4977, %v4940
        %4992 = vst.msk [vmem:[%s457 + $0x70] sm:$0xff] %vm4977, %v4941
        %4993 = vst.msk [vmem:[%s457 + $0x78] sm:$0xff] %vm4977, %v4942
        %4994 = vst.msk [vmem:[%s457 + $0x80] sm:$0xff] %vm4977, %v4943
        %4995 = vst.msk [vmem:[%s457 + $0x88] sm:$0xff] %vm4977, %v4944
        %4996 = vst.msk [vmem:[%s457 + $0x90] sm:$0xff] %vm4977, %v4945
        %4997 = vst.msk [vmem:[%s457 + $0x98] sm:$0xff] %vm4977, %v4946
        %4998 = vst.msk [vmem:[%s457 + $0xa0] sm:$0xff] %vm4977, %v4947
        %4999 = vst.msk [vmem:[%s457 + $0xa8] sm:$0xff] %vm4977, %v4948
        %5000 = vst.msk [vmem:[%s457 + $0xb0] sm:$0xff] %vm4977, %v4949
        %5001 = vst.msk [vmem:[%s457 + $0xb8] sm:$0xff] %vm4977, %v4950
        %5002 = vst.msk [vmem:[%s457 + $0xc0] sm:$0xff] %vm4977, %v4951
        %5003 = vst.msk [vmem:[%s457 + $0xc8] sm:$0xff] %vm4977, %v4952
        %5004 = vst.msk [vmem:[%s457 + $0xd0] sm:$0xff] %vm4977, %v4953
        %5005 = vst.msk [vmem:[%s457 + $0xd8] sm:$0xff] %vm4977, %v4954
        %5006 = vst.msk [vmem:[%s457 + $0xe0] sm:$0xff] %vm4977, %v4955
        %5007 = vst.msk [vmem:[%s457 + $0xe8] sm:$0xff] %vm4977, %v4956
        %5008 = vst.msk [vmem:[%s457 + $0xf0] sm:$0xff] %vm4977, %v4957
        %5009 = vst.msk [vmem:[%s457 + $0xf8] sm:$0xff] %vm4977, %v4958
        %5010 = vst.msk [vmem:[%s457 + $0x100] sm:$0xff] %vm4977, %v4959
        %5011 = vst.msk [vmem:[%s457 + $0x108] sm:$0xff] %vm4977, %v4960
        %5012 = vst.msk [vmem:[%s457 + $0x110] sm:$0xff] %vm4977, %v4961
        %5013 = vst.msk [vmem:[%s457 + $0x118] sm:$0xff] %vm4977, %v4962
        %5014 = vst.msk [vmem:[%s457 + $0x120] sm:$0xff] %vm4977, %v4963
        %5015 = vst.msk [vmem:[%s457 + $0x128] sm:$0xff] %vm4977, %v4964
        %5016 = vst.msk [vmem:[%s457 + $0x130] sm:$0xff] %vm4977, %v4965
        %5017 = vst.msk [vmem:[%s457 + $0x138] sm:$0xff] %vm4977, %v4966
        %5018 = vst.msk [vmem:[%s457 + $0x140] sm:$0xff] %vm4977, %v4967
        %5019 = vst.msk [vmem:[%s457 + $0x148] sm:$0xff] %vm4977, %v4968
        %5020 = vst.msk [vmem:[%s457 + $0x150] sm:$0xff] %vm4977, %v4969
        %5021 = vst.msk [vmem:[%s457 + $0x158] sm:$0xff] %vm4977, %v4970
        %5022 = vst.msk [vmem:[%s457 + $0x160] sm:$0xff] %vm4977, %v4971
        %5023 = vst.msk [vmem:[%s457 + $0x168] sm:$0xff] %vm4977, %v4972
        %5024 = vst.msk [vmem:[%s457 + $0x170] sm:$0xff] %vm4977, %v4973
        %5025 = vst.msk [vmem:[%s457 + $0x178] sm:$0xff] %vm4977, %v4974
        %5026 = vst.msk [vmem:[%s457 + $0x180] sm:$0xff] %vm4977, %v4975
        %5027 = vst.msk [vmem:[%s457 + $0x188] sm:$0xff] %vm4977, %v4976
        %s5028 = smul.u32 50, %s26
        %p5029 = scmp.lt.s32.totalorder %s5028, 99
        %s5030 = scalar_select %p5029, %s5028, 99
        %s5031 = smul.addr %s5030, 8
        %s5032 = scalar_lea.vmem %s12, %s5031
        // Predicated region
        $region73: #{tpu_custom_call.1} parent=67 // pred_check
          %p5033 = pneg %p306
        $region74: #{tpu_custom_call.1} parent=67 // pred_check_branch
          %5035 = sbr.rel (%p5033) target = $region76
        $region75: #{tpu_custom_call.1} parent=67 // pred_region
          %s5036 = smul.u32 50, %s26
        $region76: #{tpu_custom_call.1} parent=67 // pred_fallthru
          _
      $region68: #{tpu_custom_call.1} parent=5 // pred_fallthru
        _
      %p5037 = scmp.le.s32.totalorder 2, %s21
      // Predicated region
      $region77: #{tpu_custom_call.1} parent=5 // pred_check
        %p5038 = pneg %p5037
      $region78: #{tpu_custom_call.1} parent=5 // pred_check_branch
        %5040 = sbr.rel (%p5038) target = $region80
      $region79: #{tpu_custom_call.1} parent=5 // pred_region
        %s5041 = ssub.s32 %s21, 2
        // Predicated region
        $region81: #{tpu_custom_call.1} parent=79 // pred_check
          %p5042 = pneg %p312
        $region82: #{tpu_custom_call.1} parent=79 // pred_check_branch
          %5044 = sbr.rel (%p5042) target = $region84
        $region83: #{tpu_custom_call.1} parent=79 // pred_region
          %s5045 = smul.u32 50, %s27
          %p5046 = scmp.lt.s32.totalorder %s5045, 99
          %s5047 = scalar_select %p5046, %s5045, 99
          %s5048 = smul.addr %s5047, 8
          %s5049 = scalar_lea.vmem %s12, %s5048
        $region84: #{tpu_custom_call.1} parent=79 // pred_fallthru
          _
      $region80: #{tpu_custom_call.1} parent=5 // pred_fallthru
        _
    $region6: #{tpu_custom_call.1} parent=1 // loop_footer
      %s25 = sadd.s32 1, %s21
    $region7: #{tpu_custom_call.1} parent=1 // loop_footer_branch
      %20 = sbr.rel target = $region3
    $region8: #{tpu_custom_call.1} parent=1 // loop_exit
      _
    %5050 = vsyncpa [#allocation3], 1
    %s5051 = scalar_lea.sflag [#allocation3], 1
    %5052 = vsyncpa %s5051, 1

</llo_original>
